<compile_context>
chip_gen: v6e
topology: v6e:2x2x1
jax: 0.10.0
libtpu: 0.0.40
codegen_flags: <defaults>
</compile_context>

<pallas_src>
import functools

import jax
import jax.numpy as jnp
import numpy as np
from jax.experimental import pallas as pl
from jax.experimental.pallas import tpu as pltpu


def _round_up(x, m):
    return ((x + m - 1) // m) * m


def _gru_kernel(maxlen_ref, x_ref, len_ref, wih_ref, whh_ref, bcomb_ref,
                bhn_ref, wout_ref, out_ref, gi_ref, h_ref, *, bf16_gates):
    """One grid step = (batch tile g, time chunk c).

    maxlen_ref: (Nt,)        int32 SMEM (scalar prefetch), per-tile max length
    x_ref     : (Tc*Bt, Ep)  bf16  rows ordered (t, b) within the chunk
    len_ref   : (Bt, 1)      int32 valid lengths
    wih_ref   : (Ep, 3H)     bf16  W_ih^T   (gate order r, z, n)
    whh_ref   : (H, 3H)      bf16  W_hh^T
    bcomb_ref : (1, 3H)      f32   [b_ih_r+b_hh_r, b_ih_z+b_hh_z, b_ih_n]
    bhn_ref   : (1, H)       f32   b_hh_n
    wout_ref  : (H, Ep)      bf16  W_out^T (no bias)
    out_ref   : (Bt, Ep)     f32   output block (resident across chunks)
    gi_ref    : (Tc*Bt, 3H)  bf16  scratch: hoisted projection for this chunk
    h_ref     : (Bt, H)      f32   scratch: hidden state (persists over chunks)
    """
    g = pl.program_id(0)
    c = pl.program_id(1)
    n_chunks = pl.num_programs(1)
    Bt = out_ref.shape[0]
    H = whh_ref.shape[0]
    Tc = gi_ref.shape[0] // Bt
    gdt = jnp.bfloat16 if bf16_gates else jnp.float32

    @pl.when(c == 0)
    def _():
        h_ref[...] = jnp.zeros_like(h_ref)

    chunk_start = c * Tc

    # Skip chunks entirely past this tile's longest sequence (they would only
    # execute the frozen where()).
    @pl.when(chunk_start < maxlen_ref[g])
    def _():
        # (1) Hoisted input projection for the chunk: one MXU matmul covering
        #     Tc timesteps, stored bf16.
        gi_ref[...] = (
            jnp.dot(x_ref[...], wih_ref[...],
                    preferred_element_type=jnp.float32)
            + bcomb_ref[...]).astype(gi_ref.dtype)

        lengths = len_ref[...]                         # (Bt, 1) int32
        b_hh_n = bhn_ref[...].astype(gdt)              # (1, H)

        # (2) Serial recurrence over the chunk (Tc-step unroll).
        def step(i, h):
            t = chunk_start + i
            row = pl.multiple_of(i * Bt, Bt)
            gi_t = gi_ref[pl.ds(row, Bt), :].astype(gdt)          # (Bt, 3H)
            gh = jnp.dot(h.astype(jnp.bfloat16), whh_ref[...],
                         preferred_element_type=jnp.float32).astype(gdt)
            r = jax.nn.sigmoid(gi_t[:, 0:H] + gh[:, 0:H])
            z = jax.nn.sigmoid(gi_t[:, H:2 * H] + gh[:, H:2 * H])
            n = jnp.tanh(gi_t[:, 2 * H:] + r * (gh[:, 2 * H:] + b_hh_n))
            h_new = ((1 - z) * n + z * h.astype(gdt)).astype(jnp.float32)
            # Freeze hidden state once past this row's valid length
            # (pack_padded_sequence final-hidden semantics).
            return jnp.where(t < lengths, h_new, h)

        h_ref[...] = jax.lax.fori_loop(0, Tc, step, h_ref[...], unroll=True)

    # (3) Output projection, written once per batch tile on the last chunk.
    @pl.when(c == n_chunks - 1)
    def _():
        out_ref[...] = jnp.dot(
            h_ref[...].astype(jnp.bfloat16), wout_ref[...],
            preferred_element_type=jnp.float32).astype(out_ref.dtype)


@functools.partial(jax.jit,
                   static_argnames=("hidden_size", "bf16_gates", "time_chunk"))
def gru4rec_encoder(seq, lengths, params, *, hidden_size,
                    bf16_gates=False, time_chunk=8):
    """Pallas implementation of GRU4RecEncoder.forward.

    seq     : (B, L, E) float32
    lengths : (B,)      int32, 1 <= lengths <= L  (real rows)
    params  : PyTorch-layout weights:
              w_ih (3H, E), w_hh (3H, H), b_ih (3H,), b_hh (3H,), w_out (E, H)
    returns : (B, E) float32
    """
    B, L, E = seq.shape
    H = hidden_size

    # --- batch tiling: sublane multiple of 16 (bf16 packing); prefer Nt >= 2
    #     tiles so the "parallel" grid axis can shard across TensorCores. ---
    Bp = _round_up(B, 16)
    if Bp <= 16:
        Bt, Nt = Bp, 1
    elif Bp <= 256:
        Bt = _round_up((Bp + 1) // 2, 16)
        Nt = 2
        Bp = Bt * Nt
    else:
        Bt = 128
        Bp = _round_up(Bp, Bt)
        Nt = Bp // Bt

    Ep = _round_up(E, 128)

    # --- time chunking: VMEM is O(Tc); chunk c+1's DMA + projection pipelines
    #     against the serial recurrence of chunk c. ---
    Tc = int(time_chunk) if L >= int(time_chunk) else int(L)
    Lp = _round_up(L, Tc)
    Ct = Lp // Tc

    # --- layout plumbing (bf16 before pad/transpose: halves wrapper traffic) ---
    seq_p = jnp.zeros((Bp, Lp, Ep), jnp.bfloat16)
    seq_p = seq_p.at[:B, :L, :E].set(seq.astype(jnp.bfloat16))
    x2d = (seq_p.reshape(Nt, Bt, Lp, Ep)
                 .transpose(0, 2, 1, 3)             # (Nt, Lp, Bt, Ep)
                 .reshape(Nt * Lp * Bt, Ep))

    len_p = jnp.zeros((Bp, 1), jnp.int32).at[:B, 0].set(
        lengths.astype(jnp.int32))
    max_len = jnp.max(len_p.reshape(Nt, Bt), axis=1).astype(jnp.int32)  # (Nt,)

    w_ih = params["w_ih"].astype(jnp.float32)      # (3H, E)
    w_hh = params["w_hh"].astype(jnp.float32)      # (3H, H)
    b_ih = params["b_ih"].astype(jnp.float32)      # (3H,)
    b_hh = params["b_hh"].astype(jnp.float32)      # (3H,)
    w_out = params["w_out"].astype(jnp.float32)    # (E, H)

    wih_t = (jnp.zeros((Ep, 3 * H), jnp.float32)
             .at[:E, :].set(w_ih.T)).astype(jnp.bfloat16)       # (Ep, 3H)
    whh_t = w_hh.T.astype(jnp.bfloat16)                         # (H, 3H)
    wout_t = (jnp.zeros((H, Ep), jnp.float32)
              .at[:, :E].set(w_out.T)).astype(jnp.bfloat16)     # (H, Ep)

    b_comb = jnp.concatenate(
        [b_ih[:2 * H] + b_hh[:2 * H], b_ih[2 * H:]]).reshape(1, 3 * H)
    b_hh_n = b_hh[2 * H:].reshape(1, H)

    # --- explicit scoped-VMEM budget derived from the actual blocks ---
    def nbytes(shape, dt):
        return int(np.prod(shape)) * jnp.dtype(dt).itemsize
    needed = (2 * nbytes((Tc * Bt, Ep), jnp.bfloat16)       # x (double-buffered)
              + 2 * nbytes((Bt, 1), jnp.int32)
              + 2 * nbytes((Ep, 3 * H), jnp.bfloat16)
              + 2 * nbytes((H, 3 * H), jnp.bfloat16)
              + 2 * nbytes((1, 3 * H), jnp.float32)
              + 2 * nbytes((1, H), jnp.float32)
              + 2 * nbytes((H, Ep), jnp.bfloat16)
              + 2 * nbytes((Bt, Ep), jnp.float32)
              + nbytes((Tc * Bt, 3 * H), jnp.bfloat16)       # gi scratch
              + nbytes((Bt, H), jnp.float32))                # h scratch
    vmem_limit = int(min(max(2 * needed + (4 << 20), 16 << 20), 64 << 20))

    const = lambda g, c, ml: (0, 0)
    kernel = functools.partial(_gru_kernel, bf16_gates=bool(bf16_gates))

    # NOTE: holding W_hh^T resident in the MXU via matmul_push_rhs/acc_lhs is a
    # further per-step latency win; left out here in favor of portability.
    out_p = pl.pallas_call(
        kernel,
        out_shape=jax.ShapeDtypeStruct((Bp, Ep), jnp.float32),
        grid_spec=pltpu.PrefetchScalarGridSpec(
            num_scalar_prefetch=1,
            grid=(Nt, Ct),
            in_specs=[
                pl.BlockSpec((Tc * Bt, Ep),
                             lambda g, c, ml: (g * Ct + c, 0)),   # x chunk
                pl.BlockSpec((Bt, 1), lambda g, c, ml: (g, 0)),   # lengths
                pl.BlockSpec((Ep, 3 * H), const),                 # W_ih^T
                pl.BlockSpec((H, 3 * H), const),                  # W_hh^T
                pl.BlockSpec((1, 3 * H), const),                  # combined bias
                pl.BlockSpec((1, H), const),                      # b_hh_n
                pl.BlockSpec((H, Ep), const),                     # W_out^T
            ],
            out_specs=pl.BlockSpec((Bt, Ep), lambda g, c, ml: (g, 0)),
            scratch_shapes=[
                pltpu.VMEM((Tc * Bt, 3 * H), jnp.bfloat16),   # gi (per chunk)
                pltpu.VMEM((Bt, H), jnp.float32),             # hidden state
            ],
        ),
        compiler_params=pltpu.CompilerParams(
            dimension_semantics=("parallel", "arbitrary"),
            vmem_limit_bytes=vmem_limit),
    )(max_len, x2d, len_p, wih_t, whh_t, b_comb, b_hh_n, wout_t)

    return out_p[:B, :E]


def _reference_forward(seq, lengths, params, hidden_size):
    """Pure-JAX f32 reference mirroring PyTorch GRU + Linear semantics."""
    B, L, E = seq.shape
    H = hidden_size
    w_ih, w_hh = params["w_ih"], params["w_hh"]
    b_ih, b_hh = params["b_ih"], params["b_hh"]

    def step(h, inp):
        x_t, t = inp
        gi = x_t @ w_ih.T + b_ih
        gh = h @ w_hh.T + b_hh
        r = jax.nn.sigmoid(gi[:, :H] + gh[:, :H])
        z = jax.nn.sigmoid(gi[:, H:2 * H] + gh[:, H:2 * H])
        n = jnp.tanh(gi[:, 2 * H:] + r * gh[:, 2 * H:])
        h_new = (1.0 - z) * n + z * h
        h = jnp.where((t < lengths)[:, None], h_new, h)
        return h, None

    h0 = jnp.zeros((B, H), jnp.float32)
    hF, _ = jax.lax.scan(step, h0,
                         (jnp.transpose(seq, (1, 0, 2)), jnp.arange(L)))
    return hF @ params["w_out"].T


def _init_params(key, emb_size, hidden_size):
    """Deterministic PyTorch-style init: uniform(-1/sqrt(H), 1/sqrt(H))."""
    H, E = hidden_size, emb_size
    k = 1.0 / np.sqrt(H)
    ks = jax.random.split(key, 5)
    u = lambda kk, shape: jax.random.uniform(kk, shape, jnp.float32, -k, k)
    return {
        "w_ih": u(ks[0], (3 * H, E)),
        "w_hh": u(ks[1], (3 * H, H)),
        "b_ih": u(ks[2], (3 * H,)),
        "b_hh": u(ks[3], (3 * H,)),
        "w_out": u(ks[4], (E, H)),     # nn.Linear(H, E, bias=False).weight
    }


if __name__ == "__main__":
    B, L, E, H = 6, 10, 64, 128   # batch, seq_len, emb_size, hidden_size (default 128)

    root = jax.random.PRNGKey(0)
    k_seq, k_len, k_par = jax.random.split(root, 3)

    seq = jax.random.normal(k_seq, (B, L, E), jnp.float32)
    lengths = jax.random.randint(k_len, (B,), 1, L + 1, jnp.int32)  # 1..L
    params = _init_params(k_par, E, H)

    # bf16 gate math only on chips with a bf16 VPU/EUP (v6e, v7x, ...);
    # keep f32 gates on v5e/older (no bf16 vector units there).
    kind = jax.devices()[0].device_kind.lower()
    bf16_gates = not any(v in kind for v in ("v2", "v3", "v4", "v5"))

    out = gru4rec_encoder(seq, lengths, params, hidden_size=H,
                          bf16_gates=bf16_gates)
    out = jax.block_until_ready(out)

    ref = _reference_forward(seq, lengths, params, H)
    # bf16 MXU operands + bf16 gi storage (f32 accumulation / f32 hidden state)
    # => inference-level tolerance vs the f32 reference; looser if gates run bf16.
    tol = 8e-2 if bf16_gates else 5e-2
    np.testing.assert_allclose(np.asarray(out), np.asarray(ref),
                               rtol=tol, atol=tol)

    print("KERNEL_OK")
</pallas_src>

<mosaic_0001>
module attributes {stable_mosaic.version = 11 : i64} {
  func.func @_gru_kernel(%arg0: i32, %arg1: i32, %arg2: memref<1xi32, #tpu.memory_space<smem>>, %arg3: memref<128x128xbf16, #tpu.memory_space<vmem>>, %arg4: memref<16x1xi32, #tpu.memory_space<vmem>>, %arg5: memref<128x384xbf16, #tpu.memory_space<vmem>>, %arg6: memref<128x384xbf16, #tpu.memory_space<vmem>>, %arg7: memref<1x384xf32, #tpu.memory_space<vmem>>, %arg8: memref<1x128xf32, #tpu.memory_space<vmem>>, %arg9: memref<128x128xbf16, #tpu.memory_space<vmem>>, %arg10: memref<16x128xf32, #tpu.memory_space<vmem>>, %arg11: memref<128x384xbf16, #tpu.memory_space<vmem>>, %arg12: memref<16x128xf32, #tpu.memory_space<vmem>>) attributes {dimension_semantics = [#tpu.dimension_semantics<parallel>, #tpu.dimension_semantics<arbitrary>], iteration_bounds = array<i64: 1, 2>, scalar_prefetch = 1 : i64, scratch_operands = 2 : i64, tpu.core_type = #tpu.core_type<tc>, window_params = [{transform_indices = @transform_0, window_bounds = array<i64: 128, 128>}, {transform_indices = @transform_1, window_bounds = array<i64: 16, 1>}, {pipeline_mode = #tpu.pipeline_mode<synchronous>, transform_indices = @transform_2, window_bounds = array<i64: 128, 384>}, {pipeline_mode = #tpu.pipeline_mode<synchronous>, transform_indices = @transform_3, window_bounds = array<i64: 128, 384>}, {pipeline_mode = #tpu.pipeline_mode<synchronous>, transform_indices = @transform_4, window_bounds = array<i64: 1, 384>}, {pipeline_mode = #tpu.pipeline_mode<synchronous>, transform_indices = @transform_5, window_bounds = array<i64: 1, 128>}, {pipeline_mode = #tpu.pipeline_mode<synchronous>, transform_indices = @transform_6, window_bounds = array<i64: 128, 128>}, {transform_indices = @transform_7, window_bounds = array<i64: 16, 128>}]} {
    %c0_i32 = arith.constant 0 : i32
    %0 = arith.cmpi eq, %arg1, %c0_i32 : i32
    %1 = arith.extui %0 : i1 to i32
    %c0_i32_0 = arith.constant 0 : i32
    %2 = arith.cmpi ne, %1, %c0_i32_0 : i32
    scf.if %2 {
      %cst = arith.constant 0.000000e+00 : f32
      %12 = vector.broadcast %cst : f32 to vector<16x128xf32>
      %c0 = arith.constant 0 : index
      %c0_3 = arith.constant 0 : index
      %13 = vector.load %arg12[%c0, %c0_3] : memref<16x128xf32, #tpu.memory_space<vmem>>, vector<16x128xf32>
      tpu.vector_store %arg12[%c0, %c0_3], %12 {strides = array<i32>} : memref<16x128xf32, #tpu.memory_space<vmem>>, vector<16x128xf32>,
    } else {
    }
    %c8_i32 = arith.constant 8 : i32
    %3 = arith.muli %arg1, %c8_i32 : i32
    %4 = arith.index_cast %arg0 : i32 to index
    %5 = memref.load %arg2[%4] : memref<1xi32, #tpu.memory_space<smem>>
    %6 = arith.cmpi slt, %3, %5 : i32
    %7 = arith.extui %6 : i1 to i32
    %c0_i32_1 = arith.constant 0 : i32
    %8 = arith.cmpi ne, %7, %c0_i32_1 : i32
    scf.if %8 {
      %c0 = arith.constant 0 : index
      %c0_3 = arith.constant 0 : index
      %12 = vector.load %arg3[%c0, %c0_3] : memref<128x128xbf16, #tpu.memory_space<vmem>>, vector<128x128xbf16>
      %c0_4 = arith.constant 0 : index
      %c0_5 = arith.constant 0 : index
      %13 = vector.load %arg5[%c0_4, %c0_5] : memref<128x384xbf16, #tpu.memory_space<vmem>>, vector<128x384xbf16>
      %cst = arith.constant dense<0.000000e+00> : vector<128x384xf32>
      %14 = tpu.matmul %12, %13, %cst {dimension_numbers = #tpu.dot_dimension_numbers<[1], [0], [0], [1], [0, 0, 1, 1], [], []>} : vector<128x128xbf16>, vector<128x384xbf16>, vector<128x384xf32> -> vector<128x384xf32>
      %c0_6 = arith.constant 0 : index
      %c0_7 = arith.constant 0 : index
      %15 = vector.load %arg7[%c0_6, %c0_7] : memref<1x384xf32, #tpu.memory_space<vmem>>, vector<1x384xf32>
      %16 = vector.broadcast %15 : vector<1x384xf32> to vector<128x384xf32>
      %17 = arith.addf %14, %16 : vector<128x384xf32>
      %18 = arith.truncf %17 : vector<128x384xf32> to vector<128x384xbf16>
      %c0_8 = arith.constant 0 : index
      %c0_9 = arith.constant 0 : index
      %19 = vector.load %arg11[%c0_8, %c0_9] : memref<128x384xbf16, #tpu.memory_space<vmem>>, vector<128x384xbf16>
      tpu.vector_store %arg11[%c0_8, %c0_9], %18 {strides = array<i32>} : memref<128x384xbf16, #tpu.memory_space<vmem>>, vector<128x384xbf16>,
      %c0_10 = arith.constant 0 : index
      %c0_11 = arith.constant 0 : index
      %20 = vector.load %arg4[%c0_10, %c0_11] : memref<16x1xi32, #tpu.memory_space<vmem>>, vector<16x1xi32>
      %c0_12 = arith.constant 0 : index
      %c0_13 = arith.constant 0 : index
      %21 = vector.load %arg8[%c0_12, %c0_13] : memref<1x128xf32, #tpu.memory_space<vmem>>, vector<1x128xf32>
      %22 = arith.truncf %21 : vector<1x128xf32> to vector<1x128xbf16>
      %c0_14 = arith.constant 0 : index
      %c0_15 = arith.constant 0 : index
      %23 = vector.load %arg12[%c0_14, %c0_15] : memref<16x128xf32, #tpu.memory_space<vmem>>, vector<16x128xf32>
      %c0_i32_16 = arith.constant 0 : i32
      %24 = arith.addi %3, %c0_i32_16 : i32
      %c16_i32 = arith.constant 16 : i32
      %25 = arith.muli %c0_i32_16, %c16_i32 : i32
      %26 = tpu.assume_multiple %25, 16 : i32
      %27 = arith.index_cast %26 : i32 to index
      %c0_17 = arith.constant 0 : index
      %28 = vector.load %arg11[%27, %c0_17] : memref<128x384xbf16, #tpu.memory_space<vmem>>, vector<16x384xbf16>
      %29 = arith.truncf %23 : vector<16x128xf32> to vector<16x128xbf16>
      %c0_18 = arith.constant 0 : index
      %c0_19 = arith.constant 0 : index
      %30 = vector.load %arg6[%c0_18, %c0_19] : memref<128x384xbf16, #tpu.memory_space<vmem>>, vector<128x384xbf16>
      %cst_20 = arith.constant dense<0.000000e+00> : vector<16x384xf32>
      %31 = tpu.matmul %29, %30, %cst_20 {dimension_numbers = #tpu.dot_dimension_numbers<[1], [0], [0], [1], [0, 0, 1, 1], [], []>} : vector<16x128xbf16>, vector<128x384xbf16>, vector<16x384xf32> -> vector<16x384xf32>
      %32 = arith.truncf %31 : vector<16x384xf32> to vector<16x384xbf16>
      %33 = vector.extract_strided_slice %28 {offsets = [0, 0], sizes = [16, 128], strides = [1, 1]} : vector<16x384xbf16> to vector<16x128xbf16>
      %34 = vector.extract_strided_slice %32 {offsets = [0, 0], sizes = [16, 128], strides = [1, 1]} : vector<16x384xbf16> to vector<16x128xbf16>
      %35 = arith.addf %33, %34 : vector<16x128xbf16>
      %36 = arith.negf %35 : vector<16x128xbf16>
      %37 = math.exp %36 : vector<16x128xbf16>
      %cst_21 = arith.constant 1.000000e+00 : bf16
      %38 = vector.broadcast %cst_21 : bf16 to vector<16x128xbf16>
      %39 = arith.addf %38, %37 : vector<16x128xbf16>
      %40 = arith.divf %38, %39 : vector<16x128xbf16>
      %41 = vector.extract_strided_slice %28 {offsets = [0, 128], sizes = [16, 128], strides = [1, 1]} : vector<16x384xbf16> to vector<16x128xbf16>
      %42 = vector.extract_strided_slice %32 {offsets = [0, 128], sizes = [16, 128], strides = [1, 1]} : vector<16x384xbf16> to vector<16x128xbf16>
      %43 = arith.addf %41, %42 : vector<16x128xbf16>
      %44 = arith.negf %43 : vector<16x128xbf16>
      %45 = math.exp %44 : vector<16x128xbf16>
      %cst_22 = arith.constant 1.000000e+00 : bf16
      %46 = vector.broadcast %cst_22 : bf16 to vector<16x128xbf16>
      %47 = arith.addf %46, %45 : vector<16x128xbf16>
      %48 = arith.divf %46, %47 : vector<16x128xbf16>
      %49 = vector.extract_strided_slice %28 {offsets = [0, 256], sizes = [16, 128], strides = [1, 1]} : vector<16x384xbf16> to vector<16x128xbf16>
      %50 = vector.extract_strided_slice %32 {offsets = [0, 256], sizes = [16, 128], strides = [1, 1]} : vector<16x384xbf16> to vector<16x128xbf16>
      %51 = vector.broadcast %22 : vector<1x128xbf16> to vector<16x128xbf16>
      %52 = arith.addf %50, %51 : vector<16x128xbf16>
      %53 = arith.mulf %40, %52 : vector<16x128xbf16>
      %54 = arith.addf %49, %53 : vector<16x128xbf16>
      %55 = math.tanh %54 : vector<16x128xbf16>
      %cst_23 = arith.constant 1.000000e+00 : bf16
      %56 = vector.broadcast %cst_23 : bf16 to vector<16x128xbf16>
      %57 = arith.subf %56, %48 : vector<16x128xbf16>
      %58 = arith.mulf %57, %55 : vector<16x128xbf16>
      %59 = arith.truncf %23 : vector<16x128xf32> to vector<16x128xbf16>
      %60 = arith.mulf %48, %59 : vector<16x128xbf16>
      %61 = arith.addf %58, %60 : vector<16x128xbf16>
      %62 = arith.extf %61 : vector<16x128xbf16> to vector<16x128xf32>
      %63 = vector.broadcast %24 : i32 to vector<16x1xi32>
      %64 = arith.cmpi slt, %63, %20 : vector<16x1xi32>
      %65 = vector.shape_cast %64 : vector<16x1xi1> to vector<16x1xi1>
      %66 = vector.broadcast %65 : vector<16x1xi1> to vector<16x128xi1>
      %67 = arith.select %66, %62, %23 : vector<16x128xi1>, vector<16x128xf32>
      %c1_i32_24 = arith.constant 1 : i32
      %68 = arith.addi %3, %c1_i32_24 : i32
      %c16_i32_25 = arith.constant 16 : i32
      %69 = arith.muli %c1_i32_24, %c16_i32_25 : i32
      %70 = tpu.assume_multiple %69, 16 : i32
      %71 = arith.index_cast %70 : i32 to index
      %c0_26 = arith.constant 0 : index
      %72 = vector.load %arg11[%71, %c0_26] : memref<128x384xbf16, #tpu.memory_space<vmem>>, vector<16x384xbf16>
      %73 = arith.truncf %67 : vector<16x128xf32> to vector<16x128xbf16>
      %c0_27 = arith.constant 0 : index
      %c0_28 = arith.constant 0 : index
      %74 = vector.load %arg6[%c0_27, %c0_28] : memref<128x384xbf16, #tpu.memory_space<vmem>>, vector<128x384xbf16>
      %cst_29 = arith.constant dense<0.000000e+00> : vector<16x384xf32>
      %75 = tpu.matmul %73, %74, %cst_29 {dimension_numbers = #tpu.dot_dimension_numbers<[1], [0], [0], [1], [0, 0, 1, 1], [], []>} : vector<16x128xbf16>, vector<128x384xbf16>, vector<16x384xf32> -> vector<16x384xf32>
      %76 = arith.truncf %75 : vector<16x384xf32> to vector<16x384xbf16>
      %77 = vector.extract_strided_slice %72 {offsets = [0, 0], sizes = [16, 128], strides = [1, 1]} : vector<16x384xbf16> to vector<16x128xbf16>
      %78 = vector.extract_strided_slice %76 {offsets = [0, 0], sizes = [16, 128], strides = [1, 1]} : vector<16x384xbf16> to vector<16x128xbf16>
      %79 = arith.addf %77, %78 : vector<16x128xbf16>
      %80 = arith.negf %79 : vector<16x128xbf16>
      %81 = math.exp %80 : vector<16x128xbf16>
      %cst_30 = arith.constant 1.000000e+00 : bf16
      %82 = vector.broadcast %cst_30 : bf16 to vector<16x128xbf16>
      %83 = arith.addf %82, %81 : vector<16x128xbf16>
      %84 = arith.divf %82, %83 : vector<16x128xbf16>
      %85 = vector.extract_strided_slice %72 {offsets = [0, 128], sizes = [16, 128], strides = [1, 1]} : vector<16x384xbf16> to vector<16x128xbf16>
      %86 = vector.extract_strided_slice %76 {offsets = [0, 128], sizes = [16, 128], strides = [1, 1]} : vector<16x384xbf16> to vector<16x128xbf16>
      %87 = arith.addf %85, %86 : vector<16x128xbf16>
      %88 = arith.negf %87 : vector<16x128xbf16>
      %89 = math.exp %88 : vector<16x128xbf16>
      %cst_31 = arith.constant 1.000000e+00 : bf16
      %90 = vector.broadcast %cst_31 : bf16 to vector<16x128xbf16>
      %91 = arith.addf %90, %89 : vector<16x128xbf16>
      %92 = arith.divf %90, %91 : vector<16x128xbf16>
      %93 = vector.extract_strided_slice %72 {offsets = [0, 256], sizes = [16, 128], strides = [1, 1]} : vector<16x384xbf16> to vector<16x128xbf16>
      %94 = vector.extract_strided_slice %76 {offsets = [0, 256], sizes = [16, 128], strides = [1, 1]} : vector<16x384xbf16> to vector<16x128xbf16>
      %95 = vector.broadcast %22 : vector<1x128xbf16> to vector<16x128xbf16>
      %96 = arith.addf %94, %95 : vector<16x128xbf16>
      %97 = arith.mulf %84, %96 : vector<16x128xbf16>
      %98 = arith.addf %93, %97 : vector<16x128xbf16>
      %99 = math.tanh %98 : vector<16x128xbf16>
      %cst_32 = arith.constant 1.000000e+00 : bf16
      %100 = vector.broadcast %cst_32 : bf16 to vector<16x128xbf16>
      %101 = arith.subf %100, %92 : vector<16x128xbf16>
      %102 = arith.mulf %101, %99 : vector<16x128xbf16>
      %103 = arith.truncf %67 : vector<16x128xf32> to vector<16x128xbf16>
      %104 = arith.mulf %92, %103 : vector<16x128xbf16>
      %105 = arith.addf %102, %104 : vector<16x128xbf16>
      %106 = arith.extf %105 : vector<16x128xbf16> to vector<16x128xf32>
      %107 = vector.broadcast %68 : i32 to vector<16x1xi32>
      %108 = arith.cmpi slt, %107, %20 : vector<16x1xi32>
      %109 = vector.shape_cast %108 : vector<16x1xi1> to vector<16x1xi1>
      %110 = vector.broadcast %109 : vector<16x1xi1> to vector<16x128xi1>
      %111 = arith.select %110, %106, %67 : vector<16x128xi1>, vector<16x128xf32>
      %c2_i32 = arith.constant 2 : i32
      %112 = arith.addi %3, %c2_i32 : i32
      %c16_i32_33 = arith.constant 16 : i32
      %113 = arith.muli %c2_i32, %c16_i32_33 : i32
      %114 = tpu.assume_multiple %113, 16 : i32
      %115 = arith.index_cast %114 : i32 to index
      %c0_34 = arith.constant 0 : index
      %116 = vector.load %arg11[%115, %c0_34] : memref<128x384xbf16, #tpu.memory_space<vmem>>, vector<16x384xbf16>
      %117 = arith.truncf %111 : vector<16x128xf32> to vector<16x128xbf16>
      %c0_35 = arith.constant 0 : index
      %c0_36 = arith.constant 0 : index
      %118 = vector.load %arg6[%c0_35, %c0_36] : memref<128x384xbf16, #tpu.memory_space<vmem>>, vector<128x384xbf16>
      %cst_37 = arith.constant dense<0.000000e+00> : vector<16x384xf32>
      %119 = tpu.matmul %117, %118, %cst_37 {dimension_numbers = #tpu.dot_dimension_numbers<[1], [0], [0], [1], [0, 0, 1, 1], [], []>} : vector<16x128xbf16>, vector<128x384xbf16>, vector<16x384xf32> -> vector<16x384xf32>
      %120 = arith.truncf %119 : vector<16x384xf32> to vector<16x384xbf16>
      %121 = vector.extract_strided_slice %116 {offsets = [0, 0], sizes = [16, 128], strides = [1, 1]} : vector<16x384xbf16> to vector<16x128xbf16>
      %122 = vector.extract_strided_slice %120 {offsets = [0, 0], sizes = [16, 128], strides = [1, 1]} : vector<16x384xbf16> to vector<16x128xbf16>
      %123 = arith.addf %121, %122 : vector<16x128xbf16>
      %124 = arith.negf %123 : vector<16x128xbf16>
      %125 = math.exp %124 : vector<16x128xbf16>
      %cst_38 = arith.constant 1.000000e+00 : bf16
      %126 = vector.broadcast %cst_38 : bf16 to vector<16x128xbf16>
      %127 = arith.addf %126, %125 : vector<16x128xbf16>
      %128 = arith.divf %126, %127 : vector<16x128xbf16>
      %129 = vector.extract_strided_slice %116 {offsets = [0, 128], sizes = [16, 128], strides = [1, 1]} : vector<16x384xbf16> to vector<16x128xbf16>
      %130 = vector.extract_strided_slice %120 {offsets = [0, 128], sizes = [16, 128], strides = [1, 1]} : vector<16x384xbf16> to vector<16x128xbf16>
      %131 = arith.addf %129, %130 : vector<16x128xbf16>
      %132 = arith.negf %131 : vector<16x128xbf16>
      %133 = math.exp %132 : vector<16x128xbf16>
      %cst_39 = arith.constant 1.000000e+00 : bf16
      %134 = vector.broadcast %cst_39 : bf16 to vector<16x128xbf16>
      %135 = arith.addf %134, %133 : vector<16x128xbf16>
      %136 = arith.divf %134, %135 : vector<16x128xbf16>
      %137 = vector.extract_strided_slice %116 {offsets = [0, 256], sizes = [16, 128], strides = [1, 1]} : vector<16x384xbf16> to vector<16x128xbf16>
      %138 = vector.extract_strided_slice %120 {offsets = [0, 256], sizes = [16, 128], strides = [1, 1]} : vector<16x384xbf16> to vector<16x128xbf16>
      %139 = vector.broadcast %22 : vector<1x128xbf16> to vector<16x128xbf16>
      %140 = arith.addf %138, %139 : vector<16x128xbf16>
      %141 = arith.mulf %128, %140 : vector<16x128xbf16>
      %142 = arith.addf %137, %141 : vector<16x128xbf16>
      %143 = math.tanh %142 : vector<16x128xbf16>
      %cst_40 = arith.constant 1.000000e+00 : bf16
      %144 = vector.broadcast %cst_40 : bf16 to vector<16x128xbf16>
      %145 = arith.subf %144, %136 : vector<16x128xbf16>
      %146 = arith.mulf %145, %143 : vector<16x128xbf16>
      %147 = arith.truncf %111 : vector<16x128xf32> to vector<16x128xbf16>
      %148 = arith.mulf %136, %147 : vector<16x128xbf16>
      %149 = arith.addf %146, %148 : vector<16x128xbf16>
      %150 = arith.extf %149 : vector<16x128xbf16> to vector<16x128xf32>
      %151 = vector.broadcast %112 : i32 to vector<16x1xi32>
      %152 = arith.cmpi slt, %151, %20 : vector<16x1xi32>
      %153 = vector.shape_cast %152 : vector<16x1xi1> to vector<16x1xi1>
      %154 = vector.broadcast %153 : vector<16x1xi1> to vector<16x128xi1>
      %155 = arith.select %154, %150, %111 : vector<16x128xi1>, vector<16x128xf32>
      %c3_i32 = arith.constant 3 : i32
      %156 = arith.addi %3, %c3_i32 : i32
      %c16_i32_41 = arith.constant 16 : i32
      %157 = arith.muli %c3_i32, %c16_i32_41 : i32
      %158 = tpu.assume_multiple %157, 16 : i32
      %159 = arith.index_cast %158 : i32 to index
      %c0_42 = arith.constant 0 : index
      %160 = vector.load %arg11[%159, %c0_42] : memref<128x384xbf16, #tpu.memory_space<vmem>>, vector<16x384xbf16>
      %161 = arith.truncf %155 : vector<16x128xf32> to vector<16x128xbf16>
      %c0_43 = arith.constant 0 : index
      %c0_44 = arith.constant 0 : index
      %162 = vector.load %arg6[%c0_43, %c0_44] : memref<128x384xbf16, #tpu.memory_space<vmem>>, vector<128x384xbf16>
      %cst_45 = arith.constant dense<0.000000e+00> : vector<16x384xf32>
      %163 = tpu.matmul %161, %162, %cst_45 {dimension_numbers = #tpu.dot_dimension_numbers<[1], [0], [0], [1], [0, 0, 1, 1], [], []>} : vector<16x128xbf16>, vector<128x384xbf16>, vector<16x384xf32> -> vector<16x384xf32>
      %164 = arith.truncf %163 : vector<16x384xf32> to vector<16x384xbf16>
      %165 = vector.extract_strided_slice %160 {offsets = [0, 0], sizes = [16, 128], strides = [1, 1]} : vector<16x384xbf16> to vector<16x128xbf16>
      %166 = vector.extract_strided_slice %164 {offsets = [0, 0], sizes = [16, 128], strides = [1, 1]} : vector<16x384xbf16> to vector<16x128xbf16>
      %167 = arith.addf %165, %166 : vector<16x128xbf16>
      %168 = arith.negf %167 : vector<16x128xbf16>
      %169 = math.exp %168 : vector<16x128xbf16>
      %cst_46 = arith.constant 1.000000e+00 : bf16
      %170 = vector.broadcast %cst_46 : bf16 to vector<16x128xbf16>
      %171 = arith.addf %170, %169 : vector<16x128xbf16>
      %172 = arith.divf %170, %171 : vector<16x128xbf16>
      %173 = vector.extract_strided_slice %160 {offsets = [0, 128], sizes = [16, 128], strides = [1, 1]} : vector<16x384xbf16> to vector<16x128xbf16>
      %174 = vector.extract_strided_slice %164 {offsets = [0, 128], sizes = [16, 128], strides = [1, 1]} : vector<16x384xbf16> to vector<16x128xbf16>
      %175 = arith.addf %173, %174 : vector<16x128xbf16>
      %176 = arith.negf %175 : vector<16x128xbf16>
      %177 = math.exp %176 : vector<16x128xbf16>
      %cst_47 = arith.constant 1.000000e+00 : bf16
      %178 = vector.broadcast %cst_47 : bf16 to vector<16x128xbf16>
      %179 = arith.addf %178, %177 : vector<16x128xbf16>
      %180 = arith.divf %178, %179 : vector<16x128xbf16>
      %181 = vector.extract_strided_slice %160 {offsets = [0, 256], sizes = [16, 128], strides = [1, 1]} : vector<16x384xbf16> to vector<16x128xbf16>
      %182 = vector.extract_strided_slice %164 {offsets = [0, 256], sizes = [16, 128], strides = [1, 1]} : vector<16x384xbf16> to vector<16x128xbf16>
      %183 = vector.broadcast %22 : vector<1x128xbf16> to vector<16x128xbf16>
      %184 = arith.addf %182, %183 : vector<16x128xbf16>
      %185 = arith.mulf %172, %184 : vector<16x128xbf16>
      %186 = arith.addf %181, %185 : vector<16x128xbf16>
      %187 = math.tanh %186 : vector<16x128xbf16>
      %cst_48 = arith.constant 1.000000e+00 : bf16
      %188 = vector.broadcast %cst_48 : bf16 to vector<16x128xbf16>
      %189 = arith.subf %188, %180 : vector<16x128xbf16>
      %190 = arith.mulf %189, %187 : vector<16x128xbf16>
      %191 = arith.truncf %155 : vector<16x128xf32> to vector<16x128xbf16>
      %192 = arith.mulf %180, %191 : vector<16x128xbf16>
      %193 = arith.addf %190, %192 : vector<16x128xbf16>
      %194 = arith.extf %193 : vector<16x128xbf16> to vector<16x128xf32>
      %195 = vector.broadcast %156 : i32 to vector<16x1xi32>
      %196 = arith.cmpi slt, %195, %20 : vector<16x1xi32>
      %197 = vector.shape_cast %196 : vector<16x1xi1> to vector<16x1xi1>
      %198 = vector.broadcast %197 : vector<16x1xi1> to vector<16x128xi1>
      %199 = arith.select %198, %194, %155 : vector<16x128xi1>, vector<16x128xf32>
      %c4_i32 = arith.constant 4 : i32
      %200 = arith.addi %3, %c4_i32 : i32
      %c16_i32_49 = arith.constant 16 : i32
      %201 = arith.muli %c4_i32, %c16_i32_49 : i32
      %202 = tpu.assume_multiple %201, 16 : i32
      %203 = arith.index_cast %202 : i32 to index
      %c0_50 = arith.constant 0 : index
      %204 = vector.load %arg11[%203, %c0_50] : memref<128x384xbf16, #tpu.memory_space<vmem>>, vector<16x384xbf16>
      %205 = arith.truncf %199 : vector<16x128xf32> to vector<16x128xbf16>
      %c0_51 = arith.constant 0 : index
      %c0_52 = arith.constant 0 : index
      %206 = vector.load %arg6[%c0_51, %c0_52] : memref<128x384xbf16, #tpu.memory_space<vmem>>, vector<128x384xbf16>
      %cst_53 = arith.constant dense<0.000000e+00> : vector<16x384xf32>
      %207 = tpu.matmul %205, %206, %cst_53 {dimension_numbers = #tpu.dot_dimension_numbers<[1], [0], [0], [1], [0, 0, 1, 1], [], []>} : vector<16x128xbf16>, vector<128x384xbf16>, vector<16x384xf32> -> vector<16x384xf32>
      %208 = arith.truncf %207 : vector<16x384xf32> to vector<16x384xbf16>
      %209 = vector.extract_strided_slice %204 {offsets = [0, 0], sizes = [16, 128], strides = [1, 1]} : vector<16x384xbf16> to vector<16x128xbf16>
      %210 = vector.extract_strided_slice %208 {offsets = [0, 0], sizes = [16, 128], strides = [1, 1]} : vector<16x384xbf16> to vector<16x128xbf16>
      %211 = arith.addf %209, %210 : vector<16x128xbf16>
      %212 = arith.negf %211 : vector<16x128xbf16>
      %213 = math.exp %212 : vector<16x128xbf16>
      %cst_54 = arith.constant 1.000000e+00 : bf16
      %214 = vector.broadcast %cst_54 : bf16 to vector<16x128xbf16>
      %215 = arith.addf %214, %213 : vector<16x128xbf16>
      %216 = arith.divf %214, %215 : vector<16x128xbf16>
      %217 = vector.extract_strided_slice %204 {offsets = [0, 128], sizes = [16, 128], strides = [1, 1]} : vector<16x384xbf16> to vector<16x128xbf16>
      %218 = vector.extract_strided_slice %208 {offsets = [0, 128], sizes = [16, 128], strides = [1, 1]} : vector<16x384xbf16> to vector<16x128xbf16>
      %219 = arith.addf %217, %218 : vector<16x128xbf16>
      %220 = arith.negf %219 : vector<16x128xbf16>
      %221 = math.exp %220 : vector<16x128xbf16>
      %cst_55 = arith.constant 1.000000e+00 : bf16
      %222 = vector.broadcast %cst_55 : bf16 to vector<16x128xbf16>
      %223 = arith.addf %222, %221 : vector<16x128xbf16>
      %224 = arith.divf %222, %223 : vector<16x128xbf16>
      %225 = vector.extract_strided_slice %204 {offsets = [0, 256], sizes = [16, 128], strides = [1, 1]} : vector<16x384xbf16> to vector<16x128xbf16>
      %226 = vector.extract_strided_slice %208 {offsets = [0, 256], sizes = [16, 128], strides = [1, 1]} : vector<16x384xbf16> to vector<16x128xbf16>
      %227 = vector.broadcast %22 : vector<1x128xbf16> to vector<16x128xbf16>
      %228 = arith.addf %226, %227 : vector<16x128xbf16>
      %229 = arith.mulf %216, %228 : vector<16x128xbf16>
      %230 = arith.addf %225, %229 : vector<16x128xbf16>
      %231 = math.tanh %230 : vector<16x128xbf16>
      %cst_56 = arith.constant 1.000000e+00 : bf16
      %232 = vector.broadcast %cst_56 : bf16 to vector<16x128xbf16>
      %233 = arith.subf %232, %224 : vector<16x128xbf16>
      %234 = arith.mulf %233, %231 : vector<16x128xbf16>
      %235 = arith.truncf %199 : vector<16x128xf32> to vector<16x128xbf16>
      %236 = arith.mulf %224, %235 : vector<16x128xbf16>
      %237 = arith.addf %234, %236 : vector<16x128xbf16>
      %238 = arith.extf %237 : vector<16x128xbf16> to vector<16x128xf32>
      %239 = vector.broadcast %200 : i32 to vector<16x1xi32>
      %240 = arith.cmpi slt, %239, %20 : vector<16x1xi32>
      %241 = vector.shape_cast %240 : vector<16x1xi1> to vector<16x1xi1>
      %242 = vector.broadcast %241 : vector<16x1xi1> to vector<16x128xi1>
      %243 = arith.select %242, %238, %199 : vector<16x128xi1>, vector<16x128xf32>
      %c5_i32 = arith.constant 5 : i32
      %244 = arith.addi %3, %c5_i32 : i32
      %c16_i32_57 = arith.constant 16 : i32
      %245 = arith.muli %c5_i32, %c16_i32_57 : i32
      %246 = tpu.assume_multiple %245, 16 : i32
      %247 = arith.index_cast %246 : i32 to index
      %c0_58 = arith.constant 0 : index
      %248 = vector.load %arg11[%247, %c0_58] : memref<128x384xbf16, #tpu.memory_space<vmem>>, vector<16x384xbf16>
      %249 = arith.truncf %243 : vector<16x128xf32> to vector<16x128xbf16>
      %c0_59 = arith.constant 0 : index
      %c0_60 = arith.constant 0 : index
      %250 = vector.load %arg6[%c0_59, %c0_60] : memref<128x384xbf16, #tpu.memory_space<vmem>>, vector<128x384xbf16>
      %cst_61 = arith.constant dense<0.000000e+00> : vector<16x384xf32>
      %251 = tpu.matmul %249, %250, %cst_61 {dimension_numbers = #tpu.dot_dimension_numbers<[1], [0], [0], [1], [0, 0, 1, 1], [], []>} : vector<16x128xbf16>, vector<128x384xbf16>, vector<16x384xf32> -> vector<16x384xf32>
      %252 = arith.truncf %251 : vector<16x384xf32> to vector<16x384xbf16>
      %253 = vector.extract_strided_slice %248 {offsets = [0, 0], sizes = [16, 128], strides = [1, 1]} : vector<16x384xbf16> to vector<16x128xbf16>
      %254 = vector.extract_strided_slice %252 {offsets = [0, 0], sizes = [16, 128], strides = [1, 1]} : vector<16x384xbf16> to vector<16x128xbf16>
      %255 = arith.addf %253, %254 : vector<16x128xbf16>
      %256 = arith.negf %255 : vector<16x128xbf16>
      %257 = math.exp %256 : vector<16x128xbf16>
      %cst_62 = arith.constant 1.000000e+00 : bf16
      %258 = vector.broadcast %cst_62 : bf16 to vector<16x128xbf16>
      %259 = arith.addf %258, %257 : vector<16x128xbf16>
      %260 = arith.divf %258, %259 : vector<16x128xbf16>
      %261 = vector.extract_strided_slice %248 {offsets = [0, 128], sizes = [16, 128], strides = [1, 1]} : vector<16x384xbf16> to vector<16x128xbf16>
      %262 = vector.extract_strided_slice %252 {offsets = [0, 128], sizes = [16, 128], strides = [1, 1]} : vector<16x384xbf16> to vector<16x128xbf16>
      %263 = arith.addf %261, %262 : vector<16x128xbf16>
      %264 = arith.negf %263 : vector<16x128xbf16>
      %265 = math.exp %264 : vector<16x128xbf16>
      %cst_63 = arith.constant 1.000000e+00 : bf16
      %266 = vector.broadcast %cst_63 : bf16 to vector<16x128xbf16>
      %267 = arith.addf %266, %265 : vector<16x128xbf16>
      %268 = arith.divf %266, %267 : vector<16x128xbf16>
      %269 = vector.extract_strided_slice %248 {offsets = [0, 256], sizes = [16, 128], strides = [1, 1]} : vector<16x384xbf16> to vector<16x128xbf16>
      %270 = vector.extract_strided_slice %252 {offsets = [0, 256], sizes = [16, 128], strides = [1, 1]} : vector<16x384xbf16> to vector<16x128xbf16>
      %271 = vector.broadcast %22 : vector<1x128xbf16> to vector<16x128xbf16>
      %272 = arith.addf %270, %271 : vector<16x128xbf16>
      %273 = arith.mulf %260, %272 : vector<16x128xbf16>
      %274 = arith.addf %269, %273 : vector<16x128xbf16>
      %275 = math.tanh %274 : vector<16x128xbf16>
      %cst_64 = arith.constant 1.000000e+00 : bf16
      %276 = vector.broadcast %cst_64 : bf16 to vector<16x128xbf16>
      %277 = arith.subf %276, %268 : vector<16x128xbf16>
      %278 = arith.mulf %277, %275 : vector<16x128xbf16>
      %279 = arith.truncf %243 : vector<16x128xf32> to vector<16x128xbf16>
      %280 = arith.mulf %268, %279 : vector<16x128xbf16>
      %281 = arith.addf %278, %280 : vector<16x128xbf16>
      %282 = arith.extf %281 : vector<16x128xbf16> to vector<16x128xf32>
      %283 = vector.broadcast %244 : i32 to vector<16x1xi32>
      %284 = arith.cmpi slt, %283, %20 : vector<16x1xi32>
      %285 = vector.shape_cast %284 : vector<16x1xi1> to vector<16x1xi1>
      %286 = vector.broadcast %285 : vector<16x1xi1> to vector<16x128xi1>
      %287 = arith.select %286, %282, %243 : vector<16x128xi1>, vector<16x128xf32>
      %c6_i32 = arith.constant 6 : i32
      %288 = arith.addi %3, %c6_i32 : i32
      %c16_i32_65 = arith.constant 16 : i32
      %289 = arith.muli %c6_i32, %c16_i32_65 : i32
      %290 = tpu.assume_multiple %289, 16 : i32
      %291 = arith.index_cast %290 : i32 to index
      %c0_66 = arith.constant 0 : index
      %292 = vector.load %arg11[%291, %c0_66] : memref<128x384xbf16, #tpu.memory_space<vmem>>, vector<16x384xbf16>
      %293 = arith.truncf %287 : vector<16x128xf32> to vector<16x128xbf16>
      %c0_67 = arith.constant 0 : index
      %c0_68 = arith.constant 0 : index
      %294 = vector.load %arg6[%c0_67, %c0_68] : memref<128x384xbf16, #tpu.memory_space<vmem>>, vector<128x384xbf16>
      %cst_69 = arith.constant dense<0.000000e+00> : vector<16x384xf32>
      %295 = tpu.matmul %293, %294, %cst_69 {dimension_numbers = #tpu.dot_dimension_numbers<[1], [0], [0], [1], [0, 0, 1, 1], [], []>} : vector<16x128xbf16>, vector<128x384xbf16>, vector<16x384xf32> -> vector<16x384xf32>
      %296 = arith.truncf %295 : vector<16x384xf32> to vector<16x384xbf16>
      %297 = vector.extract_strided_slice %292 {offsets = [0, 0], sizes = [16, 128], strides = [1, 1]} : vector<16x384xbf16> to vector<16x128xbf16>
      %298 = vector.extract_strided_slice %296 {offsets = [0, 0], sizes = [16, 128], strides = [1, 1]} : vector<16x384xbf16> to vector<16x128xbf16>
      %299 = arith.addf %297, %298 : vector<16x128xbf16>
      %300 = arith.negf %299 : vector<16x128xbf16>
      %301 = math.exp %300 : vector<16x128xbf16>
      %cst_70 = arith.constant 1.000000e+00 : bf16
      %302 = vector.broadcast %cst_70 : bf16 to vector<16x128xbf16>
      %303 = arith.addf %302, %301 : vector<16x128xbf16>
      %304 = arith.divf %302, %303 : vector<16x128xbf16>
      %305 = vector.extract_strided_slice %292 {offsets = [0, 128], sizes = [16, 128], strides = [1, 1]} : vector<16x384xbf16> to vector<16x128xbf16>
      %306 = vector.extract_strided_slice %296 {offsets = [0, 128], sizes = [16, 128], strides = [1, 1]} : vector<16x384xbf16> to vector<16x128xbf16>
      %307 = arith.addf %305, %306 : vector<16x128xbf16>
      %308 = arith.negf %307 : vector<16x128xbf16>
      %309 = math.exp %308 : vector<16x128xbf16>
      %cst_71 = arith.constant 1.000000e+00 : bf16
      %310 = vector.broadcast %cst_71 : bf16 to vector<16x128xbf16>
      %311 = arith.addf %310, %309 : vector<16x128xbf16>
      %312 = arith.divf %310, %311 : vector<16x128xbf16>
      %313 = vector.extract_strided_slice %292 {offsets = [0, 256], sizes = [16, 128], strides = [1, 1]} : vector<16x384xbf16> to vector<16x128xbf16>
      %314 = vector.extract_strided_slice %296 {offsets = [0, 256], sizes = [16, 128], strides = [1, 1]} : vector<16x384xbf16> to vector<16x128xbf16>
      %315 = vector.broadcast %22 : vector<1x128xbf16> to vector<16x128xbf16>
      %316 = arith.addf %314, %315 : vector<16x128xbf16>
      %317 = arith.mulf %304, %316 : vector<16x128xbf16>
      %318 = arith.addf %313, %317 : vector<16x128xbf16>
      %319 = math.tanh %318 : vector<16x128xbf16>
      %cst_72 = arith.constant 1.000000e+00 : bf16
      %320 = vector.broadcast %cst_72 : bf16 to vector<16x128xbf16>
      %321 = arith.subf %320, %312 : vector<16x128xbf16>
      %322 = arith.mulf %321, %319 : vector<16x128xbf16>
      %323 = arith.truncf %287 : vector<16x128xf32> to vector<16x128xbf16>
      %324 = arith.mulf %312, %323 : vector<16x128xbf16>
      %325 = arith.addf %322, %324 : vector<16x128xbf16>
      %326 = arith.extf %325 : vector<16x128xbf16> to vector<16x128xf32>
      %327 = vector.broadcast %288 : i32 to vector<16x1xi32>
      %328 = arith.cmpi slt, %327, %20 : vector<16x1xi32>
      %329 = vector.shape_cast %328 : vector<16x1xi1> to vector<16x1xi1>
      %330 = vector.broadcast %329 : vector<16x1xi1> to vector<16x128xi1>
      %331 = arith.select %330, %326, %287 : vector<16x128xi1>, vector<16x128xf32>
      %c7_i32 = arith.constant 7 : i32
      %332 = arith.addi %3, %c7_i32 : i32
      %c16_i32_73 = arith.constant 16 : i32
      %333 = arith.muli %c7_i32, %c16_i32_73 : i32
      %334 = tpu.assume_multiple %333, 16 : i32
      %335 = arith.index_cast %334 : i32 to index
      %c0_74 = arith.constant 0 : index
      %336 = vector.load %arg11[%335, %c0_74] : memref<128x384xbf16, #tpu.memory_space<vmem>>, vector<16x384xbf16>
      %337 = arith.truncf %331 : vector<16x128xf32> to vector<16x128xbf16>
      %c0_75 = arith.constant 0 : index
      %c0_76 = arith.constant 0 : index
      %338 = vector.load %arg6[%c0_75, %c0_76] : memref<128x384xbf16, #tpu.memory_space<vmem>>, vector<128x384xbf16>
      %cst_77 = arith.constant dense<0.000000e+00> : vector<16x384xf32>
      %339 = tpu.matmul %337, %338, %cst_77 {dimension_numbers = #tpu.dot_dimension_numbers<[1], [0], [0], [1], [0, 0, 1, 1], [], []>} : vector<16x128xbf16>, vector<128x384xbf16>, vector<16x384xf32> -> vector<16x384xf32>
      %340 = arith.truncf %339 : vector<16x384xf32> to vector<16x384xbf16>
      %341 = vector.extract_strided_slice %336 {offsets = [0, 0], sizes = [16, 128], strides = [1, 1]} : vector<16x384xbf16> to vector<16x128xbf16>
      %342 = vector.extract_strided_slice %340 {offsets = [0, 0], sizes = [16, 128], strides = [1, 1]} : vector<16x384xbf16> to vector<16x128xbf16>
      %343 = arith.addf %341, %342 : vector<16x128xbf16>
      %344 = arith.negf %343 : vector<16x128xbf16>
      %345 = math.exp %344 : vector<16x128xbf16>
      %cst_78 = arith.constant 1.000000e+00 : bf16
      %346 = vector.broadcast %cst_78 : bf16 to vector<16x128xbf16>
      %347 = arith.addf %346, %345 : vector<16x128xbf16>
      %348 = arith.divf %346, %347 : vector<16x128xbf16>
      %349 = vector.extract_strided_slice %336 {offsets = [0, 128], sizes = [16, 128], strides = [1, 1]} : vector<16x384xbf16> to vector<16x128xbf16>
      %350 = vector.extract_strided_slice %340 {offsets = [0, 128], sizes = [16, 128], strides = [1, 1]} : vector<16x384xbf16> to vector<16x128xbf16>
      %351 = arith.addf %349, %350 : vector<16x128xbf16>
      %352 = arith.negf %351 : vector<16x128xbf16>
      %353 = math.exp %352 : vector<16x128xbf16>
      %cst_79 = arith.constant 1.000000e+00 : bf16
      %354 = vector.broadcast %cst_79 : bf16 to vector<16x128xbf16>
      %355 = arith.addf %354, %353 : vector<16x128xbf16>
      %356 = arith.divf %354, %355 : vector<16x128xbf16>
      %357 = vector.extract_strided_slice %336 {offsets = [0, 256], sizes = [16, 128], strides = [1, 1]} : vector<16x384xbf16> to vector<16x128xbf16>
      %358 = vector.extract_strided_slice %340 {offsets = [0, 256], sizes = [16, 128], strides = [1, 1]} : vector<16x384xbf16> to vector<16x128xbf16>
      %359 = vector.broadcast %22 : vector<1x128xbf16> to vector<16x128xbf16>
      %360 = arith.addf %358, %359 : vector<16x128xbf16>
      %361 = arith.mulf %348, %360 : vector<16x128xbf16>
      %362 = arith.addf %357, %361 : vector<16x128xbf16>
      %363 = math.tanh %362 : vector<16x128xbf16>
      %cst_80 = arith.constant 1.000000e+00 : bf16
      %364 = vector.broadcast %cst_80 : bf16 to vector<16x128xbf16>
      %365 = arith.subf %364, %356 : vector<16x128xbf16>
      %366 = arith.mulf %365, %363 : vector<16x128xbf16>
      %367 = arith.truncf %331 : vector<16x128xf32> to vector<16x128xbf16>
      %368 = arith.mulf %356, %367 : vector<16x128xbf16>
      %369 = arith.addf %366, %368 : vector<16x128xbf16>
      %370 = arith.extf %369 : vector<16x128xbf16> to vector<16x128xf32>
      %371 = vector.broadcast %332 : i32 to vector<16x1xi32>
      %372 = arith.cmpi slt, %371, %20 : vector<16x1xi32>
      %373 = vector.shape_cast %372 : vector<16x1xi1> to vector<16x1xi1>
      %374 = vector.broadcast %373 : vector<16x1xi1> to vector<16x128xi1>
      %375 = arith.select %374, %370, %331 : vector<16x128xi1>, vector<16x128xf32>
      %c8_i32_81 = arith.constant 8 : i32
      %c0_82 = arith.constant 0 : index
      %c0_83 = arith.constant 0 : index
      %376 = vector.load %arg12[%c0_82, %c0_83] : memref<16x128xf32, #tpu.memory_space<vmem>>, vector<16x128xf32>
      tpu.vector_store %arg12[%c0_82, %c0_83], %375 {strides = array<i32>} : memref<16x128xf32, #tpu.memory_space<vmem>>, vector<16x128xf32>,
    } else {
    }
    %c1_i32 = arith.constant 1 : i32
    %9 = arith.cmpi eq, %arg1, %c1_i32 : i32
    %10 = arith.extui %9 : i1 to i32
    %c0_i32_2 = arith.constant 0 : i32
    %11 = arith.cmpi ne, %10, %c0_i32_2 : i32
    scf.if %11 {
      %c0 = arith.constant 0 : index
      %c0_3 = arith.constant 0 : index
      %12 = vector.load %arg12[%c0, %c0_3] : memref<16x128xf32, #tpu.memory_space<vmem>>, vector<16x128xf32>
      %13 = arith.truncf %12 : vector<16x128xf32> to vector<16x128xbf16>
      %c0_4 = arith.constant 0 : index
      %c0_5 = arith.constant 0 : index
      %14 = vector.load %arg9[%c0_4, %c0_5] : memref<128x128xbf16, #tpu.memory_space<vmem>>, vector<128x128xbf16>
      %cst = arith.constant dense<0.000000e+00> : vector<16x128xf32>
      %15 = tpu.matmul %13, %14, %cst {dimension_numbers = #tpu.dot_dimension_numbers<[1], [0], [0], [1], [0, 0, 1, 1], [], []>} : vector<16x128xbf16>, vector<128x128xbf16>, vector<16x128xf32> -> vector<16x128xf32>
      %c0_6 = arith.constant 0 : index
      %c0_7 = arith.constant 0 : index
      %16 = vector.load %arg10[%c0_6, %c0_7] : memref<16x128xf32, #tpu.memory_space<vmem>>, vector<16x128xf32>
      tpu.vector_store %arg10[%c0_6, %c0_7], %15 {strides = array<i32>} : memref<16x128xf32, #tpu.memory_space<vmem>>, vector<16x128xf32>,
    } else {
    }
    return
  }
  func.func @transform_0(%arg0: i32, %arg1: i32, %arg2: memref<1xi32, #tpu.memory_space<smem>>) -> (i32, i32) {
    %c2_i32 = arith.constant 2 : i32
    %0 = arith.muli %arg0, %c2_i32 : i32
    %1 = arith.addi %0, %arg1 : i32
    %c0_i32 = arith.constant 0 : i32
    %c0_i32_0 = arith.constant 0 : i32
    return %1, %c0_i32 : i32, i32
  }
  func.func @transform_1(%arg0: i32, %arg1: i32, %arg2: memref<1xi32, #tpu.memory_space<smem>>) -> (i32, i32) {
    %c0_i32 = arith.constant 0 : i32
    %c0_i32_0 = arith.constant 0 : i32
    return %arg0, %c0_i32 : i32, i32
  }
  func.func @transform_2(%arg0: i32, %arg1: i32, %arg2: memref<1xi32, #tpu.memory_space<smem>>) -> (i32, i32) {
    %c0_i32 = arith.constant 0 : i32
    %c0_i32_0 = arith.constant 0 : i32
    %c0_i32_1 = arith.constant 0 : i32
    return %c0_i32, %c0_i32_0 : i32, i32
  }
  func.func @transform_3(%arg0: i32, %arg1: i32, %arg2: memref<1xi32, #tpu.memory_space<smem>>) -> (i32, i32) {
    %c0_i32 = arith.constant 0 : i32
    %c0_i32_0 = arith.constant 0 : i32
    %c0_i32_1 = arith.constant 0 : i32
    return %c0_i32, %c0_i32_0 : i32, i32
  }
  func.func @transform_4(%arg0: i32, %arg1: i32, %arg2: memref<1xi32, #tpu.memory_space<smem>>) -> (i32, i32) {
    %c0_i32 = arith.constant 0 : i32
    %c0_i32_0 = arith.constant 0 : i32
    %c0_i32_1 = arith.constant 0 : i32
    return %c0_i32, %c0_i32_0 : i32, i32
  }
  func.func @transform_5(%arg0: i32, %arg1: i32, %arg2: memref<1xi32, #tpu.memory_space<smem>>) -> (i32, i32) {
    %c0_i32 = arith.constant 0 : i32
    %c0_i32_0 = arith.constant 0 : i32
    %c0_i32_1 = arith.constant 0 : i32
    return %c0_i32, %c0_i32_0 : i32, i32
  }
  func.func @transform_6(%arg0: i32, %arg1: i32, %arg2: memref<1xi32, #tpu.memory_space<smem>>) -> (i32, i32) {
    %c0_i32 = arith.constant 0 : i32
    %c0_i32_0 = arith.constant 0 : i32
    %c0_i32_1 = arith.constant 0 : i32
    return %c0_i32, %c0_i32_0 : i32, i32
  }
  func.func @transform_7(%arg0: i32, %arg1: i32, %arg2: memref<1xi32, #tpu.memory_space<smem>>) -> (i32, i32) {
    %c0_i32 = arith.constant 0 : i32
    %c0_i32_0 = arith.constant 0 : i32
    return %arg0, %c0_i32 : i32, i32
  }
}

</mosaic_0001>

<llo_original>
// kernel: gru4rec_encoder.1
$region0: #{gru4rec_encoder.1}
  #allocation0 [shape = 'u32[]', space=smem, size = 0x4, offset = 0x4, fixed_abs, tag = 'smem constant byte address 0x4 - core index']
  #allocation1 [shape = 'u32[144,128]{1,0:T(1,128)}', space=vmem, size = 0x12000, scoped, tag = 'internal scratch']
  #allocation2 [shape = 'bf16[128,384]{1,0:T(8,128)(2,1)}', space=vmem, size = 0x18000, scoped, tag = 'scratch operand']
  #allocation3 [shape = 'f32[16,128]{1,0:T(8,128)}', space=vmem, size = 0x2000, scoped, tag = 'scratch operand']
  #allocation4 [shape = 's32[1]{0}', space=sflag, size = 0x4, scoped, tag = 'scoped memory for gru4rec_encoder.1']
  #allocation5 [shape = 's32[1]{0:T(128)S(6)}', space=smem, size = 0x200, scoped, tag = 'prefetched SMEM operand 0']
  %s0 = inlined_call_operand.<no memory space> [shape: s32[1], index: 0, kind: input, shape index: {}]
  %s1 = inlined_call_operand.vmem [shape: bf16[256,128], index: 1, kind: input, shape index: {}]
  %s2 = inlined_call_operand.vmem [shape: s32[16,1], index: 2, kind: input, shape index: {}]
  %s3 = inlined_call_operand.vmem [shape: bf16[128,384], index: 3, kind: input, shape index: {}]
  %s4 = inlined_call_operand.vmem [shape: bf16[128,384], index: 4, kind: input, shape index: {}]
  %s5 = inlined_call_operand.vmem [shape: f32[1,384], index: 5, kind: input, shape index: {}]
  %s6 = inlined_call_operand.vmem [shape: f32[1,128], index: 6, kind: input, shape index: {}]
  %s7 = inlined_call_operand.vmem [shape: bf16[128,128], index: 7, kind: input, shape index: {}]
  %s8 = inlined_call_operand.vmem [shape: f32[16,128], index: 8, kind: output, shape index: {}]
  %s9 = sld [smem:[#allocation0]]
  $region73: #{gru4rec_encoder.1} parent=0
    _
  %s11 = ssub.s32 1, %s9
  %s12 = scalar_select 0, %s11, %s9
  %13 = sst [smem:[#allocation5]] %s0
  loop: start=0, step=1, limit=4
  $region2: #{gru4rec_encoder.1} parent=0 // loop_pre_header
    _
  $region3: #{gru4rec_encoder.1} parent=0 // loop_header
    %s15 = sphi 0, %s19
    %p16 = scmp.ge.s32.totalorder %s15, 4
    %s22 = sphi 0, %s34
    %s23 = sphi 0, %s30
    %s24 = sphi 0, %s22
    %s25 = sphi 0, %s23
    %s26 = sphi 0, %s24
    %s27 = sphi 0, %s25
    %s41 = sphi 0, %s43
    %s44 = sphi 0, %s41
    %s45 = sphi 0, %s44
    %s61 = sphi 0, %s45
    %s67 = sphi 0, %s69
    %s70 = sphi 0, %s67
    %s71 = sphi 0, %s70
    %s87 = sphi 0, %s71
    %s91 = sphi 0, %s91
    %s93 = sphi 0, %s91
    %s94 = sphi 0, %s93
    %s108 = sphi 0, %s94
    %s112 = sphi 0, %s112
    %s114 = sphi 0, %s112
    %s115 = sphi 0, %s114
    %s129 = sphi 0, %s115
    %s133 = sphi 0, %s133
    %s135 = sphi 0, %s133
    %s136 = sphi 0, %s135
    %s150 = sphi 0, %s136
    %s154 = sphi 0, %s154
    %s156 = sphi 0, %s154
    %s157 = sphi 0, %s156
    %s171 = sphi 0, %s157
    %s175 = sphi 0, %s175
    %s177 = sphi 0, %s175
    %s178 = sphi 0, %s177
    %s192 = sphi 0, %s178
    %s198 = sphi 0, %s200
    %s201 = sphi 0, %s198
    %s202 = sphi 0, %s201
    %s218 = sphi 0, %s202
  $region4: #{gru4rec_encoder.1} parent=0 // loop_header_branch
    %18 = sbr.rel (%p16) target = $region8
  $region5: #{gru4rec_encoder.1} parent=0 // loop_body
    %s20 = ssub.s32 %s15, 1
    %s21 = ssub.s32 %s15, 2
    %s28 = sadd.s32 1, %s23
    %p29 = scmp.ge.s32.totalorder %s28, 2
    %s30 = scalar_select %p29, 0, %s28
    %s31 = sadd.s32 1, %s22
    %s32 = scalar_select %p29, %s31, %s22
    %p33 = scmp.ge.s32.totalorder %s32, 1
    %s34 = scalar_select %p33, 0, %s32
    %s35 = smul.u32 %s22, 2
    %s36 = sadd.s32 %s35, %s23
    %s37 = smul.u32 %s34, 2
    %s38 = sadd.s32 %s37, %s30
    %s39 = ssub.s32 %s36, %s38
    %p40 = scmp.eq.s32.totalorder %s39, 0
    %s42 = sadd.s32 %s41, 1
    %s43 = scalar_select %p40, %s41, %s42
    %p46 = pneg %p40
    %p47 = scmp.eq.s32.totalorder %s15, 1
    %p48 = por %p46, %p47
    %p49 = scmp.ne.s32.totalorder %s41, %s44
    %p50 = scmp.eq.s32.totalorder %s15, 0
    %p51 = por %p49, %p50
    %p52 = scmp.ne.s32.totalorder %s41, %s44
    %p53 = scmp.eq.s32.totalorder %s20, 1
    %p54 = por %p52, %p53
    %p55 = scmp.ne.s32.totalorder %s44, %s45
    %p56 = scmp.eq.s32.totalorder %s20, 0
    %p57 = por %p55, %p56
    %p58 = scmp.ne.s32.totalorder %s44, %s45
    %p59 = scmp.eq.s32.totalorder %s21, 1
    %p60 = por %p58, %p59
    %p62 = scmp.ne.s32.totalorder %s45, %s61
    %p63 = scmp.eq.s32.totalorder %s21, 0
    %p64 = por %p62, %p63
    %s65 = ssub.s32 %s22, %s34
    %p66 = scmp.eq.s32.totalorder %s65, 0
    %s68 = sadd.s32 %s67, 1
    %s69 = scalar_select %p66, %s67, %s68
    %p72 = pneg %p66
    %p73 = scmp.eq.s32.totalorder %s15, 1
    %p74 = por %p72, %p73
    %p75 = scmp.ne.s32.totalorder %s67, %s70
    %p76 = scmp.eq.s32.totalorder %s15, 0
    %p77 = por %p75, %p76
    %p78 = scmp.ne.s32.totalorder %s67, %s70
    %p79 = scmp.eq.s32.totalorder %s20, 1
    %p80 = por %p78, %p79
    %p81 = scmp.ne.s32.totalorder %s70, %s71
    %p82 = scmp.eq.s32.totalorder %s20, 0
    %p83 = por %p81, %p82
    %p84 = scmp.ne.s32.totalorder %s70, %s71
    %p85 = scmp.eq.s32.totalorder %s21, 1
    %p86 = por %p84, %p85
    %p88 = scmp.ne.s32.totalorder %s71, %s87
    %p89 = scmp.eq.s32.totalorder %s21, 0
    %p90 = por %p88, %p89
    %s92 = sadd.s32 %s91, 1
    %p95 = scmp.eq.s32.totalorder %s15, 1
    %p96 = scmp.ne.s32.totalorder %s91, %s93
    %p97 = scmp.eq.s32.totalorder %s15, 0
    %p98 = por %p96, %p97
    %p99 = scmp.ne.s32.totalorder %s91, %s93
    %p100 = scmp.eq.s32.totalorder %s20, 1
    %p101 = por %p99, %p100
    %p102 = scmp.ne.s32.totalorder %s93, %s94
    %p103 = scmp.eq.s32.totalorder %s20, 0
    %p104 = por %p102, %p103
    %p105 = scmp.ne.s32.totalorder %s93, %s94
    %p106 = scmp.eq.s32.totalorder %s21, 1
    %p107 = por %p105, %p106
    %p109 = scmp.ne.s32.totalorder %s94, %s108
    %p110 = scmp.eq.s32.totalorder %s21, 0
    %p111 = por %p109, %p110
    %s113 = sadd.s32 %s112, 1
    %p116 = scmp.eq.s32.totalorder %s15, 1
    %p117 = scmp.ne.s32.totalorder %s112, %s114
    %p118 = scmp.eq.s32.totalorder %s15, 0
    %p119 = por %p117, %p118
    %p120 = scmp.ne.s32.totalorder %s112, %s114
    %p121 = scmp.eq.s32.totalorder %s20, 1
    %p122 = por %p120, %p121
    %p123 = scmp.ne.s32.totalorder %s114, %s115
    %p124 = scmp.eq.s32.totalorder %s20, 0
    %p125 = por %p123, %p124
    %p126 = scmp.ne.s32.totalorder %s114, %s115
    %p127 = scmp.eq.s32.totalorder %s21, 1
    %p128 = por %p126, %p127
    %p130 = scmp.ne.s32.totalorder %s115, %s129
    %p131 = scmp.eq.s32.totalorder %s21, 0
    %p132 = por %p130, %p131
    %s134 = sadd.s32 %s133, 1
    %p137 = scmp.eq.s32.totalorder %s15, 1
    %p138 = scmp.ne.s32.totalorder %s133, %s135
    %p139 = scmp.eq.s32.totalorder %s15, 0
    %p140 = por %p138, %p139
    %p141 = scmp.ne.s32.totalorder %s133, %s135
    %p142 = scmp.eq.s32.totalorder %s20, 1
    %p143 = por %p141, %p142
    %p144 = scmp.ne.s32.totalorder %s135, %s136
    %p145 = scmp.eq.s32.totalorder %s20, 0
    %p146 = por %p144, %p145
    %p147 = scmp.ne.s32.totalorder %s135, %s136
    %p148 = scmp.eq.s32.totalorder %s21, 1
    %p149 = por %p147, %p148
    %p151 = scmp.ne.s32.totalorder %s136, %s150
    %p152 = scmp.eq.s32.totalorder %s21, 0
    %p153 = por %p151, %p152
    %s155 = sadd.s32 %s154, 1
    %p158 = scmp.eq.s32.totalorder %s15, 1
    %p159 = scmp.ne.s32.totalorder %s154, %s156
    %p160 = scmp.eq.s32.totalorder %s15, 0
    %p161 = por %p159, %p160
    %p162 = scmp.ne.s32.totalorder %s154, %s156
    %p163 = scmp.eq.s32.totalorder %s20, 1
    %p164 = por %p162, %p163
    %p165 = scmp.ne.s32.totalorder %s156, %s157
    %p166 = scmp.eq.s32.totalorder %s20, 0
    %p167 = por %p165, %p166
    %p168 = scmp.ne.s32.totalorder %s156, %s157
    %p169 = scmp.eq.s32.totalorder %s21, 1
    %p170 = por %p168, %p169
    %p172 = scmp.ne.s32.totalorder %s157, %s171
    %p173 = scmp.eq.s32.totalorder %s21, 0
    %p174 = por %p172, %p173
    %s176 = sadd.s32 %s175, 1
    %p179 = scmp.eq.s32.totalorder %s15, 1
    %p180 = scmp.ne.s32.totalorder %s175, %s177
    %p181 = scmp.eq.s32.totalorder %s15, 0
    %p182 = por %p180, %p181
    %p183 = scmp.ne.s32.totalorder %s175, %s177
    %p184 = scmp.eq.s32.totalorder %s20, 1
    %p185 = por %p183, %p184
    %p186 = scmp.ne.s32.totalorder %s177, %s178
    %p187 = scmp.eq.s32.totalorder %s20, 0
    %p188 = por %p186, %p187
    %p189 = scmp.ne.s32.totalorder %s177, %s178
    %p190 = scmp.eq.s32.totalorder %s21, 1
    %p191 = por %p189, %p190
    %p193 = scmp.ne.s32.totalorder %s178, %s192
    %p194 = scmp.eq.s32.totalorder %s21, 0
    %p195 = por %p193, %p194
    %s196 = ssub.s32 %s22, %s34
    %p197 = scmp.eq.s32.totalorder %s196, 0
    %s199 = sadd.s32 %s198, 1
    %s200 = scalar_select %p197, %s198, %s199
    %p203 = pneg %p197
    %p204 = scmp.eq.s32.totalorder %s15, 1
    %p205 = por %p203, %p204
    %p206 = scmp.ne.s32.totalorder %s198, %s201
    %p207 = scmp.eq.s32.totalorder %s15, 0
    %p208 = por %p206, %p207
    %p209 = scmp.ne.s32.totalorder %s198, %s201
    %p210 = scmp.eq.s32.totalorder %s20, 1
    %p211 = por %p209, %p210
    %p212 = scmp.ne.s32.totalorder %s201, %s202
    %p213 = scmp.eq.s32.totalorder %s20, 0
    %p214 = por %p212, %p213
    %p215 = scmp.ne.s32.totalorder %s201, %s202
    %p216 = scmp.eq.s32.totalorder %s21, 1
    %p217 = por %p215, %p216
    %p219 = scmp.ne.s32.totalorder %s202, %s218
    %p220 = scmp.eq.s32.totalorder %s21, 0
    %p221 = por %p219, %p220
    %p222 = scmp.le.s32.totalorder 1, %s15
    %p223 = scmp.lt.s32.totalorder %s15, 3
    %p224 = pnand %p222, %p223
    %p225 = pneg %p224
    // Predicated region
    $region9: #{gru4rec_encoder.1} parent=5 // pred_check
      _
    $region10: #{gru4rec_encoder.1} parent=5 // pred_check_branch
      %227 = sbr.rel (%p224) target = $region12
    $region11: #{gru4rec_encoder.1} parent=5 // pred_region
      %s228 = ssub.s32 %s15, 1
      // Predicated region
      $region13: #{gru4rec_encoder.1} parent=11 // pred_check
        %p229 = pneg %p83
      $region14: #{gru4rec_encoder.1} parent=11 // pred_check_branch
        %231 = sbr.rel (%p229) target = $region16
      $region15: #{gru4rec_encoder.1} parent=11 // pred_region
        %s232 = smul.u32 2, %s24
        %p233 = scmp.lt.s32.totalorder %s232, 1
        %s234 = scalar_select %p233, %s232, 1
        %s235 = smul.addr %s234, 8
        %s236 = scalar_lea.vmem %s2, %s235
        %s237 = smul.u32 2, %s24
      $region16: #{gru4rec_encoder.1} parent=11 // pred_fallthru
        _
      // Predicated region
      $region17: #{gru4rec_encoder.1} parent=11 // pred_check
        %p238 = pneg %p104
      $region18: #{gru4rec_encoder.1} parent=11 // pred_check_branch
        %240 = sbr.rel (%p238) target = $region20
      $region19: #{gru4rec_encoder.1} parent=11 // pred_region
        _
      $region20: #{gru4rec_encoder.1} parent=11 // pred_fallthru
        _
      // Predicated region
      $region21: #{gru4rec_encoder.1} parent=11 // pred_check
        %p241 = pneg %p125
      $region22: #{gru4rec_encoder.1} parent=11 // pred_check_branch
        %243 = sbr.rel (%p241) target = $region24
      $region23: #{gru4rec_encoder.1} parent=11 // pred_region
        _
      $region24: #{gru4rec_encoder.1} parent=11 // pred_fallthru
        _
      // Predicated region
      $region25: #{gru4rec_encoder.1} parent=11 // pred_check
        %p244 = pneg %p146
      $region26: #{gru4rec_encoder.1} parent=11 // pred_check_branch
        %246 = sbr.rel (%p244) target = $region28
      $region27: #{gru4rec_encoder.1} parent=11 // pred_region
        _
      $region28: #{gru4rec_encoder.1} parent=11 // pred_fallthru
        _
      // Predicated region
      $region29: #{gru4rec_encoder.1} parent=11 // pred_check
        %p247 = pneg %p167
      $region30: #{gru4rec_encoder.1} parent=11 // pred_check_branch
        %249 = sbr.rel (%p247) target = $region32
      $region31: #{gru4rec_encoder.1} parent=11 // pred_region
        _
      $region32: #{gru4rec_encoder.1} parent=11 // pred_fallthru
        _
      // Predicated region
      $region33: #{gru4rec_encoder.1} parent=11 // pred_check
        %p250 = pneg %p188
      $region34: #{gru4rec_encoder.1} parent=11 // pred_check_branch
        %252 = sbr.rel (%p250) target = $region36
      $region35: #{gru4rec_encoder.1} parent=11 // pred_region
        _
      $region36: #{gru4rec_encoder.1} parent=11 // pred_fallthru
        _
    $region12: #{gru4rec_encoder.1} parent=5 // pred_fallthru
      _
    %p253 = scmp.lt.s32.totalorder %s15, 2
    // Predicated region
    $region37: #{gru4rec_encoder.1} parent=5 // pred_check
      %p254 = pneg %p253
    $region38: #{gru4rec_encoder.1} parent=5 // pred_check_branch
      %256 = sbr.rel (%p254) target = $region40
    $region39: #{gru4rec_encoder.1} parent=5 // pred_region
      // Predicated region
      $region41: #{gru4rec_encoder.1} parent=39 // pred_check
        %p257 = pneg %p51
      $region42: #{gru4rec_encoder.1} parent=39 // pred_check_branch
        %259 = sbr.rel (%p257) target = $region44
      $region43: #{gru4rec_encoder.1} parent=39 // pred_region
        %s260 = smul.u32 %s22, 2
        %s261 = sadd.s32 %s260, %s23
        %s262 = smul.u32 16, %s261
        %p263 = scmp.lt.s32.totalorder %s262, 31
        %s264 = scalar_select %p263, %s262, 31
        %s265 = smul.addr %s264, 4
        %s266 = scalar_lea.vmem %s1, %s265
        %s267 = smul.u32 %s22, 2
        %s268 = sadd.s32 %s267, %s23
        %s269 = smul.u32 16, %s268
      $region44: #{gru4rec_encoder.1} parent=39 // pred_fallthru
        _
    $region40: #{gru4rec_encoder.1} parent=5 // pred_fallthru
      _
    %p270 = scmp.le.s32.totalorder 1, %s15
    %p271 = scmp.lt.s32.totalorder %s15, 3
    %p272 = pnand %p270, %p271
    %p273 = pneg %p272
    // Predicated region
    $region45: #{gru4rec_encoder.1} parent=5 // pred_check
      _
    $region46: #{gru4rec_encoder.1} parent=5 // pred_check_branch
      %275 = sbr.rel (%p272) target = $region48
    $region47: #{gru4rec_encoder.1} parent=5 // pred_region
      %s276 = ssub.s32 %s15, 1
      %s277 = smul.u32 %s24, 2
      %s278 = sadd.s32 %s277, %s25
      %s279 = smul.u32 16, %s278
      %p280 = scmp.lt.s32.totalorder %s279, 31
      %s281 = scalar_select %p280, %s279, 31
      %s282 = smul.addr %s281, 4
      %s283 = scalar_lea.vmem %s1, %s282
      %p284 = pneg %p57
      %p285 = pneg %p54
      %s286 = smul.u32 2, %s24
      %p287 = scmp.lt.s32.totalorder %s286, 1
      %s288 = scalar_select %p287, %s286, 1
      %s289 = smul.addr %s288, 8
      %s290 = scalar_lea.vmem %s2, %s289
      %p291 = pneg %p83
      %p292 = pneg %p80
      %p293 = pneg %p104
      %p294 = pneg %p101
      %p295 = pneg %p125
      %p296 = pneg %p122
      %p297 = pneg %p146
      %p298 = pneg %p143
      %p299 = pneg %p167
      %p300 = pneg %p164
      %p301 = pneg %p188
      %p302 = pneg %p185
      %p303 = pneg %p214
      %p304 = pneg %p211
      %s305 = smul.u32 2, %s24
      %p306 = scmp.lt.s32.totalorder %s305, 1
      %s307 = scalar_select %p306, %s305, 1
      %s308 = smul.addr %s307, 8
      %s309 = scalar_lea.vmem %s8, %s308
      %s310 = smul.u32 %s24, 2
      %s311 = sadd.s32 %s310, %s25
      %s312 = smul.u32 16, %s311
      %p313 = scmp.lt.s32.totalorder %s312, 31
      %s314 = scalar_select %p313, %s312, 31
      %s315 = smul.addr %s314, 4
      %s316 = scalar_lea.vmem %s1, %s315
      %s317 = smul.u32 %s24, 2
      %s318 = sadd.s32 %s317, %s25
      %s319 = smul.u32 16, %s318
      %s320 = smul.u32 2, %s24
      %p321 = scmp.lt.s32.totalorder %s320, 1
      %s322 = scalar_select %p321, %s320, 1
      %s323 = smul.addr %s322, 8
      %s324 = scalar_lea.vmem %s2, %s323
      %s325 = smul.u32 2, %s24
      %s326 = smul.u32 2, %s24
      %p327 = scmp.lt.s32.totalorder %s326, 1
      %s328 = scalar_select %p327, %s326, 1
      %s329 = smul.addr %s328, 8
      %s330 = scalar_lea.vmem %s8, %s329
      %s331 = smul.u32 2, %s24
      %p334 = scmp.eq.s32.totalorder %s25, 0
      // Predicated region
      $region49: #{gru4rec_encoder.1} parent=47 // pred_check
        %p335 = pneg %p334
      $region50: #{gru4rec_encoder.1} parent=47 // pred_check_branch
        %337 = sbr.rel (%p335) target = $region52
      $region51: #{gru4rec_encoder.1} parent=47 // pred_region
        %338 = vst [vmem:[#allocation3] sm:$0xff] 0.0
        %339 = vst [vmem:[#allocation3 + $0x8] sm:$0xff] 0.0
      $region52: #{gru4rec_encoder.1} parent=47 // pred_fallthru
        _
      %s340 = smul.u32 %s25, 8
      %s341 = sld [smem:[#allocation5 + %s24]]
      %p342 = scmp.lt.s32.totalorder %s340, %s341
      // Predicated region
      $region53: #{gru4rec_encoder.1} parent=47 // pred_check
        %p343 = pneg %p342
      $region54: #{gru4rec_encoder.1} parent=47 // pred_check_branch
        %345 = sbr.rel (%p343) target = $region56
      $region55: #{gru4rec_encoder.1} parent=47 // pred_region
        %v346 = vld [vmem:[%s316] sm:$0xf]
        %v347 = vld [vmem:[%s316 + $0x4] sm:$0xf]
        %v348 = vld [vmem:[%s316 + $0x8] sm:$0xf]
        %v349 = vld [vmem:[%s316 + $0xc] sm:$0xf]
        %v350 = vld [vmem:[%s316 + $0x10] sm:$0xf]
        %v351 = vld [vmem:[%s316 + $0x14] sm:$0xf]
        %v352 = vld [vmem:[%s316 + $0x18] sm:$0xf]
        %v353 = vld [vmem:[%s316 + $0x1c] sm:$0xf]
        %v354 = vld [vmem:[%s316 + $0x20] sm:$0xf]
        %v355 = vld [vmem:[%s316 + $0x24] sm:$0xf]
        %v356 = vld [vmem:[%s316 + $0x28] sm:$0xf]
        %v357 = vld [vmem:[%s316 + $0x2c] sm:$0xf]
        %v358 = vld [vmem:[%s316 + $0x30] sm:$0xf]
        %v359 = vld [vmem:[%s316 + $0x34] sm:$0xf]
        %v360 = vld [vmem:[%s316 + $0x38] sm:$0xf]
        %v361 = vld [vmem:[%s316 + $0x3c] sm:$0xf]
        %v362 = vld [vmem:[%s3] sm:$0xff]
        %v363 = vld [vmem:[%s3 + $0x8] sm:$0xf]
        %v364 = vld [vmem:[%s3 + $0xc] sm:$0xff]
        %v365 = vld [vmem:[%s3 + $0x14] sm:$0xf]
        %v366 = vld [vmem:[%s3 + $0x18] sm:$0xff]
        %v367 = vld [vmem:[%s3 + $0x20] sm:$0xf]
        %v368 = vld [vmem:[%s3 + $0x24] sm:$0xff]
        %v369 = vld [vmem:[%s3 + $0x2c] sm:$0xf]
        %v370 = vld [vmem:[%s3 + $0x30] sm:$0xff]
        %v371 = vld [vmem:[%s3 + $0x38] sm:$0xf]
        %v372 = vld [vmem:[%s3 + $0x3c] sm:$0xff]
        %v373 = vld [vmem:[%s3 + $0x44] sm:$0xf]
        %v374 = vld [vmem:[%s3 + $0x48] sm:$0xff]
        %v375 = vld [vmem:[%s3 + $0x50] sm:$0xf]
        %v376 = vld [vmem:[%s3 + $0x54] sm:$0xff]
        %v377 = vld [vmem:[%s3 + $0x5c] sm:$0xf]
        %v378 = vld [vmem:[%s3 + $0x60] sm:$0xff]
        %v379 = vld [vmem:[%s3 + $0x68] sm:$0xf]
        %v380 = vld [vmem:[%s3 + $0x6c] sm:$0xff]
        %v381 = vld [vmem:[%s3 + $0x74] sm:$0xf]
        %v382 = vld [vmem:[%s3 + $0x78] sm:$0xff]
        %v383 = vld [vmem:[%s3 + $0x80] sm:$0xf]
        %v384 = vld [vmem:[%s3 + $0x84] sm:$0xff]
        %v385 = vld [vmem:[%s3 + $0x8c] sm:$0xf]
        %v386 = vld [vmem:[%s3 + $0x90] sm:$0xff]
        %v387 = vld [vmem:[%s3 + $0x98] sm:$0xf]
        %v388 = vld [vmem:[%s3 + $0x9c] sm:$0xff]
        %v389 = vld [vmem:[%s3 + $0xa4] sm:$0xf]
        %v390 = vld [vmem:[%s3 + $0xa8] sm:$0xff]
        %v391 = vld [vmem:[%s3 + $0xb0] sm:$0xf]
        %v392 = vld [vmem:[%s3 + $0xb4] sm:$0xff]
        %v393 = vld [vmem:[%s3 + $0xbc] sm:$0xf]
        %v394 = vld [vmem:[%s5] sm:$0x7]
        %v396 = vlaneseq
        %v397 = vshrl.u32 %v396, 7
        %v398 = vsub.s32 0, %v397
        %v399 = vrot.slane %v394, %v398
        %v400 = vlaneseq
        %v401 = vshrl.u32 %v400, 7
        %v402 = vsub.s32 1, %v401
        %v403 = vrot.slane %v394, %v402
        %v404 = vlaneseq
        %v405 = vshrl.u32 %v404, 7
        %v406 = vsub.s32 2, %v405
        %v407 = vrot.slane %v394, %v406
        %v427 = vunpack.c.l.b16 %v346
        %v428 = vunpack.c.l.b16 %v347
        %v429 = vunpack.c.l.b16 %v348
        %v430 = vunpack.c.l.b16 %v349
        %v431 = vunpack.c.l.b16 %v350
        %v432 = vunpack.c.l.b16 %v351
        %v433 = vunpack.c.l.b16 %v352
        %v434 = vunpack.c.l.b16 %v353
        %v435 = vunpack.c.l.b16 %v354
        %v436 = vunpack.c.l.b16 %v355
        %v437 = vunpack.c.l.b16 %v356
        %v438 = vunpack.c.l.b16 %v357
        %v439 = vunpack.c.l.b16 %v358
        %v440 = vunpack.c.l.b16 %v359
        %v441 = vunpack.c.l.b16 %v360
        %v442 = vunpack.c.l.b16 %v361
        %v443 = vpack.c.b16 %v428, %v427
        %v444 = vpack.c.b16 %v430, %v429
        %v445 = vpack.c.b16 %v432, %v431
        %v446 = vpack.c.b16 %v434, %v433
        %v447 = vpack.c.b16 %v436, %v435
        %v448 = vpack.c.b16 %v438, %v437
        %v449 = vpack.c.b16 %v440, %v439
        %v450 = vpack.c.b16 %v442, %v441
        %v491 = vunpack.c.l.b16 %v362
        %v492 = vunpack.c.h.b16 %v362
        %v493 = vunpack.c.l.b16 %v363
        %v494 = vunpack.c.l.b16 %v364
        %v495 = vunpack.c.h.b16 %v364
        %v496 = vunpack.c.l.b16 %v365
        %v497 = vunpack.c.l.b16 %v366
        %v498 = vunpack.c.h.b16 %v366
        %v499 = vunpack.c.l.b16 %v367
        %v500 = vunpack.c.l.b16 %v368
        %v501 = vunpack.c.h.b16 %v368
        %v502 = vunpack.c.l.b16 %v369
        %v503 = vunpack.c.l.b16 %v370
        %v504 = vunpack.c.h.b16 %v370
        %v505 = vunpack.c.l.b16 %v371
        %v506 = vunpack.c.l.b16 %v372
        %v507 = vunpack.c.h.b16 %v372
        %v508 = vunpack.c.l.b16 %v373
        %v509 = vunpack.c.l.b16 %v374
        %v510 = vunpack.c.h.b16 %v374
        %v511 = vunpack.c.l.b16 %v375
        %v512 = vunpack.c.l.b16 %v376
        %v513 = vunpack.c.h.b16 %v376
        %v514 = vunpack.c.l.b16 %v377
        %v515 = vunpack.c.l.b16 %v378
        %v516 = vunpack.c.h.b16 %v378
        %v517 = vunpack.c.l.b16 %v379
        %v518 = vunpack.c.l.b16 %v380
        %v519 = vunpack.c.h.b16 %v380
        %v520 = vunpack.c.l.b16 %v381
        %v521 = vunpack.c.l.b16 %v382
        %v522 = vunpack.c.h.b16 %v382
        %v523 = vunpack.c.l.b16 %v383
        %v524 = vunpack.c.l.b16 %v384
        %v525 = vunpack.c.h.b16 %v384
        %v526 = vunpack.c.l.b16 %v385
        %v527 = vunpack.c.l.b16 %v386
        %v528 = vunpack.c.h.b16 %v386
        %v529 = vunpack.c.l.b16 %v387
        %v530 = vunpack.c.l.b16 %v388
        %v531 = vunpack.c.h.b16 %v388
        %v532 = vunpack.c.l.b16 %v389
        %v533 = vunpack.c.l.b16 %v390
        %v534 = vunpack.c.h.b16 %v390
        %v535 = vunpack.c.l.b16 %v391
        %v536 = vunpack.c.l.b16 %v392
        %v537 = vunpack.c.h.b16 %v392
        %v538 = vunpack.c.l.b16 %v393
        %v539 = vpack.c.b16 %v494, %v491
        %v540 = vpack.c.b16 %v495, %v492
        %v541 = vpack.c.b16 %v496, %v493
        %v542 = vpack.c.b16 %v500, %v497
        %v543 = vpack.c.b16 %v501, %v498
        %v544 = vpack.c.b16 %v502, %v499
        %v545 = vpack.c.b16 %v506, %v503
        %v546 = vpack.c.b16 %v507, %v504
        %v547 = vpack.c.b16 %v508, %v505
        %v548 = vpack.c.b16 %v512, %v509
        %v549 = vpack.c.b16 %v513, %v510
        %v550 = vpack.c.b16 %v514, %v511
        %v551 = vpack.c.b16 %v518, %v515
        %v552 = vpack.c.b16 %v519, %v516
        %v553 = vpack.c.b16 %v520, %v517
        %v554 = vpack.c.b16 %v524, %v521
        %v555 = vpack.c.b16 %v525, %v522
        %v556 = vpack.c.b16 %v526, %v523
        %v557 = vpack.c.b16 %v530, %v527
        %v558 = vpack.c.b16 %v531, %v528
        %v559 = vpack.c.b16 %v532, %v529
        %v560 = vpack.c.b16 %v536, %v533
        %v561 = vpack.c.b16 %v537, %v534
        %v562 = vpack.c.b16 %v538, %v535
        %587 = vmatprep.subr.bf16.mxu0 %v561
        %588 = vmatpush1.bf16.msra.mxu0 %v560
        %589 = vmatprep.subr.bf16.mxu0 %v558
        %590 = vmatpush1.bf16.msra.mxu0 %v557
        %591 = vmatprep.subr.bf16.mxu0 %v555
        %592 = vmatpush1.bf16.msra.mxu0 %v554
        %593 = vmatprep.subr.bf16.mxu0 %v552
        %594 = vmatpush1.bf16.msra.mxu0 %v551
        %595 = vmatprep.subr.bf16.mxu0 %v549
        %596 = vmatpush1.bf16.msra.mxu0 %v548
        %597 = vmatprep.subr.bf16.mxu0 %v546
        %598 = vmatpush1.bf16.msra.mxu0 %v545
        %599 = vmatprep.subr.bf16.mxu0 %v543
        %600 = vmatpush1.bf16.msra.mxu0 %v542
        %601 = vmatprep.subr.bf16.mxu0 %v540
        %602 = vmatpush1.bf16.msra.mxu0 %v539
        %603 = vmatprep.subr.bf16.mxu0 0
        %604 = vmatpush2.bf16.msra.mxu0 0
        %605 = vmatprep.subr.bf16.mxu0 0
        %606 = vmatpush2.bf16.msra.mxu0 0
        %607 = vmatprep.subr.bf16.mxu0 0
        %608 = vmatpush2.bf16.msra.mxu0 0
        %609 = vmatprep.subr.bf16.mxu0 0
        %610 = vmatpush2.bf16.msra.mxu0 0
        %611 = vmatprep.subr.bf16.mxu0 0
        %612 = vmatpush2.bf16.msra.mxu0 0
        %613 = vmatprep.subr.bf16.mxu0 0
        %614 = vmatpush2.bf16.msra.mxu0 0
        %615 = vmatprep.subr.bf16.mxu0 0
        %616 = vmatpush2.bf16.msra.mxu0 0
        %617 = vmatprep.subr.bf16.mxu0 0
        %618 = vmatpush2.bf16.msra.mxu0 0
        %619 = vmatprep.mubr.bf16.mxu0 0
        %620 = vmatmul.mubr.bf16.gmra.mxu0 %v443
        %v621 = vpop.f32.mrf.mxu0
        %v622 = vadd.f32 %v399, %v621
        %v623 = vpop.f32.mrf.mxu0
        %v624 = vadd.f32 %v403, %v623
        %v625 = vpop.f32.mrf.mxu0
        %v626 = vadd.f32 %v399, %v625
        %v627 = vpop.f32.mrf.mxu0
        %v628 = vadd.f32 %v403, %v627
        %629 = vmatprep.mubr.bf16.mxu0 0
        %630 = vmatmul.mubr.bf16.gmra.mxu0 %v444
        %v631 = vpop.f32.mrf.mxu0
        %v632 = vadd.f32 %v399, %v631
        %v633 = vpop.f32.mrf.mxu0
        %v634 = vadd.f32 %v403, %v633
        %v635 = vpop.f32.mrf.mxu0
        %v636 = vadd.f32 %v399, %v635
        %v637 = vpop.f32.mrf.mxu0
        %v638 = vadd.f32 %v403, %v637
        %639 = vmatprep.mubr.bf16.mxu0 0
        %640 = vmatmul.mubr.bf16.gmra.mxu0 %v445
        %v641 = vpop.f32.mrf.mxu0
        %v642 = vadd.f32 %v399, %v641
        %v643 = vpop.f32.mrf.mxu0
        %v644 = vadd.f32 %v403, %v643
        %v645 = vpop.f32.mrf.mxu0
        %v646 = vadd.f32 %v399, %v645
        %v647 = vpop.f32.mrf.mxu0
        %v648 = vadd.f32 %v403, %v647
        %649 = vmatprep.mubr.bf16.mxu0 0
        %650 = vmatmul.mubr.bf16.gmra.mxu0 %v446
        %v651 = vpop.f32.mrf.mxu0
        %v652 = vadd.f32 %v399, %v651
        %v653 = vpop.f32.mrf.mxu0
        %v654 = vadd.f32 %v403, %v653
        %v655 = vpop.f32.mrf.mxu0
        %v656 = vadd.f32 %v399, %v655
        %v657 = vpop.f32.mrf.mxu0
        %v658 = vadd.f32 %v403, %v657
        %659 = vmatprep.mubr.bf16.mxu0 0
        %660 = vmatmul.mubr.bf16.gmra.mxu0 %v447
        %v661 = vpop.f32.mrf.mxu0
        %v662 = vadd.f32 %v399, %v661
        %v663 = vpop.f32.mrf.mxu0
        %v664 = vadd.f32 %v403, %v663
        %v665 = vpop.f32.mrf.mxu0
        %v666 = vadd.f32 %v399, %v665
        %v667 = vpop.f32.mrf.mxu0
        %v668 = vadd.f32 %v403, %v667
        %669 = vmatprep.mubr.bf16.mxu0 0
        %670 = vmatmul.mubr.bf16.gmra.mxu0 %v448
        %v671 = vpop.f32.mrf.mxu0
        %v672 = vadd.f32 %v399, %v671
        %v673 = vpop.f32.mrf.mxu0
        %v674 = vadd.f32 %v403, %v673
        %v675 = vpop.f32.mrf.mxu0
        %v676 = vadd.f32 %v399, %v675
        %v677 = vpop.f32.mrf.mxu0
        %v678 = vadd.f32 %v403, %v677
        %679 = vmatprep.mubr.bf16.mxu0 0
        %680 = vmatmul.mubr.bf16.gmra.mxu0 %v449
        %v681 = vpop.f32.mrf.mxu0
        %v682 = vadd.f32 %v399, %v681
        %v683 = vpop.f32.mrf.mxu0
        %v684 = vadd.f32 %v403, %v683
        %v685 = vpop.f32.mrf.mxu0
        %v686 = vadd.f32 %v399, %v685
        %v687 = vpop.f32.mrf.mxu0
        %v688 = vadd.f32 %v403, %v687
        %689 = vmatprep.mubr.bf16.mxu0 0
        %690 = vmatmul.mubr.bf16.gmra.mxu0 %v450
        %v691 = vpop.f32.mrf.mxu0
        %v692 = vadd.f32 %v399, %v691
        %v693 = vpop.f32.mrf.mxu0
        %v694 = vadd.f32 %v403, %v693
        %v695 = vpop.f32.mrf.mxu0
        %v696 = vadd.f32 %v399, %v695
        %v697 = vpop.f32.mrf.mxu0
        %v698 = vadd.f32 %v403, %v697
        %699 = vdwg.mxu0
        %700 = vmatprep.subr.bf16.mxu0 0
        %701 = vmatpush1.bf16.msra.mxu0 %v562
        %702 = vmatprep.subr.bf16.mxu0 0
        %703 = vmatpush1.bf16.msra.mxu0 %v559
        %704 = vmatprep.subr.bf16.mxu0 0
        %705 = vmatpush1.bf16.msra.mxu0 %v556
        %706 = vmatprep.subr.bf16.mxu0 0
        %707 = vmatpush1.bf16.msra.mxu0 %v553
        %708 = vmatprep.subr.bf16.mxu0 0
        %709 = vmatpush1.bf16.msra.mxu0 %v550
        %710 = vmatprep.subr.bf16.mxu0 0
        %711 = vmatpush1.bf16.msra.mxu0 %v547
        %712 = vmatprep.subr.bf16.mxu0 0
        %713 = vmatpush1.bf16.msra.mxu0 %v544
        %714 = vmatprep.subr.bf16.mxu0 0
        %715 = vmatpush1.bf16.msra.mxu0 %v541
        %716 = vmatprep.subr.bf16.mxu0 0
        %717 = vmatpush2.bf16.msra.mxu0 0
        %718 = vmatprep.subr.bf16.mxu0 0
        %719 = vmatpush2.bf16.msra.mxu0 0
        %720 = vmatprep.subr.bf16.mxu0 0
        %721 = vmatpush2.bf16.msra.mxu0 0
        %722 = vmatprep.subr.bf16.mxu0 0
        %723 = vmatpush2.bf16.msra.mxu0 0
        %724 = vmatprep.subr.bf16.mxu0 0
        %725 = vmatpush2.bf16.msra.mxu0 0
        %726 = vmatprep.subr.bf16.mxu0 0
        %727 = vmatpush2.bf16.msra.mxu0 0
        %728 = vmatprep.subr.bf16.mxu0 0
        %729 = vmatpush2.bf16.msra.mxu0 0
        %730 = vmatprep.subr.bf16.mxu0 0
        %731 = vmatpush2.bf16.msra.mxu0 0
        %732 = vmatprep.mubr.bf16.mxu0 0
        %733 = vmatmul.mubr.bf16.gmra.mxu0 %v443
        %v734 = vpop.f32.mrf.mxu0
        %v735 = vadd.f32 %v407, %v734
        %v736 = vpop.f32.mrf.mxu0
        %v737 = vpop.f32.mrf.mxu0
        %v738 = vadd.f32 %v407, %v737
        %v739 = vpop.f32.mrf.mxu0
        %740 = vmatprep.mubr.bf16.mxu0 0
        %741 = vmatmul.mubr.bf16.gmra.mxu0 %v444
        %v742 = vpop.f32.mrf.mxu0
        %v743 = vadd.f32 %v407, %v742
        %v744 = vpop.f32.mrf.mxu0
        %v745 = vpop.f32.mrf.mxu0
        %v746 = vadd.f32 %v407, %v745
        %v747 = vpop.f32.mrf.mxu0
        %748 = vmatprep.mubr.bf16.mxu0 0
        %749 = vmatmul.mubr.bf16.gmra.mxu0 %v445
        %v750 = vpop.f32.mrf.mxu0
        %v751 = vadd.f32 %v407, %v750
        %v752 = vpop.f32.mrf.mxu0
        %v753 = vpop.f32.mrf.mxu0
        %v754 = vadd.f32 %v407, %v753
        %v755 = vpop.f32.mrf.mxu0
        %756 = vmatprep.mubr.bf16.mxu0 0
        %757 = vmatmul.mubr.bf16.gmra.mxu0 %v446
        %v758 = vpop.f32.mrf.mxu0
        %v759 = vadd.f32 %v407, %v758
        %v760 = vpop.f32.mrf.mxu0
        %v761 = vpop.f32.mrf.mxu0
        %v762 = vadd.f32 %v407, %v761
        %v763 = vpop.f32.mrf.mxu0
        %764 = vmatprep.mubr.bf16.mxu0 0
        %765 = vmatmul.mubr.bf16.gmra.mxu0 %v447
        %v766 = vpop.f32.mrf.mxu0
        %v767 = vadd.f32 %v407, %v766
        %v768 = vpop.f32.mrf.mxu0
        %v769 = vpop.f32.mrf.mxu0
        %v770 = vadd.f32 %v407, %v769
        %v771 = vpop.f32.mrf.mxu0
        %772 = vmatprep.mubr.bf16.mxu0 0
        %773 = vmatmul.mubr.bf16.gmra.mxu0 %v448
        %v774 = vpop.f32.mrf.mxu0
        %v775 = vadd.f32 %v407, %v774
        %v776 = vpop.f32.mrf.mxu0
        %v777 = vpop.f32.mrf.mxu0
        %v778 = vadd.f32 %v407, %v777
        %v779 = vpop.f32.mrf.mxu0
        %780 = vmatprep.mubr.bf16.mxu0 0
        %781 = vmatmul.mubr.bf16.gmra.mxu0 %v449
        %v782 = vpop.f32.mrf.mxu0
        %v783 = vadd.f32 %v407, %v782
        %v784 = vpop.f32.mrf.mxu0
        %v785 = vpop.f32.mrf.mxu0
        %v786 = vadd.f32 %v407, %v785
        %v787 = vpop.f32.mrf.mxu0
        %788 = vmatprep.mubr.bf16.mxu0 0
        %789 = vmatmul.mubr.bf16.gmra.mxu0 %v450
        %v790 = vpop.f32.mrf.mxu0
        %v791 = vadd.f32 %v407, %v790
        %v792 = vpop.f32.mrf.mxu0
        %v793 = vpop.f32.mrf.mxu0
        %v794 = vadd.f32 %v407, %v793
        %v795 = vpop.f32.mrf.mxu0
        %796 = vdwg.mxu0
        %v797 = vpack.c.bf16 %v626, %v622
        %v798 = vpack.c.bf16 %v628, %v624
        %v799 = vpack.c.bf16 %v738, %v735
        %v800 = vpack.c.bf16 %v636, %v632
        %v801 = vpack.c.bf16 %v638, %v634
        %v802 = vpack.c.bf16 %v746, %v743
        %v803 = vpack.c.bf16 %v646, %v642
        %v804 = vpack.c.bf16 %v648, %v644
        %v805 = vpack.c.bf16 %v754, %v751
        %v806 = vpack.c.bf16 %v656, %v652
        %v807 = vpack.c.bf16 %v658, %v654
        %v808 = vpack.c.bf16 %v762, %v759
        %v809 = vpack.c.bf16 %v666, %v662
        %v810 = vpack.c.bf16 %v668, %v664
        %v811 = vpack.c.bf16 %v770, %v767
        %v812 = vpack.c.bf16 %v676, %v672
        %v813 = vpack.c.bf16 %v678, %v674
        %v814 = vpack.c.bf16 %v778, %v775
        %v815 = vpack.c.bf16 %v686, %v682
        %v816 = vpack.c.bf16 %v688, %v684
        %v817 = vpack.c.bf16 %v786, %v783
        %v818 = vpack.c.bf16 %v696, %v692
        %v819 = vpack.c.bf16 %v698, %v694
        %v820 = vpack.c.bf16 %v794, %v791
        %v845 = vunpack.c.l.b16 %v797
        %v846 = vunpack.c.l.b16 %v798
        %v847 = vunpack.c.l.b16 %v799
        %v848 = vunpack.c.h.b16 %v797
        %v849 = vunpack.c.h.b16 %v798
        %v850 = vunpack.c.h.b16 %v799
        %v851 = vunpack.c.l.b16 %v800
        %v852 = vunpack.c.l.b16 %v801
        %v853 = vunpack.c.l.b16 %v802
        %v854 = vunpack.c.h.b16 %v800
        %v855 = vunpack.c.h.b16 %v801
        %v856 = vunpack.c.h.b16 %v802
        %v857 = vunpack.c.l.b16 %v803
        %v858 = vunpack.c.l.b16 %v804
        %v859 = vunpack.c.l.b16 %v805
        %v860 = vunpack.c.h.b16 %v803
        %v861 = vunpack.c.h.b16 %v804
        %v862 = vunpack.c.h.b16 %v805
        %v863 = vunpack.c.l.b16 %v806
        %v864 = vunpack.c.l.b16 %v807
        %v865 = vunpack.c.l.b16 %v808
        %v866 = vunpack.c.h.b16 %v806
        %v867 = vunpack.c.h.b16 %v807
        %v868 = vunpack.c.h.b16 %v808
        %v869 = vunpack.c.l.b16 %v809
        %v870 = vunpack.c.l.b16 %v810
        %v871 = vunpack.c.l.b16 %v811
        %v872 = vunpack.c.h.b16 %v809
        %v873 = vunpack.c.h.b16 %v810
        %v874 = vunpack.c.h.b16 %v811
        %v875 = vunpack.c.l.b16 %v812
        %v876 = vunpack.c.l.b16 %v813
        %v877 = vunpack.c.l.b16 %v814
        %v878 = vunpack.c.h.b16 %v812
        %v879 = vunpack.c.h.b16 %v813
        %v880 = vunpack.c.h.b16 %v814
        %v881 = vunpack.c.l.b16 %v815
        %v882 = vunpack.c.l.b16 %v816
        %v883 = vunpack.c.l.b16 %v817
        %v884 = vunpack.c.h.b16 %v815
        %v885 = vunpack.c.h.b16 %v816
        %v886 = vunpack.c.h.b16 %v817
        %v887 = vunpack.c.l.b16 %v818
        %v888 = vunpack.c.l.b16 %v819
        %v889 = vunpack.c.l.b16 %v820
        %v890 = vunpack.c.h.b16 %v818
        %v891 = vunpack.c.h.b16 %v819
        %v892 = vunpack.c.h.b16 %v820
        %v893 = vpack.c.b16 %v846, %v845
        %v894 = vpack.c.b16 %v847, %v847
        %v895 = vpack.c.b16 %v849, %v848
        %v896 = vpack.c.b16 %v850, %v850
        %v897 = vpack.c.b16 %v852, %v851
        %v898 = vpack.c.b16 %v853, %v853
        %v899 = vpack.c.b16 %v855, %v854
        %v900 = vpack.c.b16 %v856, %v856
        %v901 = vpack.c.b16 %v858, %v857
        %v902 = vpack.c.b16 %v859, %v859
        %v903 = vpack.c.b16 %v861, %v860
        %v904 = vpack.c.b16 %v862, %v862
        %v905 = vpack.c.b16 %v864, %v863
        %v906 = vpack.c.b16 %v865, %v865
        %v907 = vpack.c.b16 %v867, %v866
        %v908 = vpack.c.b16 %v868, %v868
        %v909 = vpack.c.b16 %v870, %v869
        %v910 = vpack.c.b16 %v871, %v871
        %v911 = vpack.c.b16 %v873, %v872
        %v912 = vpack.c.b16 %v874, %v874
        %v913 = vpack.c.b16 %v876, %v875
        %v914 = vpack.c.b16 %v877, %v877
        %v915 = vpack.c.b16 %v879, %v878
        %v916 = vpack.c.b16 %v880, %v880
        %v917 = vpack.c.b16 %v882, %v881
        %v918 = vpack.c.b16 %v883, %v883
        %v919 = vpack.c.b16 %v885, %v884
        %v920 = vpack.c.b16 %v886, %v886
        %v921 = vpack.c.b16 %v888, %v887
        %v922 = vpack.c.b16 %v889, %v889
        %v923 = vpack.c.b16 %v891, %v890
        %v924 = vpack.c.b16 %v892, %v892
        %957 = vst [vmem:[#allocation2] sm:$0xff] %v893
        %958 = vst [vmem:[#allocation2 + $0x8] sm:$0xf] %v894
        %959 = vst [vmem:[#allocation2 + $0xc] sm:$0xff] %v895
        %960 = vst [vmem:[#allocation2 + $0x14] sm:$0xf] %v896
        %961 = vst [vmem:[#allocation2 + $0x18] sm:$0xff] %v897
        %962 = vst [vmem:[#allocation2 + $0x20] sm:$0xf] %v898
        %963 = vst [vmem:[#allocation2 + $0x24] sm:$0xff] %v899
        %964 = vst [vmem:[#allocation2 + $0x2c] sm:$0xf] %v900
        %965 = vst [vmem:[#allocation2 + $0x30] sm:$0xff] %v901
        %966 = vst [vmem:[#allocation2 + $0x38] sm:$0xf] %v902
        %967 = vst [vmem:[#allocation2 + $0x3c] sm:$0xff] %v903
        %968 = vst [vmem:[#allocation2 + $0x44] sm:$0xf] %v904
        %969 = vst [vmem:[#allocation2 + $0x48] sm:$0xff] %v905
        %970 = vst [vmem:[#allocation2 + $0x50] sm:$0xf] %v906
        %971 = vst [vmem:[#allocation2 + $0x54] sm:$0xff] %v907
        %972 = vst [vmem:[#allocation2 + $0x5c] sm:$0xf] %v908
        %973 = vst [vmem:[#allocation2 + $0x60] sm:$0xff] %v909
        %974 = vst [vmem:[#allocation2 + $0x68] sm:$0xf] %v910
        %975 = vst [vmem:[#allocation2 + $0x6c] sm:$0xff] %v911
        %976 = vst [vmem:[#allocation2 + $0x74] sm:$0xf] %v912
        %977 = vst [vmem:[#allocation2 + $0x78] sm:$0xff] %v913
        %978 = vst [vmem:[#allocation2 + $0x80] sm:$0xf] %v914
        %979 = vst [vmem:[#allocation2 + $0x84] sm:$0xff] %v915
        %980 = vst [vmem:[#allocation2 + $0x8c] sm:$0xf] %v916
        %981 = vst [vmem:[#allocation2 + $0x90] sm:$0xff] %v917
        %982 = vst [vmem:[#allocation2 + $0x98] sm:$0xf] %v918
        %983 = vst [vmem:[#allocation2 + $0x9c] sm:$0xff] %v919
        %984 = vst [vmem:[#allocation2 + $0xa4] sm:$0xf] %v920
        %985 = vst [vmem:[#allocation2 + $0xa8] sm:$0xff] %v921
        %986 = vst [vmem:[#allocation2 + $0xb0] sm:$0xf] %v922
        %987 = vst [vmem:[#allocation2 + $0xb4] sm:$0xff] %v923
        %988 = vst [vmem:[#allocation2 + $0xbc] sm:$0xf] %v924
        %v989 = vld [vmem:[%s324] sm:$0xff]
        %v990 = vld [vmem:[%s324 + $0x8] sm:$0xff]
        %v991 = vld [vmem:[%s6] sm:$0x1]
        %v992 = vpack.c.bf16 %v991, %v991
        %v993 = vld [vmem:[#allocation3] sm:$0xff]
        %v994 = vld [vmem:[#allocation3 + $0x8] sm:$0xff]
        %s995 = smul.u32 0, 3
        %s996 = smul.addr %s995, 4
        %s997 = scalar_lea.vmem [#allocation2], %s996
        %v998 = vld [vmem:[%s997] sm:$0xff]
        %v999 = vld [vmem:[%s997 + $0x8] sm:$0xf]
        %v1000 = vld [vmem:[%s997 + $0xc] sm:$0xff]
        %v1001 = vld [vmem:[%s997 + $0x14] sm:$0xf]
        %v1002 = vpack.c.bf16 %v994, %v993
        %v1003 = vld [vmem:[%s4] sm:$0xff]
        %v1004 = vld [vmem:[%s4 + $0x8] sm:$0xf]
        %v1005 = vld [vmem:[%s4 + $0xc] sm:$0xff]
        %v1006 = vld [vmem:[%s4 + $0x14] sm:$0xf]
        %v1007 = vld [vmem:[%s4 + $0x18] sm:$0xff]
        %v1008 = vld [vmem:[%s4 + $0x20] sm:$0xf]
        %v1009 = vld [vmem:[%s4 + $0x24] sm:$0xff]
        %v1010 = vld [vmem:[%s4 + $0x2c] sm:$0xf]
        %v1011 = vld [vmem:[%s4 + $0x30] sm:$0xff]
        %v1012 = vld [vmem:[%s4 + $0x38] sm:$0xf]
        %v1013 = vld [vmem:[%s4 + $0x3c] sm:$0xff]
        %v1014 = vld [vmem:[%s4 + $0x44] sm:$0xf]
        %v1015 = vld [vmem:[%s4 + $0x48] sm:$0xff]
        %v1016 = vld [vmem:[%s4 + $0x50] sm:$0xf]
        %v1017 = vld [vmem:[%s4 + $0x54] sm:$0xff]
        %v1018 = vld [vmem:[%s4 + $0x5c] sm:$0xf]
        %v1019 = vld [vmem:[%s4 + $0x60] sm:$0xff]
        %v1020 = vld [vmem:[%s4 + $0x68] sm:$0xf]
        %v1021 = vld [vmem:[%s4 + $0x6c] sm:$0xff]
        %v1022 = vld [vmem:[%s4 + $0x74] sm:$0xf]
        %v1023 = vld [vmem:[%s4 + $0x78] sm:$0xff]
        %v1024 = vld [vmem:[%s4 + $0x80] sm:$0xf]
        %v1025 = vld [vmem:[%s4 + $0x84] sm:$0xff]
        %v1026 = vld [vmem:[%s4 + $0x8c] sm:$0xf]
        %v1027 = vld [vmem:[%s4 + $0x90] sm:$0xff]
        %v1028 = vld [vmem:[%s4 + $0x98] sm:$0xf]
        %v1029 = vld [vmem:[%s4 + $0x9c] sm:$0xff]
        %v1030 = vld [vmem:[%s4 + $0xa4] sm:$0xf]
        %v1031 = vld [vmem:[%s4 + $0xa8] sm:$0xff]
        %v1032 = vld [vmem:[%s4 + $0xb0] sm:$0xf]
        %v1033 = vld [vmem:[%s4 + $0xb4] sm:$0xff]
        %v1034 = vld [vmem:[%s4 + $0xbc] sm:$0xf]
        %v1067 = vunpack.c.l.b16 %v1003
        %v1068 = vunpack.c.h.b16 %v1003
        %v1069 = vunpack.c.l.b16 %v1004
        %v1070 = vunpack.c.l.b16 %v1005
        %v1071 = vunpack.c.h.b16 %v1005
        %v1072 = vunpack.c.l.b16 %v1006
        %v1073 = vunpack.c.l.b16 %v1007
        %v1074 = vunpack.c.h.b16 %v1007
        %v1075 = vunpack.c.l.b16 %v1008
        %v1076 = vunpack.c.l.b16 %v1009
        %v1077 = vunpack.c.h.b16 %v1009
        %v1078 = vunpack.c.l.b16 %v1010
        %v1079 = vunpack.c.l.b16 %v1011
        %v1080 = vunpack.c.h.b16 %v1011
        %v1081 = vunpack.c.l.b16 %v1012
        %v1082 = vunpack.c.l.b16 %v1013
        %v1083 = vunpack.c.h.b16 %v1013
        %v1084 = vunpack.c.l.b16 %v1014
        %v1085 = vunpack.c.l.b16 %v1015
        %v1086 = vunpack.c.h.b16 %v1015
        %v1087 = vunpack.c.l.b16 %v1016
        %v1088 = vunpack.c.l.b16 %v1017
        %v1089 = vunpack.c.h.b16 %v1017
        %v1090 = vunpack.c.l.b16 %v1018
        %v1091 = vunpack.c.l.b16 %v1019
        %v1092 = vunpack.c.h.b16 %v1019
        %v1093 = vunpack.c.l.b16 %v1020
        %v1094 = vunpack.c.l.b16 %v1021
        %v1095 = vunpack.c.h.b16 %v1021
        %v1096 = vunpack.c.l.b16 %v1022
        %v1097 = vunpack.c.l.b16 %v1023
        %v1098 = vunpack.c.h.b16 %v1023
        %v1099 = vunpack.c.l.b16 %v1024
        %v1100 = vunpack.c.l.b16 %v1025
        %v1101 = vunpack.c.h.b16 %v1025
        %v1102 = vunpack.c.l.b16 %v1026
        %v1103 = vunpack.c.l.b16 %v1027
        %v1104 = vunpack.c.h.b16 %v1027
        %v1105 = vunpack.c.l.b16 %v1028
        %v1106 = vunpack.c.l.b16 %v1029
        %v1107 = vunpack.c.h.b16 %v1029
        %v1108 = vunpack.c.l.b16 %v1030
        %v1109 = vunpack.c.l.b16 %v1031
        %v1110 = vunpack.c.h.b16 %v1031
        %v1111 = vunpack.c.l.b16 %v1032
        %v1112 = vunpack.c.l.b16 %v1033
        %v1113 = vunpack.c.h.b16 %v1033
        %v1114 = vunpack.c.l.b16 %v1034
        %v1115 = vpack.c.b16 %v1070, %v1067
        %v1116 = vpack.c.b16 %v1071, %v1068
        %v1117 = vpack.c.b16 %v1072, %v1069
        %v1118 = vpack.c.b16 %v1076, %v1073
        %v1119 = vpack.c.b16 %v1077, %v1074
        %v1120 = vpack.c.b16 %v1078, %v1075
        %v1121 = vpack.c.b16 %v1082, %v1079
        %v1122 = vpack.c.b16 %v1083, %v1080
        %v1123 = vpack.c.b16 %v1084, %v1081
        %v1124 = vpack.c.b16 %v1088, %v1085
        %v1125 = vpack.c.b16 %v1089, %v1086
        %v1126 = vpack.c.b16 %v1090, %v1087
        %v1127 = vpack.c.b16 %v1094, %v1091
        %v1128 = vpack.c.b16 %v1095, %v1092
        %v1129 = vpack.c.b16 %v1096, %v1093
        %v1130 = vpack.c.b16 %v1100, %v1097
        %v1131 = vpack.c.b16 %v1101, %v1098
        %v1132 = vpack.c.b16 %v1102, %v1099
        %v1133 = vpack.c.b16 %v1106, %v1103
        %v1134 = vpack.c.b16 %v1107, %v1104
        %v1135 = vpack.c.b16 %v1108, %v1105
        %v1136 = vpack.c.b16 %v1112, %v1109
        %v1137 = vpack.c.b16 %v1113, %v1110
        %v1138 = vpack.c.b16 %v1114, %v1111
        %1163 = vmatprep.subr.bf16.mxu0 %v1137
        %1164 = vmatpush1.bf16.msra.mxu0 %v1136
        %1165 = vmatprep.subr.bf16.mxu0 %v1134
        %1166 = vmatpush1.bf16.msra.mxu0 %v1133
        %1167 = vmatprep.subr.bf16.mxu0 %v1131
        %1168 = vmatpush1.bf16.msra.mxu0 %v1130
        %1169 = vmatprep.subr.bf16.mxu0 %v1128
        %1170 = vmatpush1.bf16.msra.mxu0 %v1127
        %1171 = vmatprep.subr.bf16.mxu0 %v1125
        %1172 = vmatpush1.bf16.msra.mxu0 %v1124
        %1173 = vmatprep.subr.bf16.mxu0 %v1122
        %1174 = vmatpush1.bf16.msra.mxu0 %v1121
        %1175 = vmatprep.subr.bf16.mxu0 %v1119
        %1176 = vmatpush1.bf16.msra.mxu0 %v1118
        %1177 = vmatprep.subr.bf16.mxu0 %v1116
        %1178 = vmatpush1.bf16.msra.mxu0 %v1115
        %1179 = vmatprep.subr.bf16.mxu0 0
        %1180 = vmatpush2.bf16.msra.mxu0 0
        %1181 = vmatprep.subr.bf16.mxu0 0
        %1182 = vmatpush2.bf16.msra.mxu0 0
        %1183 = vmatprep.subr.bf16.mxu0 0
        %1184 = vmatpush2.bf16.msra.mxu0 0
        %1185 = vmatprep.subr.bf16.mxu0 0
        %1186 = vmatpush2.bf16.msra.mxu0 0
        %1187 = vmatprep.subr.bf16.mxu0 0
        %1188 = vmatpush2.bf16.msra.mxu0 0
        %1189 = vmatprep.subr.bf16.mxu0 0
        %1190 = vmatpush2.bf16.msra.mxu0 0
        %1191 = vmatprep.subr.bf16.mxu0 0
        %1192 = vmatpush2.bf16.msra.mxu0 0
        %1193 = vmatprep.subr.bf16.mxu0 0
        %1194 = vmatpush2.bf16.msra.mxu0 0
        %1195 = vmatprep.mubr.bf16.mxu0 0
        %1196 = vmatmul.mubr.bf16.gmra.mxu0 %v1002
        %v1197 = vpop.f32.mrf.mxu0
        %v1198 = vadd.f32 0.0, %v1197
        %v1199 = vpop.f32.mrf.mxu0
        %v1200 = vadd.f32 0.0, %v1199
        %v1201 = vpop.f32.mrf.mxu0
        %v1202 = vadd.f32 0.0, %v1201
        %v1203 = vpop.f32.mrf.mxu0
        %v1204 = vadd.f32 0.0, %v1203
        %1205 = vdwg.mxu0
        %1206 = vmatprep.subr.bf16.mxu0 0
        %1207 = vmatpush1.bf16.msra.mxu0 %v1138
        %1208 = vmatprep.subr.bf16.mxu0 0
        %1209 = vmatpush1.bf16.msra.mxu0 %v1135
        %1210 = vmatprep.subr.bf16.mxu0 0
        %1211 = vmatpush1.bf16.msra.mxu0 %v1132
        %1212 = vmatprep.subr.bf16.mxu0 0
        %1213 = vmatpush1.bf16.msra.mxu0 %v1129
        %1214 = vmatprep.subr.bf16.mxu0 0
        %1215 = vmatpush1.bf16.msra.mxu0 %v1126
        %1216 = vmatprep.subr.bf16.mxu0 0
        %1217 = vmatpush1.bf16.msra.mxu0 %v1123
        %1218 = vmatprep.subr.bf16.mxu0 0
        %1219 = vmatpush1.bf16.msra.mxu0 %v1120
        %1220 = vmatprep.subr.bf16.mxu0 0
        %1221 = vmatpush1.bf16.msra.mxu0 %v1117
        %1222 = vmatprep.subr.bf16.mxu0 0
        %1223 = vmatpush2.bf16.msra.mxu0 0
        %1224 = vmatprep.subr.bf16.mxu0 0
        %1225 = vmatpush2.bf16.msra.mxu0 0
        %1226 = vmatprep.subr.bf16.mxu0 0
        %1227 = vmatpush2.bf16.msra.mxu0 0
        %1228 = vmatprep.subr.bf16.mxu0 0
        %1229 = vmatpush2.bf16.msra.mxu0 0
        %1230 = vmatprep.subr.bf16.mxu0 0
        %1231 = vmatpush2.bf16.msra.mxu0 0
        %1232 = vmatprep.subr.bf16.mxu0 0
        %1233 = vmatpush2.bf16.msra.mxu0 0
        %1234 = vmatprep.subr.bf16.mxu0 0
        %1235 = vmatpush2.bf16.msra.mxu0 0
        %1236 = vmatprep.subr.bf16.mxu0 0
        %1237 = vmatpush2.bf16.msra.mxu0 0
        %1238 = vmatprep.mubr.bf16.mxu0 0
        %1239 = vmatmul.mubr.bf16.gmra.mxu0 %v1002
        %v1240 = vpop.f32.mrf.mxu0
        %v1241 = vadd.f32 0.0, %v1240
        %v1242 = vpop.f32.mrf.mxu0
        %v1243 = vpop.f32.mrf.mxu0
        %v1244 = vadd.f32 0.0, %v1243
        %v1245 = vpop.f32.mrf.mxu0
        %1246 = vdwg.mxu0
        %v1247 = vpack.c.bf16 %v1202, %v1198
        %v1248 = vpack.c.bf16 %v1204, %v1200
        %v1249 = vpack.c.bf16 %v1244, %v1241
        %v1251 = vunpack.c.l.b16 %v1247
        %v1252 = vunpack.c.h.b16 %v1247
        %v1253 = vpack.c.b16 %v1251, %v1251
        %v1254 = vpack.c.b16 %v1252, %v1252
        %v1257 = vadd.bf16 %v998, %v1253
        %v1258 = vadd.bf16 %v1000, %v1254
        %v1259 = vxor.u32 %v1257, 2147516416
        %v1260 = vxor.u32 %v1258, 2147516416
        %v1262 = vmul.bf16 %v1259, 1069105081
        %v1263 = vpow.bf16.pop %v1262
        %v1265 = vmul.bf16 %v1260, 1069105081
        %v1266 = vpow.bf16.pop %v1265
        %v1267 = vadd.bf16 %v1263, 1065369472
        %v1268 = vadd.bf16 %v1266, 1065369472
        %v1269 = vrcp.bf16.pop %v1267
        %v1270 = vmul.bf16 1065369472, %v1269
        %v1271 = vrcp.bf16.pop %v1268
        %v1272 = vmul.bf16 1065369472, %v1271
        %v1275 = vrot.slane %v998, 4
        %v1276 = vrot.slane %v1000, 4
        %v1280 = vunpack.c.l.b16 %v1248
        %v1281 = vunpack.c.h.b16 %v1248
        %v1282 = vpack.c.b16 %v1280, %v1280
        %v1283 = vpack.c.b16 %v1281, %v1281
        %v1286 = vadd.bf16 %v1275, %v1282
        %v1287 = vadd.bf16 %v1276, %v1283
        %v1288 = vxor.u32 %v1286, 2147516416
        %v1289 = vxor.u32 %v1287, 2147516416
        %v1291 = vmul.bf16 %v1288, 1069105081
        %v1292 = vpow.bf16.pop %v1291
        %v1294 = vmul.bf16 %v1289, 1069105081
        %v1295 = vpow.bf16.pop %v1294
        %v1296 = vadd.bf16 %v1292, 1065369472
        %v1297 = vadd.bf16 %v1295, 1065369472
        %v1298 = vrcp.bf16.pop %v1296
        %v1299 = vmul.bf16 1065369472, %v1298
        %v1300 = vrcp.bf16.pop %v1297
        %v1301 = vmul.bf16 1065369472, %v1300
        %v1303 = vpack.i.b16 %v992, %v992
        %v1305 = vlaneseq
        %v1306 = vshrl.u32 %v1305, 7
        %v1307 = vsub.s32 0, %v1306
        %v1308 = vrot.slane %v1303, %v1307
        %v1309 = vadd.bf16 %v1249, %v1308
        %v1311 = vunpack.c.l.b16 %v1309
        %v1312 = vunpack.c.h.b16 %v1309
        %v1313 = vpack.c.b16 %v1311, %v1311
        %v1314 = vpack.c.b16 %v1312, %v1312
        %v1317 = vmul.bf16 %v1270, %v1313
        %v1318 = vmul.bf16 %v1272, %v1314
        %v1319 = vadd.bf16 %v999, %v1317
        %v1320 = vadd.bf16 %v1001, %v1318
        %v1321 = vtanh.bf16.pop %v1319
        %v1322 = vtanh.bf16.pop %v1320
        %v1323 = vsub.bf16 1065369472, %v1299
        %v1324 = vsub.bf16 1065369472, %v1301
        %v1325 = vmul.bf16 %v1323, %v1321
        %v1326 = vmul.bf16 %v1324, %v1322
        %v1328 = vunpack.c.l.b16 %v1002
        %v1329 = vunpack.c.h.b16 %v1002
        %v1330 = vpack.c.b16 %v1328, %v1328
        %v1331 = vpack.c.b16 %v1329, %v1329
        %v1334 = vmul.bf16 %v1299, %v1330
        %v1335 = vmul.bf16 %v1301, %v1331
        %v1336 = vadd.bf16 %v1325, %v1334
        %v1337 = vadd.bf16 %v1326, %v1335
        %v1338 = vunpack.c.l.bf16 %v1336
        %v1339 = vunpack.c.l.bf16 %v1337
        %v1340 = vstv %s340
        %vm1341 = vcmp.lt.s32.totalorder %v1340, %v989
        %vm1342 = vcmp.lt.s32.totalorder %v1340, %v990
        %v1343 = vsel %vm1341, 1, 0
        %v1344 = vsel %vm1342, 1, 0
        %1345 = vset.pattern.permute.xlu0 0
        %1346 = vperm.xlu0 %1345, %v1343
        %v1347 = vpop.permute.xlu0 %1346
        %1348 = vset.pattern.permute.xlu0 0
        %1349 = vperm.xlu0 %1348, %v1344
        %v1350 = vpop.permute.xlu0 %1349
        %vm1351 = vcmp.eq.s32.totalorder %v1347, 1
        %vm1352 = vcmp.eq.s32.totalorder %v1350, 1
        %v1353 = vsel %vm1351, %v1338, %v993
        %v1354 = vsel %vm1352, %v1339, %v994
        %s1355 = sadd.s32 %s340, 1
        %s1356 = smul.u32 2, 3
        %s1357 = smul.addr %s1356, 4
        %s1358 = scalar_lea.vmem [#allocation2], %s1357
        %v1359 = vld [vmem:[%s1358] sm:$0xff]
        %v1360 = vld [vmem:[%s1358 + $0x8] sm:$0xf]
        %v1361 = vld [vmem:[%s1358 + $0xc] sm:$0xff]
        %v1362 = vld [vmem:[%s1358 + $0x14] sm:$0xf]
        %v1363 = vpack.c.bf16 %v1354, %v1353
        %1364 = vmatprep.subr.bf16.mxu0 %v1137
        %1365 = vmatpush1.bf16.msra.mxu0 %v1136
        %1366 = vmatprep.subr.bf16.mxu0 %v1134
        %1367 = vmatpush1.bf16.msra.mxu0 %v1133
        %1368 = vmatprep.subr.bf16.mxu0 %v1131
        %1369 = vmatpush1.bf16.msra.mxu0 %v1130
        %1370 = vmatprep.subr.bf16.mxu0 %v1128
        %1371 = vmatpush1.bf16.msra.mxu0 %v1127
        %1372 = vmatprep.subr.bf16.mxu0 %v1125
        %1373 = vmatpush1.bf16.msra.mxu0 %v1124
        %1374 = vmatprep.subr.bf16.mxu0 %v1122
        %1375 = vmatpush1.bf16.msra.mxu0 %v1121
        %1376 = vmatprep.subr.bf16.mxu0 %v1119
        %1377 = vmatpush1.bf16.msra.mxu0 %v1118
        %1378 = vmatprep.subr.bf16.mxu0 %v1116
        %1379 = vmatpush1.bf16.msra.mxu0 %v1115
        %1380 = vmatprep.subr.bf16.mxu0 0
        %1381 = vmatpush2.bf16.msra.mxu0 0
        %1382 = vmatprep.subr.bf16.mxu0 0
        %1383 = vmatpush2.bf16.msra.mxu0 0
        %1384 = vmatprep.subr.bf16.mxu0 0
        %1385 = vmatpush2.bf16.msra.mxu0 0
        %1386 = vmatprep.subr.bf16.mxu0 0
        %1387 = vmatpush2.bf16.msra.mxu0 0
        %1388 = vmatprep.subr.bf16.mxu0 0
        %1389 = vmatpush2.bf16.msra.mxu0 0
        %1390 = vmatprep.subr.bf16.mxu0 0
        %1391 = vmatpush2.bf16.msra.mxu0 0
        %1392 = vmatprep.subr.bf16.mxu0 0
        %1393 = vmatpush2.bf16.msra.mxu0 0
        %1394 = vmatprep.subr.bf16.mxu0 0
        %1395 = vmatpush2.bf16.msra.mxu0 0
        %1396 = vmatprep.mubr.bf16.mxu0 0
        %1397 = vmatmul.mubr.bf16.gmra.mxu0 %v1363
        %v1398 = vpop.f32.mrf.mxu0
        %v1399 = vadd.f32 0.0, %v1398
        %v1400 = vpop.f32.mrf.mxu0
        %v1401 = vadd.f32 0.0, %v1400
        %v1402 = vpop.f32.mrf.mxu0
        %v1403 = vadd.f32 0.0, %v1402
        %v1404 = vpop.f32.mrf.mxu0
        %v1405 = vadd.f32 0.0, %v1404
        %1406 = vdwg.mxu0
        %1407 = vmatprep.subr.bf16.mxu0 0
        %1408 = vmatpush1.bf16.msra.mxu0 %v1138
        %1409 = vmatprep.subr.bf16.mxu0 0
        %1410 = vmatpush1.bf16.msra.mxu0 %v1135
        %1411 = vmatprep.subr.bf16.mxu0 0
        %1412 = vmatpush1.bf16.msra.mxu0 %v1132
        %1413 = vmatprep.subr.bf16.mxu0 0
        %1414 = vmatpush1.bf16.msra.mxu0 %v1129
        %1415 = vmatprep.subr.bf16.mxu0 0
        %1416 = vmatpush1.bf16.msra.mxu0 %v1126
        %1417 = vmatprep.subr.bf16.mxu0 0
        %1418 = vmatpush1.bf16.msra.mxu0 %v1123
        %1419 = vmatprep.subr.bf16.mxu0 0
        %1420 = vmatpush1.bf16.msra.mxu0 %v1120
        %1421 = vmatprep.subr.bf16.mxu0 0
        %1422 = vmatpush1.bf16.msra.mxu0 %v1117
        %1423 = vmatprep.subr.bf16.mxu0 0
        %1424 = vmatpush2.bf16.msra.mxu0 0
        %1425 = vmatprep.subr.bf16.mxu0 0
        %1426 = vmatpush2.bf16.msra.mxu0 0
        %1427 = vmatprep.subr.bf16.mxu0 0
        %1428 = vmatpush2.bf16.msra.mxu0 0
        %1429 = vmatprep.subr.bf16.mxu0 0
        %1430 = vmatpush2.bf16.msra.mxu0 0
        %1431 = vmatprep.subr.bf16.mxu0 0
        %1432 = vmatpush2.bf16.msra.mxu0 0
        %1433 = vmatprep.subr.bf16.mxu0 0
        %1434 = vmatpush2.bf16.msra.mxu0 0
        %1435 = vmatprep.subr.bf16.mxu0 0
        %1436 = vmatpush2.bf16.msra.mxu0 0
        %1437 = vmatprep.subr.bf16.mxu0 0
        %1438 = vmatpush2.bf16.msra.mxu0 0
        %1439 = vmatprep.mubr.bf16.mxu0 0
        %1440 = vmatmul.mubr.bf16.gmra.mxu0 %v1363
        %v1441 = vpop.f32.mrf.mxu0
        %v1442 = vadd.f32 0.0, %v1441
        %v1443 = vpop.f32.mrf.mxu0
        %v1444 = vpop.f32.mrf.mxu0
        %v1445 = vadd.f32 0.0, %v1444
        %v1446 = vpop.f32.mrf.mxu0
        %1447 = vdwg.mxu0
        %v1448 = vpack.c.bf16 %v1403, %v1399
        %v1449 = vpack.c.bf16 %v1405, %v1401
        %v1450 = vpack.c.bf16 %v1445, %v1442
        %v1452 = vunpack.c.l.b16 %v1448
        %v1453 = vunpack.c.h.b16 %v1448
        %v1454 = vpack.c.b16 %v1452, %v1452
        %v1455 = vpack.c.b16 %v1453, %v1453
        %v1458 = vadd.bf16 %v1359, %v1454
        %v1459 = vadd.bf16 %v1361, %v1455
        %v1460 = vxor.u32 %v1458, 2147516416
        %v1461 = vxor.u32 %v1459, 2147516416
        %v1463 = vmul.bf16 %v1460, 1069105081
        %v1464 = vpow.bf16.pop %v1463
        %v1466 = vmul.bf16 %v1461, 1069105081
        %v1467 = vpow.bf16.pop %v1466
        %v1468 = vadd.bf16 %v1464, 1065369472
        %v1469 = vadd.bf16 %v1467, 1065369472
        %v1470 = vrcp.bf16.pop %v1468
        %v1471 = vmul.bf16 1065369472, %v1470
        %v1472 = vrcp.bf16.pop %v1469
        %v1473 = vmul.bf16 1065369472, %v1472
        %v1476 = vrot.slane %v1359, 4
        %v1477 = vrot.slane %v1361, 4
        %v1481 = vunpack.c.l.b16 %v1449
        %v1482 = vunpack.c.h.b16 %v1449
        %v1483 = vpack.c.b16 %v1481, %v1481
        %v1484 = vpack.c.b16 %v1482, %v1482
        %v1487 = vadd.bf16 %v1476, %v1483
        %v1488 = vadd.bf16 %v1477, %v1484
        %v1489 = vxor.u32 %v1487, 2147516416
        %v1490 = vxor.u32 %v1488, 2147516416
        %v1492 = vmul.bf16 %v1489, 1069105081
        %v1493 = vpow.bf16.pop %v1492
        %v1495 = vmul.bf16 %v1490, 1069105081
        %v1496 = vpow.bf16.pop %v1495
        %v1497 = vadd.bf16 %v1493, 1065369472
        %v1498 = vadd.bf16 %v1496, 1065369472
        %v1499 = vrcp.bf16.pop %v1497
        %v1500 = vmul.bf16 1065369472, %v1499
        %v1501 = vrcp.bf16.pop %v1498
        %v1502 = vmul.bf16 1065369472, %v1501
        %v1503 = vadd.bf16 %v1450, %v1308
        %v1505 = vunpack.c.l.b16 %v1503
        %v1506 = vunpack.c.h.b16 %v1503
        %v1507 = vpack.c.b16 %v1505, %v1505
        %v1508 = vpack.c.b16 %v1506, %v1506
        %v1511 = vmul.bf16 %v1471, %v1507
        %v1512 = vmul.bf16 %v1473, %v1508
        %v1513 = vadd.bf16 %v1360, %v1511
        %v1514 = vadd.bf16 %v1362, %v1512
        %v1515 = vtanh.bf16.pop %v1513
        %v1516 = vtanh.bf16.pop %v1514
        %v1517 = vsub.bf16 1065369472, %v1500
        %v1518 = vsub.bf16 1065369472, %v1502
        %v1519 = vmul.bf16 %v1517, %v1515
        %v1520 = vmul.bf16 %v1518, %v1516
        %v1522 = vunpack.c.l.b16 %v1363
        %v1523 = vunpack.c.h.b16 %v1363
        %v1524 = vpack.c.b16 %v1522, %v1522
        %v1525 = vpack.c.b16 %v1523, %v1523
        %v1528 = vmul.bf16 %v1500, %v1524
        %v1529 = vmul.bf16 %v1502, %v1525
        %v1530 = vadd.bf16 %v1519, %v1528
        %v1531 = vadd.bf16 %v1520, %v1529
        %v1532 = vunpack.c.l.bf16 %v1530
        %v1533 = vunpack.c.l.bf16 %v1531
        %v1534 = vstv %s1355
        %vm1535 = vcmp.lt.s32.totalorder %v1534, %v989
        %vm1536 = vcmp.lt.s32.totalorder %v1534, %v990
        %v1537 = vsel %vm1535, 1, 0
        %v1538 = vsel %vm1536, 1, 0
        %1539 = vset.pattern.permute.xlu0 0
        %1540 = vperm.xlu0 %1539, %v1537
        %v1541 = vpop.permute.xlu0 %1540
        %1542 = vset.pattern.permute.xlu0 0
        %1543 = vperm.xlu0 %1542, %v1538
        %v1544 = vpop.permute.xlu0 %1543
        %vm1545 = vcmp.eq.s32.totalorder %v1541, 1
        %vm1546 = vcmp.eq.s32.totalorder %v1544, 1
        %v1547 = vsel %vm1545, %v1532, %v1353
        %v1548 = vsel %vm1546, %v1533, %v1354
        %s1549 = sadd.s32 %s340, 2
        %s1550 = smul.u32 4, 3
        %s1551 = smul.addr %s1550, 4
        %s1552 = scalar_lea.vmem [#allocation2], %s1551
        %v1553 = vld [vmem:[%s1552] sm:$0xff]
        %v1554 = vld [vmem:[%s1552 + $0x8] sm:$0xf]
        %v1555 = vld [vmem:[%s1552 + $0xc] sm:$0xff]
        %v1556 = vld [vmem:[%s1552 + $0x14] sm:$0xf]
        %v1557 = vpack.c.bf16 %v1548, %v1547
        %1558 = vmatprep.subr.bf16.mxu0 %v1137
        %1559 = vmatpush1.bf16.msra.mxu0 %v1136
        %1560 = vmatprep.subr.bf16.mxu0 %v1134
        %1561 = vmatpush1.bf16.msra.mxu0 %v1133
        %1562 = vmatprep.subr.bf16.mxu0 %v1131
        %1563 = vmatpush1.bf16.msra.mxu0 %v1130
        %1564 = vmatprep.subr.bf16.mxu0 %v1128
        %1565 = vmatpush1.bf16.msra.mxu0 %v1127
        %1566 = vmatprep.subr.bf16.mxu0 %v1125
        %1567 = vmatpush1.bf16.msra.mxu0 %v1124
        %1568 = vmatprep.subr.bf16.mxu0 %v1122
        %1569 = vmatpush1.bf16.msra.mxu0 %v1121
        %1570 = vmatprep.subr.bf16.mxu0 %v1119
        %1571 = vmatpush1.bf16.msra.mxu0 %v1118
        %1572 = vmatprep.subr.bf16.mxu0 %v1116
        %1573 = vmatpush1.bf16.msra.mxu0 %v1115
        %1574 = vmatprep.subr.bf16.mxu0 0
        %1575 = vmatpush2.bf16.msra.mxu0 0
        %1576 = vmatprep.subr.bf16.mxu0 0
        %1577 = vmatpush2.bf16.msra.mxu0 0
        %1578 = vmatprep.subr.bf16.mxu0 0
        %1579 = vmatpush2.bf16.msra.mxu0 0
        %1580 = vmatprep.subr.bf16.mxu0 0
        %1581 = vmatpush2.bf16.msra.mxu0 0
        %1582 = vmatprep.subr.bf16.mxu0 0
        %1583 = vmatpush2.bf16.msra.mxu0 0
        %1584 = vmatprep.subr.bf16.mxu0 0
        %1585 = vmatpush2.bf16.msra.mxu0 0
        %1586 = vmatprep.subr.bf16.mxu0 0
        %1587 = vmatpush2.bf16.msra.mxu0 0
        %1588 = vmatprep.subr.bf16.mxu0 0
        %1589 = vmatpush2.bf16.msra.mxu0 0
        %1590 = vmatprep.mubr.bf16.mxu0 0
        %1591 = vmatmul.mubr.bf16.gmra.mxu0 %v1557
        %v1592 = vpop.f32.mrf.mxu0
        %v1593 = vadd.f32 0.0, %v1592
        %v1594 = vpop.f32.mrf.mxu0
        %v1595 = vadd.f32 0.0, %v1594
        %v1596 = vpop.f32.mrf.mxu0
        %v1597 = vadd.f32 0.0, %v1596
        %v1598 = vpop.f32.mrf.mxu0
        %v1599 = vadd.f32 0.0, %v1598
        %1600 = vdwg.mxu0
        %1601 = vmatprep.subr.bf16.mxu0 0
        %1602 = vmatpush1.bf16.msra.mxu0 %v1138
        %1603 = vmatprep.subr.bf16.mxu0 0
        %1604 = vmatpush1.bf16.msra.mxu0 %v1135
        %1605 = vmatprep.subr.bf16.mxu0 0
        %1606 = vmatpush1.bf16.msra.mxu0 %v1132
        %1607 = vmatprep.subr.bf16.mxu0 0
        %1608 = vmatpush1.bf16.msra.mxu0 %v1129
        %1609 = vmatprep.subr.bf16.mxu0 0
        %1610 = vmatpush1.bf16.msra.mxu0 %v1126
        %1611 = vmatprep.subr.bf16.mxu0 0
        %1612 = vmatpush1.bf16.msra.mxu0 %v1123
        %1613 = vmatprep.subr.bf16.mxu0 0
        %1614 = vmatpush1.bf16.msra.mxu0 %v1120
        %1615 = vmatprep.subr.bf16.mxu0 0
        %1616 = vmatpush1.bf16.msra.mxu0 %v1117
        %1617 = vmatprep.subr.bf16.mxu0 0
        %1618 = vmatpush2.bf16.msra.mxu0 0
        %1619 = vmatprep.subr.bf16.mxu0 0
        %1620 = vmatpush2.bf16.msra.mxu0 0
        %1621 = vmatprep.subr.bf16.mxu0 0
        %1622 = vmatpush2.bf16.msra.mxu0 0
        %1623 = vmatprep.subr.bf16.mxu0 0
        %1624 = vmatpush2.bf16.msra.mxu0 0
        %1625 = vmatprep.subr.bf16.mxu0 0
        %1626 = vmatpush2.bf16.msra.mxu0 0
        %1627 = vmatprep.subr.bf16.mxu0 0
        %1628 = vmatpush2.bf16.msra.mxu0 0
        %1629 = vmatprep.subr.bf16.mxu0 0
        %1630 = vmatpush2.bf16.msra.mxu0 0
        %1631 = vmatprep.subr.bf16.mxu0 0
        %1632 = vmatpush2.bf16.msra.mxu0 0
        %1633 = vmatprep.mubr.bf16.mxu0 0
        %1634 = vmatmul.mubr.bf16.gmra.mxu0 %v1557
        %v1635 = vpop.f32.mrf.mxu0
        %v1636 = vadd.f32 0.0, %v1635
        %v1637 = vpop.f32.mrf.mxu0
        %v1638 = vpop.f32.mrf.mxu0
        %v1639 = vadd.f32 0.0, %v1638
        %v1640 = vpop.f32.mrf.mxu0
        %1641 = vdwg.mxu0
        %v1642 = vpack.c.bf16 %v1597, %v1593
        %v1643 = vpack.c.bf16 %v1599, %v1595
        %v1644 = vpack.c.bf16 %v1639, %v1636
        %v1646 = vunpack.c.l.b16 %v1642
        %v1647 = vunpack.c.h.b16 %v1642
        %v1648 = vpack.c.b16 %v1646, %v1646
        %v1649 = vpack.c.b16 %v1647, %v1647
        %v1652 = vadd.bf16 %v1553, %v1648
        %v1653 = vadd.bf16 %v1555, %v1649
        %v1654 = vxor.u32 %v1652, 2147516416
        %v1655 = vxor.u32 %v1653, 2147516416
        %v1657 = vmul.bf16 %v1654, 1069105081
        %v1658 = vpow.bf16.pop %v1657
        %v1660 = vmul.bf16 %v1655, 1069105081
        %v1661 = vpow.bf16.pop %v1660
        %v1662 = vadd.bf16 %v1658, 1065369472
        %v1663 = vadd.bf16 %v1661, 1065369472
        %v1664 = vrcp.bf16.pop %v1662
        %v1665 = vmul.bf16 1065369472, %v1664
        %v1666 = vrcp.bf16.pop %v1663
        %v1667 = vmul.bf16 1065369472, %v1666
        %v1670 = vrot.slane %v1553, 4
        %v1671 = vrot.slane %v1555, 4
        %v1675 = vunpack.c.l.b16 %v1643
        %v1676 = vunpack.c.h.b16 %v1643
        %v1677 = vpack.c.b16 %v1675, %v1675
        %v1678 = vpack.c.b16 %v1676, %v1676
        %v1681 = vadd.bf16 %v1670, %v1677
        %v1682 = vadd.bf16 %v1671, %v1678
        %v1683 = vxor.u32 %v1681, 2147516416
        %v1684 = vxor.u32 %v1682, 2147516416
        %v1686 = vmul.bf16 %v1683, 1069105081
        %v1687 = vpow.bf16.pop %v1686
        %v1689 = vmul.bf16 %v1684, 1069105081
        %v1690 = vpow.bf16.pop %v1689
        %v1691 = vadd.bf16 %v1687, 1065369472
        %v1692 = vadd.bf16 %v1690, 1065369472
        %v1693 = vrcp.bf16.pop %v1691
        %v1694 = vmul.bf16 1065369472, %v1693
        %v1695 = vrcp.bf16.pop %v1692
        %v1696 = vmul.bf16 1065369472, %v1695
        %v1697 = vadd.bf16 %v1644, %v1308
        %v1699 = vunpack.c.l.b16 %v1697
        %v1700 = vunpack.c.h.b16 %v1697
        %v1701 = vpack.c.b16 %v1699, %v1699
        %v1702 = vpack.c.b16 %v1700, %v1700
        %v1705 = vmul.bf16 %v1665, %v1701
        %v1706 = vmul.bf16 %v1667, %v1702
        %v1707 = vadd.bf16 %v1554, %v1705
        %v1708 = vadd.bf16 %v1556, %v1706
        %v1709 = vtanh.bf16.pop %v1707
        %v1710 = vtanh.bf16.pop %v1708
        %v1711 = vsub.bf16 1065369472, %v1694
        %v1712 = vsub.bf16 1065369472, %v1696
        %v1713 = vmul.bf16 %v1711, %v1709
        %v1714 = vmul.bf16 %v1712, %v1710
        %v1716 = vunpack.c.l.b16 %v1557
        %v1717 = vunpack.c.h.b16 %v1557
        %v1718 = vpack.c.b16 %v1716, %v1716
        %v1719 = vpack.c.b16 %v1717, %v1717
        %v1722 = vmul.bf16 %v1694, %v1718
        %v1723 = vmul.bf16 %v1696, %v1719
        %v1724 = vadd.bf16 %v1713, %v1722
        %v1725 = vadd.bf16 %v1714, %v1723
        %v1726 = vunpack.c.l.bf16 %v1724
        %v1727 = vunpack.c.l.bf16 %v1725
        %v1728 = vstv %s1549
        %vm1729 = vcmp.lt.s32.totalorder %v1728, %v989
        %vm1730 = vcmp.lt.s32.totalorder %v1728, %v990
        %v1731 = vsel %vm1729, 1, 0
        %v1732 = vsel %vm1730, 1, 0
        %1733 = vset.pattern.permute.xlu0 0
        %1734 = vperm.xlu0 %1733, %v1731
        %v1735 = vpop.permute.xlu0 %1734
        %1736 = vset.pattern.permute.xlu0 0
        %1737 = vperm.xlu0 %1736, %v1732
        %v1738 = vpop.permute.xlu0 %1737
        %vm1739 = vcmp.eq.s32.totalorder %v1735, 1
        %vm1740 = vcmp.eq.s32.totalorder %v1738, 1
        %v1741 = vsel %vm1739, %v1726, %v1547
        %v1742 = vsel %vm1740, %v1727, %v1548
        %s1743 = sadd.s32 %s340, 3
        %s1744 = smul.u32 6, 3
        %s1745 = smul.addr %s1744, 4
        %s1746 = scalar_lea.vmem [#allocation2], %s1745
        %v1747 = vld [vmem:[%s1746] sm:$0xff]
        %v1748 = vld [vmem:[%s1746 + $0x8] sm:$0xf]
        %v1749 = vld [vmem:[%s1746 + $0xc] sm:$0xff]
        %v1750 = vld [vmem:[%s1746 + $0x14] sm:$0xf]
        %v1751 = vpack.c.bf16 %v1742, %v1741
        %1752 = vmatprep.subr.bf16.mxu0 %v1137
        %1753 = vmatpush1.bf16.msra.mxu0 %v1136
        %1754 = vmatprep.subr.bf16.mxu0 %v1134
        %1755 = vmatpush1.bf16.msra.mxu0 %v1133
        %1756 = vmatprep.subr.bf16.mxu0 %v1131
        %1757 = vmatpush1.bf16.msra.mxu0 %v1130
        %1758 = vmatprep.subr.bf16.mxu0 %v1128
        %1759 = vmatpush1.bf16.msra.mxu0 %v1127
        %1760 = vmatprep.subr.bf16.mxu0 %v1125
        %1761 = vmatpush1.bf16.msra.mxu0 %v1124
        %1762 = vmatprep.subr.bf16.mxu0 %v1122
        %1763 = vmatpush1.bf16.msra.mxu0 %v1121
        %1764 = vmatprep.subr.bf16.mxu0 %v1119
        %1765 = vmatpush1.bf16.msra.mxu0 %v1118
        %1766 = vmatprep.subr.bf16.mxu0 %v1116
        %1767 = vmatpush1.bf16.msra.mxu0 %v1115
        %1768 = vmatprep.subr.bf16.mxu0 0
        %1769 = vmatpush2.bf16.msra.mxu0 0
        %1770 = vmatprep.subr.bf16.mxu0 0
        %1771 = vmatpush2.bf16.msra.mxu0 0
        %1772 = vmatprep.subr.bf16.mxu0 0
        %1773 = vmatpush2.bf16.msra.mxu0 0
        %1774 = vmatprep.subr.bf16.mxu0 0
        %1775 = vmatpush2.bf16.msra.mxu0 0
        %1776 = vmatprep.subr.bf16.mxu0 0
        %1777 = vmatpush2.bf16.msra.mxu0 0
        %1778 = vmatprep.subr.bf16.mxu0 0
        %1779 = vmatpush2.bf16.msra.mxu0 0
        %1780 = vmatprep.subr.bf16.mxu0 0
        %1781 = vmatpush2.bf16.msra.mxu0 0
        %1782 = vmatprep.subr.bf16.mxu0 0
        %1783 = vmatpush2.bf16.msra.mxu0 0
        %1784 = vmatprep.mubr.bf16.mxu0 0
        %1785 = vmatmul.mubr.bf16.gmra.mxu0 %v1751
        %v1786 = vpop.f32.mrf.mxu0
        %v1787 = vadd.f32 0.0, %v1786
        %v1788 = vpop.f32.mrf.mxu0
        %v1789 = vadd.f32 0.0, %v1788
        %v1790 = vpop.f32.mrf.mxu0
        %v1791 = vadd.f32 0.0, %v1790
        %v1792 = vpop.f32.mrf.mxu0
        %v1793 = vadd.f32 0.0, %v1792
        %1794 = vdwg.mxu0
        %1795 = vmatprep.subr.bf16.mxu0 0
        %1796 = vmatpush1.bf16.msra.mxu0 %v1138
        %1797 = vmatprep.subr.bf16.mxu0 0
        %1798 = vmatpush1.bf16.msra.mxu0 %v1135
        %1799 = vmatprep.subr.bf16.mxu0 0
        %1800 = vmatpush1.bf16.msra.mxu0 %v1132
        %1801 = vmatprep.subr.bf16.mxu0 0
        %1802 = vmatpush1.bf16.msra.mxu0 %v1129
        %1803 = vmatprep.subr.bf16.mxu0 0
        %1804 = vmatpush1.bf16.msra.mxu0 %v1126
        %1805 = vmatprep.subr.bf16.mxu0 0
        %1806 = vmatpush1.bf16.msra.mxu0 %v1123
        %1807 = vmatprep.subr.bf16.mxu0 0
        %1808 = vmatpush1.bf16.msra.mxu0 %v1120
        %1809 = vmatprep.subr.bf16.mxu0 0
        %1810 = vmatpush1.bf16.msra.mxu0 %v1117
        %1811 = vmatprep.subr.bf16.mxu0 0
        %1812 = vmatpush2.bf16.msra.mxu0 0
        %1813 = vmatprep.subr.bf16.mxu0 0
        %1814 = vmatpush2.bf16.msra.mxu0 0
        %1815 = vmatprep.subr.bf16.mxu0 0
        %1816 = vmatpush2.bf16.msra.mxu0 0
        %1817 = vmatprep.subr.bf16.mxu0 0
        %1818 = vmatpush2.bf16.msra.mxu0 0
        %1819 = vmatprep.subr.bf16.mxu0 0
        %1820 = vmatpush2.bf16.msra.mxu0 0
        %1821 = vmatprep.subr.bf16.mxu0 0
        %1822 = vmatpush2.bf16.msra.mxu0 0
        %1823 = vmatprep.subr.bf16.mxu0 0
        %1824 = vmatpush2.bf16.msra.mxu0 0
        %1825 = vmatprep.subr.bf16.mxu0 0
        %1826 = vmatpush2.bf16.msra.mxu0 0
        %1827 = vmatprep.mubr.bf16.mxu0 0
        %1828 = vmatmul.mubr.bf16.gmra.mxu0 %v1751
        %v1829 = vpop.f32.mrf.mxu0
        %v1830 = vadd.f32 0.0, %v1829
        %v1831 = vpop.f32.mrf.mxu0
        %v1832 = vpop.f32.mrf.mxu0
        %v1833 = vadd.f32 0.0, %v1832
        %v1834 = vpop.f32.mrf.mxu0
        %1835 = vdwg.mxu0
        %v1836 = vpack.c.bf16 %v1791, %v1787
        %v1837 = vpack.c.bf16 %v1793, %v1789
        %v1838 = vpack.c.bf16 %v1833, %v1830
        %v1840 = vunpack.c.l.b16 %v1836
        %v1841 = vunpack.c.h.b16 %v1836
        %v1842 = vpack.c.b16 %v1840, %v1840
        %v1843 = vpack.c.b16 %v1841, %v1841
        %v1846 = vadd.bf16 %v1747, %v1842
        %v1847 = vadd.bf16 %v1749, %v1843
        %v1848 = vxor.u32 %v1846, 2147516416
        %v1849 = vxor.u32 %v1847, 2147516416
        %v1851 = vmul.bf16 %v1848, 1069105081
        %v1852 = vpow.bf16.pop %v1851
        %v1854 = vmul.bf16 %v1849, 1069105081
        %v1855 = vpow.bf16.pop %v1854
        %v1856 = vadd.bf16 %v1852, 1065369472
        %v1857 = vadd.bf16 %v1855, 1065369472
        %v1858 = vrcp.bf16.pop %v1856
        %v1859 = vmul.bf16 1065369472, %v1858
        %v1860 = vrcp.bf16.pop %v1857
        %v1861 = vmul.bf16 1065369472, %v1860
        %v1864 = vrot.slane %v1747, 4
        %v1865 = vrot.slane %v1749, 4
        %v1869 = vunpack.c.l.b16 %v1837
        %v1870 = vunpack.c.h.b16 %v1837
        %v1871 = vpack.c.b16 %v1869, %v1869
        %v1872 = vpack.c.b16 %v1870, %v1870
        %v1875 = vadd.bf16 %v1864, %v1871
        %v1876 = vadd.bf16 %v1865, %v1872
        %v1877 = vxor.u32 %v1875, 2147516416
        %v1878 = vxor.u32 %v1876, 2147516416
        %v1880 = vmul.bf16 %v1877, 1069105081
        %v1881 = vpow.bf16.pop %v1880
        %v1883 = vmul.bf16 %v1878, 1069105081
        %v1884 = vpow.bf16.pop %v1883
        %v1885 = vadd.bf16 %v1881, 1065369472
        %v1886 = vadd.bf16 %v1884, 1065369472
        %v1887 = vrcp.bf16.pop %v1885
        %v1888 = vmul.bf16 1065369472, %v1887
        %v1889 = vrcp.bf16.pop %v1886
        %v1890 = vmul.bf16 1065369472, %v1889
        %v1891 = vadd.bf16 %v1838, %v1308
        %v1893 = vunpack.c.l.b16 %v1891
        %v1894 = vunpack.c.h.b16 %v1891
        %v1895 = vpack.c.b16 %v1893, %v1893
        %v1896 = vpack.c.b16 %v1894, %v1894
        %v1899 = vmul.bf16 %v1859, %v1895
        %v1900 = vmul.bf16 %v1861, %v1896
        %v1901 = vadd.bf16 %v1748, %v1899
        %v1902 = vadd.bf16 %v1750, %v1900
        %v1903 = vtanh.bf16.pop %v1901
        %v1904 = vtanh.bf16.pop %v1902
        %v1905 = vsub.bf16 1065369472, %v1888
        %v1906 = vsub.bf16 1065369472, %v1890
        %v1907 = vmul.bf16 %v1905, %v1903
        %v1908 = vmul.bf16 %v1906, %v1904
        %v1910 = vunpack.c.l.b16 %v1751
        %v1911 = vunpack.c.h.b16 %v1751
        %v1912 = vpack.c.b16 %v1910, %v1910
        %v1913 = vpack.c.b16 %v1911, %v1911
        %v1916 = vmul.bf16 %v1888, %v1912
        %v1917 = vmul.bf16 %v1890, %v1913
        %v1918 = vadd.bf16 %v1907, %v1916
        %v1919 = vadd.bf16 %v1908, %v1917
        %v1920 = vunpack.c.l.bf16 %v1918
        %v1921 = vunpack.c.l.bf16 %v1919
        %v1922 = vstv %s1743
        %vm1923 = vcmp.lt.s32.totalorder %v1922, %v989
        %vm1924 = vcmp.lt.s32.totalorder %v1922, %v990
        %v1925 = vsel %vm1923, 1, 0
        %v1926 = vsel %vm1924, 1, 0
        %1927 = vset.pattern.permute.xlu0 0
        %1928 = vperm.xlu0 %1927, %v1925
        %v1929 = vpop.permute.xlu0 %1928
        %1930 = vset.pattern.permute.xlu0 0
        %1931 = vperm.xlu0 %1930, %v1926
        %v1932 = vpop.permute.xlu0 %1931
        %vm1933 = vcmp.eq.s32.totalorder %v1929, 1
        %vm1934 = vcmp.eq.s32.totalorder %v1932, 1
        %v1935 = vsel %vm1933, %v1920, %v1741
        %v1936 = vsel %vm1934, %v1921, %v1742
        %s1937 = sadd.s32 %s340, 4
        %s1938 = smul.u32 8, 3
        %s1939 = smul.addr %s1938, 4
        %s1940 = scalar_lea.vmem [#allocation2], %s1939
        %v1941 = vld [vmem:[%s1940] sm:$0xff]
        %v1942 = vld [vmem:[%s1940 + $0x8] sm:$0xf]
        %v1943 = vld [vmem:[%s1940 + $0xc] sm:$0xff]
        %v1944 = vld [vmem:[%s1940 + $0x14] sm:$0xf]
        %v1945 = vpack.c.bf16 %v1936, %v1935
        %1946 = vmatprep.subr.bf16.mxu0 %v1137
        %1947 = vmatpush1.bf16.msra.mxu0 %v1136
        %1948 = vmatprep.subr.bf16.mxu0 %v1134
        %1949 = vmatpush1.bf16.msra.mxu0 %v1133
        %1950 = vmatprep.subr.bf16.mxu0 %v1131
        %1951 = vmatpush1.bf16.msra.mxu0 %v1130
        %1952 = vmatprep.subr.bf16.mxu0 %v1128
        %1953 = vmatpush1.bf16.msra.mxu0 %v1127
        %1954 = vmatprep.subr.bf16.mxu0 %v1125
        %1955 = vmatpush1.bf16.msra.mxu0 %v1124
        %1956 = vmatprep.subr.bf16.mxu0 %v1122
        %1957 = vmatpush1.bf16.msra.mxu0 %v1121
        %1958 = vmatprep.subr.bf16.mxu0 %v1119
        %1959 = vmatpush1.bf16.msra.mxu0 %v1118
        %1960 = vmatprep.subr.bf16.mxu0 %v1116
        %1961 = vmatpush1.bf16.msra.mxu0 %v1115
        %1962 = vmatprep.subr.bf16.mxu0 0
        %1963 = vmatpush2.bf16.msra.mxu0 0
        %1964 = vmatprep.subr.bf16.mxu0 0
        %1965 = vmatpush2.bf16.msra.mxu0 0
        %1966 = vmatprep.subr.bf16.mxu0 0
        %1967 = vmatpush2.bf16.msra.mxu0 0
        %1968 = vmatprep.subr.bf16.mxu0 0
        %1969 = vmatpush2.bf16.msra.mxu0 0
        %1970 = vmatprep.subr.bf16.mxu0 0
        %1971 = vmatpush2.bf16.msra.mxu0 0
        %1972 = vmatprep.subr.bf16.mxu0 0
        %1973 = vmatpush2.bf16.msra.mxu0 0
        %1974 = vmatprep.subr.bf16.mxu0 0
        %1975 = vmatpush2.bf16.msra.mxu0 0
        %1976 = vmatprep.subr.bf16.mxu0 0
        %1977 = vmatpush2.bf16.msra.mxu0 0
        %1978 = vmatprep.mubr.bf16.mxu0 0
        %1979 = vmatmul.mubr.bf16.gmra.mxu0 %v1945
        %v1980 = vpop.f32.mrf.mxu0
        %v1981 = vadd.f32 0.0, %v1980
        %v1982 = vpop.f32.mrf.mxu0
        %v1983 = vadd.f32 0.0, %v1982
        %v1984 = vpop.f32.mrf.mxu0
        %v1985 = vadd.f32 0.0, %v1984
        %v1986 = vpop.f32.mrf.mxu0
        %v1987 = vadd.f32 0.0, %v1986
        %1988 = vdwg.mxu0
        %1989 = vmatprep.subr.bf16.mxu0 0
        %1990 = vmatpush1.bf16.msra.mxu0 %v1138
        %1991 = vmatprep.subr.bf16.mxu0 0
        %1992 = vmatpush1.bf16.msra.mxu0 %v1135
        %1993 = vmatprep.subr.bf16.mxu0 0
        %1994 = vmatpush1.bf16.msra.mxu0 %v1132
        %1995 = vmatprep.subr.bf16.mxu0 0
        %1996 = vmatpush1.bf16.msra.mxu0 %v1129
        %1997 = vmatprep.subr.bf16.mxu0 0
        %1998 = vmatpush1.bf16.msra.mxu0 %v1126
        %1999 = vmatprep.subr.bf16.mxu0 0
        %2000 = vmatpush1.bf16.msra.mxu0 %v1123
        %2001 = vmatprep.subr.bf16.mxu0 0
        %2002 = vmatpush1.bf16.msra.mxu0 %v1120
        %2003 = vmatprep.subr.bf16.mxu0 0
        %2004 = vmatpush1.bf16.msra.mxu0 %v1117
        %2005 = vmatprep.subr.bf16.mxu0 0
        %2006 = vmatpush2.bf16.msra.mxu0 0
        %2007 = vmatprep.subr.bf16.mxu0 0
        %2008 = vmatpush2.bf16.msra.mxu0 0
        %2009 = vmatprep.subr.bf16.mxu0 0
        %2010 = vmatpush2.bf16.msra.mxu0 0
        %2011 = vmatprep.subr.bf16.mxu0 0
        %2012 = vmatpush2.bf16.msra.mxu0 0
        %2013 = vmatprep.subr.bf16.mxu0 0
        %2014 = vmatpush2.bf16.msra.mxu0 0
        %2015 = vmatprep.subr.bf16.mxu0 0
        %2016 = vmatpush2.bf16.msra.mxu0 0
        %2017 = vmatprep.subr.bf16.mxu0 0
        %2018 = vmatpush2.bf16.msra.mxu0 0
        %2019 = vmatprep.subr.bf16.mxu0 0
        %2020 = vmatpush2.bf16.msra.mxu0 0
        %2021 = vmatprep.mubr.bf16.mxu0 0
        %2022 = vmatmul.mubr.bf16.gmra.mxu0 %v1945
        %v2023 = vpop.f32.mrf.mxu0
        %v2024 = vadd.f32 0.0, %v2023
        %v2025 = vpop.f32.mrf.mxu0
        %v2026 = vpop.f32.mrf.mxu0
        %v2027 = vadd.f32 0.0, %v2026
        %v2028 = vpop.f32.mrf.mxu0
        %2029 = vdwg.mxu0
        %v2030 = vpack.c.bf16 %v1985, %v1981
        %v2031 = vpack.c.bf16 %v1987, %v1983
        %v2032 = vpack.c.bf16 %v2027, %v2024
        %v2034 = vunpack.c.l.b16 %v2030
        %v2035 = vunpack.c.h.b16 %v2030
        %v2036 = vpack.c.b16 %v2034, %v2034
        %v2037 = vpack.c.b16 %v2035, %v2035
        %v2040 = vadd.bf16 %v1941, %v2036
        %v2041 = vadd.bf16 %v1943, %v2037
        %v2042 = vxor.u32 %v2040, 2147516416
        %v2043 = vxor.u32 %v2041, 2147516416
        %v2045 = vmul.bf16 %v2042, 1069105081
        %v2046 = vpow.bf16.pop %v2045
        %v2048 = vmul.bf16 %v2043, 1069105081
        %v2049 = vpow.bf16.pop %v2048
        %v2050 = vadd.bf16 %v2046, 1065369472
        %v2051 = vadd.bf16 %v2049, 1065369472
        %v2052 = vrcp.bf16.pop %v2050
        %v2053 = vmul.bf16 1065369472, %v2052
        %v2054 = vrcp.bf16.pop %v2051
        %v2055 = vmul.bf16 1065369472, %v2054
        %v2058 = vrot.slane %v1941, 4
        %v2059 = vrot.slane %v1943, 4
        %v2063 = vunpack.c.l.b16 %v2031
        %v2064 = vunpack.c.h.b16 %v2031
        %v2065 = vpack.c.b16 %v2063, %v2063
        %v2066 = vpack.c.b16 %v2064, %v2064
        %v2069 = vadd.bf16 %v2058, %v2065
        %v2070 = vadd.bf16 %v2059, %v2066
        %v2071 = vxor.u32 %v2069, 2147516416
        %v2072 = vxor.u32 %v2070, 2147516416
        %v2074 = vmul.bf16 %v2071, 1069105081
        %v2075 = vpow.bf16.pop %v2074
        %v2077 = vmul.bf16 %v2072, 1069105081
        %v2078 = vpow.bf16.pop %v2077
        %v2079 = vadd.bf16 %v2075, 1065369472
        %v2080 = vadd.bf16 %v2078, 1065369472
        %v2081 = vrcp.bf16.pop %v2079
        %v2082 = vmul.bf16 1065369472, %v2081
        %v2083 = vrcp.bf16.pop %v2080
        %v2084 = vmul.bf16 1065369472, %v2083
        %v2085 = vadd.bf16 %v2032, %v1308
        %v2087 = vunpack.c.l.b16 %v2085
        %v2088 = vunpack.c.h.b16 %v2085
        %v2089 = vpack.c.b16 %v2087, %v2087
        %v2090 = vpack.c.b16 %v2088, %v2088
        %v2093 = vmul.bf16 %v2053, %v2089
        %v2094 = vmul.bf16 %v2055, %v2090
        %v2095 = vadd.bf16 %v1942, %v2093
        %v2096 = vadd.bf16 %v1944, %v2094
        %v2097 = vtanh.bf16.pop %v2095
        %v2098 = vtanh.bf16.pop %v2096
        %v2099 = vsub.bf16 1065369472, %v2082
        %v2100 = vsub.bf16 1065369472, %v2084
        %v2101 = vmul.bf16 %v2099, %v2097
        %v2102 = vmul.bf16 %v2100, %v2098
        %v2104 = vunpack.c.l.b16 %v1945
        %v2105 = vunpack.c.h.b16 %v1945
        %v2106 = vpack.c.b16 %v2104, %v2104
        %v2107 = vpack.c.b16 %v2105, %v2105
        %v2110 = vmul.bf16 %v2082, %v2106
        %v2111 = vmul.bf16 %v2084, %v2107
        %v2112 = vadd.bf16 %v2101, %v2110
        %v2113 = vadd.bf16 %v2102, %v2111
        %v2114 = vunpack.c.l.bf16 %v2112
        %v2115 = vunpack.c.l.bf16 %v2113
        %v2116 = vstv %s1937
        %vm2117 = vcmp.lt.s32.totalorder %v2116, %v989
        %vm2118 = vcmp.lt.s32.totalorder %v2116, %v990
        %v2119 = vsel %vm2117, 1, 0
        %v2120 = vsel %vm2118, 1, 0
        %2121 = vset.pattern.permute.xlu0 0
        %2122 = vperm.xlu0 %2121, %v2119
        %v2123 = vpop.permute.xlu0 %2122
        %2124 = vset.pattern.permute.xlu0 0
        %2125 = vperm.xlu0 %2124, %v2120
        %v2126 = vpop.permute.xlu0 %2125
        %vm2127 = vcmp.eq.s32.totalorder %v2123, 1
        %vm2128 = vcmp.eq.s32.totalorder %v2126, 1
        %v2129 = vsel %vm2127, %v2114, %v1935
        %v2130 = vsel %vm2128, %v2115, %v1936
        %s2131 = sadd.s32 %s340, 5
        %s2132 = smul.u32 10, 3
        %s2133 = smul.addr %s2132, 4
        %s2134 = scalar_lea.vmem [#allocation2], %s2133
        %v2135 = vld [vmem:[%s2134] sm:$0xff]
        %v2136 = vld [vmem:[%s2134 + $0x8] sm:$0xf]
        %v2137 = vld [vmem:[%s2134 + $0xc] sm:$0xff]
        %v2138 = vld [vmem:[%s2134 + $0x14] sm:$0xf]
        %v2139 = vpack.c.bf16 %v2130, %v2129
        %2140 = vmatprep.subr.bf16.mxu0 %v1137
        %2141 = vmatpush1.bf16.msra.mxu0 %v1136
        %2142 = vmatprep.subr.bf16.mxu0 %v1134
        %2143 = vmatpush1.bf16.msra.mxu0 %v1133
        %2144 = vmatprep.subr.bf16.mxu0 %v1131
        %2145 = vmatpush1.bf16.msra.mxu0 %v1130
        %2146 = vmatprep.subr.bf16.mxu0 %v1128
        %2147 = vmatpush1.bf16.msra.mxu0 %v1127
        %2148 = vmatprep.subr.bf16.mxu0 %v1125
        %2149 = vmatpush1.bf16.msra.mxu0 %v1124
        %2150 = vmatprep.subr.bf16.mxu0 %v1122
        %2151 = vmatpush1.bf16.msra.mxu0 %v1121
        %2152 = vmatprep.subr.bf16.mxu0 %v1119
        %2153 = vmatpush1.bf16.msra.mxu0 %v1118
        %2154 = vmatprep.subr.bf16.mxu0 %v1116
        %2155 = vmatpush1.bf16.msra.mxu0 %v1115
        %2156 = vmatprep.subr.bf16.mxu0 0
        %2157 = vmatpush2.bf16.msra.mxu0 0
        %2158 = vmatprep.subr.bf16.mxu0 0
        %2159 = vmatpush2.bf16.msra.mxu0 0
        %2160 = vmatprep.subr.bf16.mxu0 0
        %2161 = vmatpush2.bf16.msra.mxu0 0
        %2162 = vmatprep.subr.bf16.mxu0 0
        %2163 = vmatpush2.bf16.msra.mxu0 0
        %2164 = vmatprep.subr.bf16.mxu0 0
        %2165 = vmatpush2.bf16.msra.mxu0 0
        %2166 = vmatprep.subr.bf16.mxu0 0
        %2167 = vmatpush2.bf16.msra.mxu0 0
        %2168 = vmatprep.subr.bf16.mxu0 0
        %2169 = vmatpush2.bf16.msra.mxu0 0
        %2170 = vmatprep.subr.bf16.mxu0 0
        %2171 = vmatpush2.bf16.msra.mxu0 0
        %2172 = vmatprep.mubr.bf16.mxu0 0
        %2173 = vmatmul.mubr.bf16.gmra.mxu0 %v2139
        %v2174 = vpop.f32.mrf.mxu0
        %v2175 = vadd.f32 0.0, %v2174
        %v2176 = vpop.f32.mrf.mxu0
        %v2177 = vadd.f32 0.0, %v2176
        %v2178 = vpop.f32.mrf.mxu0
        %v2179 = vadd.f32 0.0, %v2178
        %v2180 = vpop.f32.mrf.mxu0
        %v2181 = vadd.f32 0.0, %v2180
        %2182 = vdwg.mxu0
        %2183 = vmatprep.subr.bf16.mxu0 0
        %2184 = vmatpush1.bf16.msra.mxu0 %v1138
        %2185 = vmatprep.subr.bf16.mxu0 0
        %2186 = vmatpush1.bf16.msra.mxu0 %v1135
        %2187 = vmatprep.subr.bf16.mxu0 0
        %2188 = vmatpush1.bf16.msra.mxu0 %v1132
        %2189 = vmatprep.subr.bf16.mxu0 0
        %2190 = vmatpush1.bf16.msra.mxu0 %v1129
        %2191 = vmatprep.subr.bf16.mxu0 0
        %2192 = vmatpush1.bf16.msra.mxu0 %v1126
        %2193 = vmatprep.subr.bf16.mxu0 0
        %2194 = vmatpush1.bf16.msra.mxu0 %v1123
        %2195 = vmatprep.subr.bf16.mxu0 0
        %2196 = vmatpush1.bf16.msra.mxu0 %v1120
        %2197 = vmatprep.subr.bf16.mxu0 0
        %2198 = vmatpush1.bf16.msra.mxu0 %v1117
        %2199 = vmatprep.subr.bf16.mxu0 0
        %2200 = vmatpush2.bf16.msra.mxu0 0
        %2201 = vmatprep.subr.bf16.mxu0 0
        %2202 = vmatpush2.bf16.msra.mxu0 0
        %2203 = vmatprep.subr.bf16.mxu0 0
        %2204 = vmatpush2.bf16.msra.mxu0 0
        %2205 = vmatprep.subr.bf16.mxu0 0
        %2206 = vmatpush2.bf16.msra.mxu0 0
        %2207 = vmatprep.subr.bf16.mxu0 0
        %2208 = vmatpush2.bf16.msra.mxu0 0
        %2209 = vmatprep.subr.bf16.mxu0 0
        %2210 = vmatpush2.bf16.msra.mxu0 0
        %2211 = vmatprep.subr.bf16.mxu0 0
        %2212 = vmatpush2.bf16.msra.mxu0 0
        %2213 = vmatprep.subr.bf16.mxu0 0
        %2214 = vmatpush2.bf16.msra.mxu0 0
        %2215 = vmatprep.mubr.bf16.mxu0 0
        %2216 = vmatmul.mubr.bf16.gmra.mxu0 %v2139
        %v2217 = vpop.f32.mrf.mxu0
        %v2218 = vadd.f32 0.0, %v2217
        %v2219 = vpop.f32.mrf.mxu0
        %v2220 = vpop.f32.mrf.mxu0
        %v2221 = vadd.f32 0.0, %v2220
        %v2222 = vpop.f32.mrf.mxu0
        %2223 = vdwg.mxu0
        %v2224 = vpack.c.bf16 %v2179, %v2175
        %v2225 = vpack.c.bf16 %v2181, %v2177
        %v2226 = vpack.c.bf16 %v2221, %v2218
        %v2228 = vunpack.c.l.b16 %v2224
        %v2229 = vunpack.c.h.b16 %v2224
        %v2230 = vpack.c.b16 %v2228, %v2228
        %v2231 = vpack.c.b16 %v2229, %v2229
        %v2234 = vadd.bf16 %v2135, %v2230
        %v2235 = vadd.bf16 %v2137, %v2231
        %v2236 = vxor.u32 %v2234, 2147516416
        %v2237 = vxor.u32 %v2235, 2147516416
        %v2239 = vmul.bf16 %v2236, 1069105081
        %v2240 = vpow.bf16.pop %v2239
        %v2242 = vmul.bf16 %v2237, 1069105081
        %v2243 = vpow.bf16.pop %v2242
        %v2244 = vadd.bf16 %v2240, 1065369472
        %v2245 = vadd.bf16 %v2243, 1065369472
        %v2246 = vrcp.bf16.pop %v2244
        %v2247 = vmul.bf16 1065369472, %v2246
        %v2248 = vrcp.bf16.pop %v2245
        %v2249 = vmul.bf16 1065369472, %v2248
        %v2252 = vrot.slane %v2135, 4
        %v2253 = vrot.slane %v2137, 4
        %v2257 = vunpack.c.l.b16 %v2225
        %v2258 = vunpack.c.h.b16 %v2225
        %v2259 = vpack.c.b16 %v2257, %v2257
        %v2260 = vpack.c.b16 %v2258, %v2258
        %v2263 = vadd.bf16 %v2252, %v2259
        %v2264 = vadd.bf16 %v2253, %v2260
        %v2265 = vxor.u32 %v2263, 2147516416
        %v2266 = vxor.u32 %v2264, 2147516416
        %v2268 = vmul.bf16 %v2265, 1069105081
        %v2269 = vpow.bf16.pop %v2268
        %v2271 = vmul.bf16 %v2266, 1069105081
        %v2272 = vpow.bf16.pop %v2271
        %v2273 = vadd.bf16 %v2269, 1065369472
        %v2274 = vadd.bf16 %v2272, 1065369472
        %v2275 = vrcp.bf16.pop %v2273
        %v2276 = vmul.bf16 1065369472, %v2275
        %v2277 = vrcp.bf16.pop %v2274
        %v2278 = vmul.bf16 1065369472, %v2277
        %v2279 = vadd.bf16 %v2226, %v1308
        %v2281 = vunpack.c.l.b16 %v2279
        %v2282 = vunpack.c.h.b16 %v2279
        %v2283 = vpack.c.b16 %v2281, %v2281
        %v2284 = vpack.c.b16 %v2282, %v2282
        %v2287 = vmul.bf16 %v2247, %v2283
        %v2288 = vmul.bf16 %v2249, %v2284
        %v2289 = vadd.bf16 %v2136, %v2287
        %v2290 = vadd.bf16 %v2138, %v2288
        %v2291 = vtanh.bf16.pop %v2289
        %v2292 = vtanh.bf16.pop %v2290
        %v2293 = vsub.bf16 1065369472, %v2276
        %v2294 = vsub.bf16 1065369472, %v2278
        %v2295 = vmul.bf16 %v2293, %v2291
        %v2296 = vmul.bf16 %v2294, %v2292
        %v2298 = vunpack.c.l.b16 %v2139
        %v2299 = vunpack.c.h.b16 %v2139
        %v2300 = vpack.c.b16 %v2298, %v2298
        %v2301 = vpack.c.b16 %v2299, %v2299
        %v2304 = vmul.bf16 %v2276, %v2300
        %v2305 = vmul.bf16 %v2278, %v2301
        %v2306 = vadd.bf16 %v2295, %v2304
        %v2307 = vadd.bf16 %v2296, %v2305
        %v2308 = vunpack.c.l.bf16 %v2306
        %v2309 = vunpack.c.l.bf16 %v2307
        %v2310 = vstv %s2131
        %vm2311 = vcmp.lt.s32.totalorder %v2310, %v989
        %vm2312 = vcmp.lt.s32.totalorder %v2310, %v990
        %v2313 = vsel %vm2311, 1, 0
        %v2314 = vsel %vm2312, 1, 0
        %2315 = vset.pattern.permute.xlu0 0
        %2316 = vperm.xlu0 %2315, %v2313
        %v2317 = vpop.permute.xlu0 %2316
        %2318 = vset.pattern.permute.xlu0 0
        %2319 = vperm.xlu0 %2318, %v2314
        %v2320 = vpop.permute.xlu0 %2319
        %vm2321 = vcmp.eq.s32.totalorder %v2317, 1
        %vm2322 = vcmp.eq.s32.totalorder %v2320, 1
        %v2323 = vsel %vm2321, %v2308, %v2129
        %v2324 = vsel %vm2322, %v2309, %v2130
        %s2325 = sadd.s32 %s340, 6
        %s2326 = smul.u32 12, 3
        %s2327 = smul.addr %s2326, 4
        %s2328 = scalar_lea.vmem [#allocation2], %s2327
        %v2329 = vld [vmem:[%s2328] sm:$0xff]
        %v2330 = vld [vmem:[%s2328 + $0x8] sm:$0xf]
        %v2331 = vld [vmem:[%s2328 + $0xc] sm:$0xff]
        %v2332 = vld [vmem:[%s2328 + $0x14] sm:$0xf]
        %v2333 = vpack.c.bf16 %v2324, %v2323
        %2334 = vmatprep.subr.bf16.mxu0 %v1137
        %2335 = vmatpush1.bf16.msra.mxu0 %v1136
        %2336 = vmatprep.subr.bf16.mxu0 %v1134
        %2337 = vmatpush1.bf16.msra.mxu0 %v1133
        %2338 = vmatprep.subr.bf16.mxu0 %v1131
        %2339 = vmatpush1.bf16.msra.mxu0 %v1130
        %2340 = vmatprep.subr.bf16.mxu0 %v1128
        %2341 = vmatpush1.bf16.msra.mxu0 %v1127
        %2342 = vmatprep.subr.bf16.mxu0 %v1125
        %2343 = vmatpush1.bf16.msra.mxu0 %v1124
        %2344 = vmatprep.subr.bf16.mxu0 %v1122
        %2345 = vmatpush1.bf16.msra.mxu0 %v1121
        %2346 = vmatprep.subr.bf16.mxu0 %v1119
        %2347 = vmatpush1.bf16.msra.mxu0 %v1118
        %2348 = vmatprep.subr.bf16.mxu0 %v1116
        %2349 = vmatpush1.bf16.msra.mxu0 %v1115
        %2350 = vmatprep.subr.bf16.mxu0 0
        %2351 = vmatpush2.bf16.msra.mxu0 0
        %2352 = vmatprep.subr.bf16.mxu0 0
        %2353 = vmatpush2.bf16.msra.mxu0 0
        %2354 = vmatprep.subr.bf16.mxu0 0
        %2355 = vmatpush2.bf16.msra.mxu0 0
        %2356 = vmatprep.subr.bf16.mxu0 0
        %2357 = vmatpush2.bf16.msra.mxu0 0
        %2358 = vmatprep.subr.bf16.mxu0 0
        %2359 = vmatpush2.bf16.msra.mxu0 0
        %2360 = vmatprep.subr.bf16.mxu0 0
        %2361 = vmatpush2.bf16.msra.mxu0 0
        %2362 = vmatprep.subr.bf16.mxu0 0
        %2363 = vmatpush2.bf16.msra.mxu0 0
        %2364 = vmatprep.subr.bf16.mxu0 0
        %2365 = vmatpush2.bf16.msra.mxu0 0
        %2366 = vmatprep.mubr.bf16.mxu0 0
        %2367 = vmatmul.mubr.bf16.gmra.mxu0 %v2333
        %v2368 = vpop.f32.mrf.mxu0
        %v2369 = vadd.f32 0.0, %v2368
        %v2370 = vpop.f32.mrf.mxu0
        %v2371 = vadd.f32 0.0, %v2370
        %v2372 = vpop.f32.mrf.mxu0
        %v2373 = vadd.f32 0.0, %v2372
        %v2374 = vpop.f32.mrf.mxu0
        %v2375 = vadd.f32 0.0, %v2374
        %2376 = vdwg.mxu0
        %2377 = vmatprep.subr.bf16.mxu0 0
        %2378 = vmatpush1.bf16.msra.mxu0 %v1138
        %2379 = vmatprep.subr.bf16.mxu0 0
        %2380 = vmatpush1.bf16.msra.mxu0 %v1135
        %2381 = vmatprep.subr.bf16.mxu0 0
        %2382 = vmatpush1.bf16.msra.mxu0 %v1132
        %2383 = vmatprep.subr.bf16.mxu0 0
        %2384 = vmatpush1.bf16.msra.mxu0 %v1129
        %2385 = vmatprep.subr.bf16.mxu0 0
        %2386 = vmatpush1.bf16.msra.mxu0 %v1126
        %2387 = vmatprep.subr.bf16.mxu0 0
        %2388 = vmatpush1.bf16.msra.mxu0 %v1123
        %2389 = vmatprep.subr.bf16.mxu0 0
        %2390 = vmatpush1.bf16.msra.mxu0 %v1120
        %2391 = vmatprep.subr.bf16.mxu0 0
        %2392 = vmatpush1.bf16.msra.mxu0 %v1117
        %2393 = vmatprep.subr.bf16.mxu0 0
        %2394 = vmatpush2.bf16.msra.mxu0 0
        %2395 = vmatprep.subr.bf16.mxu0 0
        %2396 = vmatpush2.bf16.msra.mxu0 0
        %2397 = vmatprep.subr.bf16.mxu0 0
        %2398 = vmatpush2.bf16.msra.mxu0 0
        %2399 = vmatprep.subr.bf16.mxu0 0
        %2400 = vmatpush2.bf16.msra.mxu0 0
        %2401 = vmatprep.subr.bf16.mxu0 0
        %2402 = vmatpush2.bf16.msra.mxu0 0
        %2403 = vmatprep.subr.bf16.mxu0 0
        %2404 = vmatpush2.bf16.msra.mxu0 0
        %2405 = vmatprep.subr.bf16.mxu0 0
        %2406 = vmatpush2.bf16.msra.mxu0 0
        %2407 = vmatprep.subr.bf16.mxu0 0
        %2408 = vmatpush2.bf16.msra.mxu0 0
        %2409 = vmatprep.mubr.bf16.mxu0 0
        %2410 = vmatmul.mubr.bf16.gmra.mxu0 %v2333
        %v2411 = vpop.f32.mrf.mxu0
        %v2412 = vadd.f32 0.0, %v2411
        %v2413 = vpop.f32.mrf.mxu0
        %v2414 = vpop.f32.mrf.mxu0
        %v2415 = vadd.f32 0.0, %v2414
        %v2416 = vpop.f32.mrf.mxu0
        %2417 = vdwg.mxu0
        %v2418 = vpack.c.bf16 %v2373, %v2369
        %v2419 = vpack.c.bf16 %v2375, %v2371
        %v2420 = vpack.c.bf16 %v2415, %v2412
        %v2422 = vunpack.c.l.b16 %v2418
        %v2423 = vunpack.c.h.b16 %v2418
        %v2424 = vpack.c.b16 %v2422, %v2422
        %v2425 = vpack.c.b16 %v2423, %v2423
        %v2428 = vadd.bf16 %v2329, %v2424
        %v2429 = vadd.bf16 %v2331, %v2425
        %v2430 = vxor.u32 %v2428, 2147516416
        %v2431 = vxor.u32 %v2429, 2147516416
        %v2433 = vmul.bf16 %v2430, 1069105081
        %v2434 = vpow.bf16.pop %v2433
        %v2436 = vmul.bf16 %v2431, 1069105081
        %v2437 = vpow.bf16.pop %v2436
        %v2438 = vadd.bf16 %v2434, 1065369472
        %v2439 = vadd.bf16 %v2437, 1065369472
        %v2440 = vrcp.bf16.pop %v2438
        %v2441 = vmul.bf16 1065369472, %v2440
        %v2442 = vrcp.bf16.pop %v2439
        %v2443 = vmul.bf16 1065369472, %v2442
        %v2446 = vrot.slane %v2329, 4
        %v2447 = vrot.slane %v2331, 4
        %v2451 = vunpack.c.l.b16 %v2419
        %v2452 = vunpack.c.h.b16 %v2419
        %v2453 = vpack.c.b16 %v2451, %v2451
        %v2454 = vpack.c.b16 %v2452, %v2452
        %v2457 = vadd.bf16 %v2446, %v2453
        %v2458 = vadd.bf16 %v2447, %v2454
        %v2459 = vxor.u32 %v2457, 2147516416
        %v2460 = vxor.u32 %v2458, 2147516416
        %v2462 = vmul.bf16 %v2459, 1069105081
        %v2463 = vpow.bf16.pop %v2462
        %v2465 = vmul.bf16 %v2460, 1069105081
        %v2466 = vpow.bf16.pop %v2465
        %v2467 = vadd.bf16 %v2463, 1065369472
        %v2468 = vadd.bf16 %v2466, 1065369472
        %v2469 = vrcp.bf16.pop %v2467
        %v2470 = vmul.bf16 1065369472, %v2469
        %v2471 = vrcp.bf16.pop %v2468
        %v2472 = vmul.bf16 1065369472, %v2471
        %v2473 = vadd.bf16 %v2420, %v1308
        %v2475 = vunpack.c.l.b16 %v2473
        %v2476 = vunpack.c.h.b16 %v2473
        %v2477 = vpack.c.b16 %v2475, %v2475
        %v2478 = vpack.c.b16 %v2476, %v2476
        %v2481 = vmul.bf16 %v2441, %v2477
        %v2482 = vmul.bf16 %v2443, %v2478
        %v2483 = vadd.bf16 %v2330, %v2481
        %v2484 = vadd.bf16 %v2332, %v2482
        %v2485 = vtanh.bf16.pop %v2483
        %v2486 = vtanh.bf16.pop %v2484
        %v2487 = vsub.bf16 1065369472, %v2470
        %v2488 = vsub.bf16 1065369472, %v2472
        %v2489 = vmul.bf16 %v2487, %v2485
        %v2490 = vmul.bf16 %v2488, %v2486
        %v2492 = vunpack.c.l.b16 %v2333
        %v2493 = vunpack.c.h.b16 %v2333
        %v2494 = vpack.c.b16 %v2492, %v2492
        %v2495 = vpack.c.b16 %v2493, %v2493
        %v2498 = vmul.bf16 %v2470, %v2494
        %v2499 = vmul.bf16 %v2472, %v2495
        %v2500 = vadd.bf16 %v2489, %v2498
        %v2501 = vadd.bf16 %v2490, %v2499
        %v2502 = vunpack.c.l.bf16 %v2500
        %v2503 = vunpack.c.l.bf16 %v2501
        %v2504 = vstv %s2325
        %vm2505 = vcmp.lt.s32.totalorder %v2504, %v989
        %vm2506 = vcmp.lt.s32.totalorder %v2504, %v990
        %v2507 = vsel %vm2505, 1, 0
        %v2508 = vsel %vm2506, 1, 0
        %2509 = vset.pattern.permute.xlu0 0
        %2510 = vperm.xlu0 %2509, %v2507
        %v2511 = vpop.permute.xlu0 %2510
        %2512 = vset.pattern.permute.xlu0 0
        %2513 = vperm.xlu0 %2512, %v2508
        %v2514 = vpop.permute.xlu0 %2513
        %vm2515 = vcmp.eq.s32.totalorder %v2511, 1
        %vm2516 = vcmp.eq.s32.totalorder %v2514, 1
        %v2517 = vsel %vm2515, %v2502, %v2323
        %v2518 = vsel %vm2516, %v2503, %v2324
        %s2519 = sadd.s32 %s340, 7
        %s2520 = smul.u32 14, 3
        %s2521 = smul.addr %s2520, 4
        %s2522 = scalar_lea.vmem [#allocation2], %s2521
        %v2523 = vld [vmem:[%s2522] sm:$0xff]
        %v2524 = vld [vmem:[%s2522 + $0x8] sm:$0xf]
        %v2525 = vld [vmem:[%s2522 + $0xc] sm:$0xff]
        %v2526 = vld [vmem:[%s2522 + $0x14] sm:$0xf]
        %v2527 = vpack.c.bf16 %v2518, %v2517
        %2528 = vmatprep.subr.bf16.mxu0 %v1137
        %2529 = vmatpush1.bf16.msra.mxu0 %v1136
        %2530 = vmatprep.subr.bf16.mxu0 %v1134
        %2531 = vmatpush1.bf16.msra.mxu0 %v1133
        %2532 = vmatprep.subr.bf16.mxu0 %v1131
        %2533 = vmatpush1.bf16.msra.mxu0 %v1130
        %2534 = vmatprep.subr.bf16.mxu0 %v1128
        %2535 = vmatpush1.bf16.msra.mxu0 %v1127
        %2536 = vmatprep.subr.bf16.mxu0 %v1125
        %2537 = vmatpush1.bf16.msra.mxu0 %v1124
        %2538 = vmatprep.subr.bf16.mxu0 %v1122
        %2539 = vmatpush1.bf16.msra.mxu0 %v1121
        %2540 = vmatprep.subr.bf16.mxu0 %v1119
        %2541 = vmatpush1.bf16.msra.mxu0 %v1118
        %2542 = vmatprep.subr.bf16.mxu0 %v1116
        %2543 = vmatpush1.bf16.msra.mxu0 %v1115
        %2544 = vmatprep.subr.bf16.mxu0 0
        %2545 = vmatpush2.bf16.msra.mxu0 0
        %2546 = vmatprep.subr.bf16.mxu0 0
        %2547 = vmatpush2.bf16.msra.mxu0 0
        %2548 = vmatprep.subr.bf16.mxu0 0
        %2549 = vmatpush2.bf16.msra.mxu0 0
        %2550 = vmatprep.subr.bf16.mxu0 0
        %2551 = vmatpush2.bf16.msra.mxu0 0
        %2552 = vmatprep.subr.bf16.mxu0 0
        %2553 = vmatpush2.bf16.msra.mxu0 0
        %2554 = vmatprep.subr.bf16.mxu0 0
        %2555 = vmatpush2.bf16.msra.mxu0 0
        %2556 = vmatprep.subr.bf16.mxu0 0
        %2557 = vmatpush2.bf16.msra.mxu0 0
        %2558 = vmatprep.subr.bf16.mxu0 0
        %2559 = vmatpush2.bf16.msra.mxu0 0
        %2560 = vmatprep.mubr.bf16.mxu0 0
        %2561 = vmatmul.mubr.bf16.gmra.mxu0 %v2527
        %v2562 = vpop.f32.mrf.mxu0
        %v2563 = vadd.f32 0.0, %v2562
        %v2564 = vpop.f32.mrf.mxu0
        %v2565 = vadd.f32 0.0, %v2564
        %v2566 = vpop.f32.mrf.mxu0
        %v2567 = vadd.f32 0.0, %v2566
        %v2568 = vpop.f32.mrf.mxu0
        %v2569 = vadd.f32 0.0, %v2568
        %2570 = vdwg.mxu0
        %2571 = vmatprep.subr.bf16.mxu0 0
        %2572 = vmatpush1.bf16.msra.mxu0 %v1138
        %2573 = vmatprep.subr.bf16.mxu0 0
        %2574 = vmatpush1.bf16.msra.mxu0 %v1135
        %2575 = vmatprep.subr.bf16.mxu0 0
        %2576 = vmatpush1.bf16.msra.mxu0 %v1132
        %2577 = vmatprep.subr.bf16.mxu0 0
        %2578 = vmatpush1.bf16.msra.mxu0 %v1129
        %2579 = vmatprep.subr.bf16.mxu0 0
        %2580 = vmatpush1.bf16.msra.mxu0 %v1126
        %2581 = vmatprep.subr.bf16.mxu0 0
        %2582 = vmatpush1.bf16.msra.mxu0 %v1123
        %2583 = vmatprep.subr.bf16.mxu0 0
        %2584 = vmatpush1.bf16.msra.mxu0 %v1120
        %2585 = vmatprep.subr.bf16.mxu0 0
        %2586 = vmatpush1.bf16.msra.mxu0 %v1117
        %2587 = vmatprep.subr.bf16.mxu0 0
        %2588 = vmatpush2.bf16.msra.mxu0 0
        %2589 = vmatprep.subr.bf16.mxu0 0
        %2590 = vmatpush2.bf16.msra.mxu0 0
        %2591 = vmatprep.subr.bf16.mxu0 0
        %2592 = vmatpush2.bf16.msra.mxu0 0
        %2593 = vmatprep.subr.bf16.mxu0 0
        %2594 = vmatpush2.bf16.msra.mxu0 0
        %2595 = vmatprep.subr.bf16.mxu0 0
        %2596 = vmatpush2.bf16.msra.mxu0 0
        %2597 = vmatprep.subr.bf16.mxu0 0
        %2598 = vmatpush2.bf16.msra.mxu0 0
        %2599 = vmatprep.subr.bf16.mxu0 0
        %2600 = vmatpush2.bf16.msra.mxu0 0
        %2601 = vmatprep.subr.bf16.mxu0 0
        %2602 = vmatpush2.bf16.msra.mxu0 0
        %2603 = vmatprep.mubr.bf16.mxu0 0
        %2604 = vmatmul.mubr.bf16.gmra.mxu0 %v2527
        %v2605 = vpop.f32.mrf.mxu0
        %v2606 = vadd.f32 0.0, %v2605
        %v2607 = vpop.f32.mrf.mxu0
        %v2608 = vpop.f32.mrf.mxu0
        %v2609 = vadd.f32 0.0, %v2608
        %v2610 = vpop.f32.mrf.mxu0
        %2611 = vdwg.mxu0
        %v2612 = vpack.c.bf16 %v2567, %v2563
        %v2613 = vpack.c.bf16 %v2569, %v2565
        %v2614 = vpack.c.bf16 %v2609, %v2606
        %v2616 = vunpack.c.l.b16 %v2612
        %v2617 = vunpack.c.h.b16 %v2612
        %v2618 = vpack.c.b16 %v2616, %v2616
        %v2619 = vpack.c.b16 %v2617, %v2617
        %v2622 = vadd.bf16 %v2523, %v2618
        %v2623 = vadd.bf16 %v2525, %v2619
        %v2624 = vxor.u32 %v2622, 2147516416
        %v2625 = vxor.u32 %v2623, 2147516416
        %v2627 = vmul.bf16 %v2624, 1069105081
        %v2628 = vpow.bf16.pop %v2627
        %v2630 = vmul.bf16 %v2625, 1069105081
        %v2631 = vpow.bf16.pop %v2630
        %v2632 = vadd.bf16 %v2628, 1065369472
        %v2633 = vadd.bf16 %v2631, 1065369472
        %v2634 = vrcp.bf16.pop %v2632
        %v2635 = vmul.bf16 1065369472, %v2634
        %v2636 = vrcp.bf16.pop %v2633
        %v2637 = vmul.bf16 1065369472, %v2636
        %v2640 = vrot.slane %v2523, 4
        %v2641 = vrot.slane %v2525, 4
        %v2645 = vunpack.c.l.b16 %v2613
        %v2646 = vunpack.c.h.b16 %v2613
        %v2647 = vpack.c.b16 %v2645, %v2645
        %v2648 = vpack.c.b16 %v2646, %v2646
        %v2651 = vadd.bf16 %v2640, %v2647
        %v2652 = vadd.bf16 %v2641, %v2648
        %v2653 = vxor.u32 %v2651, 2147516416
        %v2654 = vxor.u32 %v2652, 2147516416
        %v2656 = vmul.bf16 %v2653, 1069105081
        %v2657 = vpow.bf16.pop %v2656
        %v2659 = vmul.bf16 %v2654, 1069105081
        %v2660 = vpow.bf16.pop %v2659
        %v2661 = vadd.bf16 %v2657, 1065369472
        %v2662 = vadd.bf16 %v2660, 1065369472
        %v2663 = vrcp.bf16.pop %v2661
        %v2664 = vmul.bf16 1065369472, %v2663
        %v2665 = vrcp.bf16.pop %v2662
        %v2666 = vmul.bf16 1065369472, %v2665
        %v2667 = vadd.bf16 %v2614, %v1308
        %v2669 = vunpack.c.l.b16 %v2667
        %v2670 = vunpack.c.h.b16 %v2667
        %v2671 = vpack.c.b16 %v2669, %v2669
        %v2672 = vpack.c.b16 %v2670, %v2670
        %v2675 = vmul.bf16 %v2635, %v2671
        %v2676 = vmul.bf16 %v2637, %v2672
        %v2677 = vadd.bf16 %v2524, %v2675
        %v2678 = vadd.bf16 %v2526, %v2676
        %v2679 = vtanh.bf16.pop %v2677
        %v2680 = vtanh.bf16.pop %v2678
        %v2681 = vsub.bf16 1065369472, %v2664
        %v2682 = vsub.bf16 1065369472, %v2666
        %v2683 = vmul.bf16 %v2681, %v2679
        %v2684 = vmul.bf16 %v2682, %v2680
        %v2686 = vunpack.c.l.b16 %v2527
        %v2687 = vunpack.c.h.b16 %v2527
        %v2688 = vpack.c.b16 %v2686, %v2686
        %v2689 = vpack.c.b16 %v2687, %v2687
        %v2692 = vmul.bf16 %v2664, %v2688
        %v2693 = vmul.bf16 %v2666, %v2689
        %v2694 = vadd.bf16 %v2683, %v2692
        %v2695 = vadd.bf16 %v2684, %v2693
        %v2696 = vunpack.c.l.bf16 %v2694
        %v2697 = vunpack.c.l.bf16 %v2695
        %v2698 = vstv %s2519
        %vm2699 = vcmp.lt.s32.totalorder %v2698, %v989
        %vm2700 = vcmp.lt.s32.totalorder %v2698, %v990
        %v2701 = vsel %vm2699, 1, 0
        %v2702 = vsel %vm2700, 1, 0
        %2703 = vset.pattern.permute.xlu0 0
        %2704 = vperm.xlu0 %2703, %v2701
        %v2705 = vpop.permute.xlu0 %2704
        %2706 = vset.pattern.permute.xlu0 0
        %2707 = vperm.xlu0 %2706, %v2702
        %v2708 = vpop.permute.xlu0 %2707
        %vm2709 = vcmp.eq.s32.totalorder %v2705, 1
        %vm2710 = vcmp.eq.s32.totalorder %v2708, 1
        %v2711 = vsel %vm2709, %v2696, %v2517
        %v2712 = vsel %vm2710, %v2697, %v2518
        %2713 = vst [vmem:[#allocation3] sm:$0xff] %v2711
        %2714 = vst [vmem:[#allocation3 + $0x8] sm:$0xff] %v2712
      $region56: #{gru4rec_encoder.1} parent=47 // pred_fallthru
        _
      %p2715 = scmp.eq.s32.totalorder %s25, 1
      // Predicated region
      $region57: #{gru4rec_encoder.1} parent=47 // pred_check
        %p2716 = pneg %p2715
      $region58: #{gru4rec_encoder.1} parent=47 // pred_check_branch
        %2718 = sbr.rel (%p2716) target = $region60
      $region59: #{gru4rec_encoder.1} parent=47 // pred_region
        %v2719 = vld [vmem:[#allocation3] sm:$0xff]
        %v2720 = vld [vmem:[#allocation3 + $0x8] sm:$0xff]
        %v2721 = vpack.c.bf16 %v2720, %v2719
        %v2722 = vld [vmem:[%s7] sm:$0xf]
        %v2723 = vld [vmem:[%s7 + $0x4] sm:$0xf]
        %v2724 = vld [vmem:[%s7 + $0x8] sm:$0xf]
        %v2725 = vld [vmem:[%s7 + $0xc] sm:$0xf]
        %v2726 = vld [vmem:[%s7 + $0x10] sm:$0xf]
        %v2727 = vld [vmem:[%s7 + $0x14] sm:$0xf]
        %v2728 = vld [vmem:[%s7 + $0x18] sm:$0xf]
        %v2729 = vld [vmem:[%s7 + $0x1c] sm:$0xf]
        %v2730 = vld [vmem:[%s7 + $0x20] sm:$0xf]
        %v2731 = vld [vmem:[%s7 + $0x24] sm:$0xf]
        %v2732 = vld [vmem:[%s7 + $0x28] sm:$0xf]
        %v2733 = vld [vmem:[%s7 + $0x2c] sm:$0xf]
        %v2734 = vld [vmem:[%s7 + $0x30] sm:$0xf]
        %v2735 = vld [vmem:[%s7 + $0x34] sm:$0xf]
        %v2736 = vld [vmem:[%s7 + $0x38] sm:$0xf]
        %v2737 = vld [vmem:[%s7 + $0x3c] sm:$0xf]
        %v2754 = vunpack.c.l.b16 %v2722
        %v2755 = vunpack.c.l.b16 %v2723
        %v2756 = vunpack.c.l.b16 %v2724
        %v2757 = vunpack.c.l.b16 %v2725
        %v2758 = vunpack.c.l.b16 %v2726
        %v2759 = vunpack.c.l.b16 %v2727
        %v2760 = vunpack.c.l.b16 %v2728
        %v2761 = vunpack.c.l.b16 %v2729
        %v2762 = vunpack.c.l.b16 %v2730
        %v2763 = vunpack.c.l.b16 %v2731
        %v2764 = vunpack.c.l.b16 %v2732
        %v2765 = vunpack.c.l.b16 %v2733
        %v2766 = vunpack.c.l.b16 %v2734
        %v2767 = vunpack.c.l.b16 %v2735
        %v2768 = vunpack.c.l.b16 %v2736
        %v2769 = vunpack.c.l.b16 %v2737
        %v2770 = vpack.c.b16 %v2755, %v2754
        %v2771 = vpack.c.b16 %v2757, %v2756
        %v2772 = vpack.c.b16 %v2759, %v2758
        %v2773 = vpack.c.b16 %v2761, %v2760
        %v2774 = vpack.c.b16 %v2763, %v2762
        %v2775 = vpack.c.b16 %v2765, %v2764
        %v2776 = vpack.c.b16 %v2767, %v2766
        %v2777 = vpack.c.b16 %v2769, %v2768
        %2786 = vmatprep.subr.bf16.mxu0 0
        %2787 = vmatpush1.bf16.msra.mxu0 %v2777
        %2788 = vmatprep.subr.bf16.mxu0 0
        %2789 = vmatpush1.bf16.msra.mxu0 %v2776
        %2790 = vmatprep.subr.bf16.mxu0 0
        %2791 = vmatpush1.bf16.msra.mxu0 %v2775
        %2792 = vmatprep.subr.bf16.mxu0 0
        %2793 = vmatpush1.bf16.msra.mxu0 %v2774
        %2794 = vmatprep.subr.bf16.mxu0 0
        %2795 = vmatpush1.bf16.msra.mxu0 %v2773
        %2796 = vmatprep.subr.bf16.mxu0 0
        %2797 = vmatpush1.bf16.msra.mxu0 %v2772
        %2798 = vmatprep.subr.bf16.mxu0 0
        %2799 = vmatpush1.bf16.msra.mxu0 %v2771
        %2800 = vmatprep.subr.bf16.mxu0 0
        %2801 = vmatpush1.bf16.msra.mxu0 %v2770
        %2802 = vmatprep.subr.bf16.mxu0 0
        %2803 = vmatpush2.bf16.msra.mxu0 0
        %2804 = vmatprep.subr.bf16.mxu0 0
        %2805 = vmatpush2.bf16.msra.mxu0 0
        %2806 = vmatprep.subr.bf16.mxu0 0
        %2807 = vmatpush2.bf16.msra.mxu0 0
        %2808 = vmatprep.subr.bf16.mxu0 0
        %2809 = vmatpush2.bf16.msra.mxu0 0
        %2810 = vmatprep.subr.bf16.mxu0 0
        %2811 = vmatpush2.bf16.msra.mxu0 0
        %2812 = vmatprep.subr.bf16.mxu0 0
        %2813 = vmatpush2.bf16.msra.mxu0 0
        %2814 = vmatprep.subr.bf16.mxu0 0
        %2815 = vmatpush2.bf16.msra.mxu0 0
        %2816 = vmatprep.subr.bf16.mxu0 0
        %2817 = vmatpush2.bf16.msra.mxu0 0
        %2818 = vmatprep.mubr.bf16.mxu0 0
        %2819 = vmatmul.mubr.bf16.gmra.mxu0 %v2721
        %v2820 = vpop.f32.mrf.mxu0
        %v2821 = vadd.f32 0.0, %v2820
        %v2822 = vpop.f32.mrf.mxu0
        %v2823 = vpop.f32.mrf.mxu0
        %v2824 = vadd.f32 0.0, %v2823
        %v2825 = vpop.f32.mrf.mxu0
        %2826 = vdwg.mxu0
        %2827 = vst [vmem:[%s330] sm:$0xff] %v2821
        %2828 = vst [vmem:[%s330 + $0x8] sm:$0xff] %v2824
      $region60: #{gru4rec_encoder.1} parent=47 // pred_fallthru
        _
      %s2829 = smul.u32 2, %s24
      %p2830 = scmp.lt.s32.totalorder %s2829, 1
      %s2831 = scalar_select %p2830, %s2829, 1
      %s2832 = smul.addr %s2831, 8
      %s2833 = scalar_lea.vmem %s8, %s2832
      // Predicated region
      $region61: #{gru4rec_encoder.1} parent=47 // pred_check
        %p2834 = pneg %p211
      $region62: #{gru4rec_encoder.1} parent=47 // pred_check_branch
        %2836 = sbr.rel (%p2834) target = $region64
      $region63: #{gru4rec_encoder.1} parent=47 // pred_region
        %s2837 = smul.u32 2, %s24
      $region64: #{gru4rec_encoder.1} parent=47 // pred_fallthru
        _
      // Predicated region
      $region65: #{gru4rec_encoder.1} parent=47 // pred_check
        %p2838 = pneg %p211
      $region66: #{gru4rec_encoder.1} parent=47 // pred_check_branch
        %2840 = sbr.rel (%p2838) target = $region68
      $region67: #{gru4rec_encoder.1} parent=47 // pred_region
        %s2841 = smul.u32 2, %s24
        %p2842 = scmp.lt.s32.totalorder %s2841, 1
        %s2843 = scalar_select %p2842, %s2841, 1
        %s2844 = smul.addr %s2843, 8
        %s2845 = scalar_lea.vmem %s8, %s2844
      $region68: #{gru4rec_encoder.1} parent=47 // pred_fallthru
        _
    $region48: #{gru4rec_encoder.1} parent=5 // pred_fallthru
      _
    %p2846 = scmp.le.s32.totalorder 2, %s15
    // Predicated region
    $region69: #{gru4rec_encoder.1} parent=5 // pred_check
      %p2847 = pneg %p2846
    $region70: #{gru4rec_encoder.1} parent=5 // pred_check_branch
      %2849 = sbr.rel (%p2847) target = $region72
    $region71: #{gru4rec_encoder.1} parent=5 // pred_region
      %s2850 = ssub.s32 %s15, 2
    $region72: #{gru4rec_encoder.1} parent=5 // pred_fallthru
      _
  $region6: #{gru4rec_encoder.1} parent=0 // loop_footer
    %s19 = sadd.s32 1, %s15
  $region7: #{gru4rec_encoder.1} parent=0 // loop_footer_branch
    %14 = sbr.rel target = $region3
  $region8: #{gru4rec_encoder.1} parent=0 // loop_exit
    _

</llo_original>
